<compile_context>
chip_gen: v5e
topology: v5e:2x2
jax: 0.10.0
libtpu: 0.0.40
codegen_flags: <defaults>
</compile_context>

<pallas_src>
import math
import functools

import jax
import jax.numpy as jnp
from jax.experimental import pallas as pl
from jax.experimental.pallas import tpu as pltpu  # noqa: F401  (TPU backend)

EPS = 1e-5  # RevIN eps and nn.LayerNorm eps (torch defaults)


# --------------------------------------------------------------------------
# configuration (small, deterministic, consistent with the module)
# --------------------------------------------------------------------------
class Cfg:
    enc_in = 4            # n_vars / channels
    seq_len = 16
    pred_len = 8
    patch_len = 4
    stride = 4
    padding = stride      # padding = configs.stride in DownStreamingModel
    d_model = 32
    n_heads = 4
    d_ff = 64
    e_layers = 2
    dropout = 0.0         # eval mode -> identity
    factor = 1
    activation = "relu"
    output_attention = False
    num_patch = (max(seq_len, patch_len) - patch_len + padding) // stride + 1  # = 5


# --------------------------------------------------------------------------
# in-kernel helpers
# --------------------------------------------------------------------------
def _mm(a, b):
    """2-D matmul on the MXU: bf16 operands, f32 accumulation.

    astype(bf16) is a no-op for weights that are already stored as bf16.
    """
    return jax.lax.dot_general(
        a.astype(jnp.bfloat16), b.astype(jnp.bfloat16),
        dimension_numbers=(((1,), (0,)), ((), ())),
        preferred_element_type=jnp.float32)


def _mm_nt(a, b):
    """a @ b.T on the MXU (contract last dims), bf16 operands, f32 accum."""
    return jax.lax.dot_general(
        a.astype(jnp.bfloat16), b.astype(jnp.bfloat16),
        dimension_numbers=(((1,), (1,)), ((), ())),
        preferred_element_type=jnp.float32)


def _layer_norm(x, g, b):
    mu = jnp.mean(x, axis=-1, keepdims=True)
    var = jnp.mean((x - mu) ** 2, axis=-1, keepdims=True)
    return (x - mu) * jax.lax.rsqrt(var + EPS) * g + b


# --------------------------------------------------------------------------
# the single fused kernel
# --------------------------------------------------------------------------
def _fused_forward_kernel(
        x_ref, aw_ref, ab_ref, w_emb_ref, pos_ref,
        sid_r_ref, sid_c_ref, hd_r_ref, hd_c_ref,
        wq_ref, bq_ref, wk_ref, bk_ref, wv_ref, bv_ref, wo_ref, bo_ref,
        g1_ref, be1_ref, w1_ref, b1_ref, w2_ref, b2_ref, g2_ref, be2_ref,
        gf_ref, bf_ref, w_head_ref, b_head_ref,
        out_ref, *,
        n_layers, n_heads, seq_len, patch_len, stride, padding,
        num_patch, d_model, pred_len):
    BC = x_ref.shape[0]                       # one row per (batch, channel)
    TOT = num_patch * BC                      # total tokens in the slab
    E = d_model // n_heads
    scale = 1.0 / math.sqrt(E)                # FullAttention default scale

    # ---- RevIN 'norm' (stats per (batch, channel) row, over time) ----------
    x = x_ref[...]                                        # (BC, L) f32
    mean = jnp.mean(x, axis=-1, keepdims=True)            # (BC, 1)
    var = jnp.mean((x - mean) ** 2, axis=-1, keepdims=True)   # unbiased=False
    std = jnp.sqrt(var + EPS)
    xn = (x - mean) / std
    xn = xn * aw_ref[...] + ab_ref[...]                   # RevIN affine

    # ---- ReplicationPad1d((0, padding)) + unfold -> patch rows -------------
    pad_cols = jnp.broadcast_to(xn[:, seq_len - 1:seq_len], (BC, padding))
    x_pad = jnp.concatenate([xn, pad_cols], axis=1)       # (BC, L + padding)
    # token-row order of the slab is n-major: row = n*BC + bc
    patches = jnp.concatenate(
        [x_pad[:, n * stride:n * stride + patch_len] for n in range(num_patch)],
        axis=0)                                           # (TOT, patch_len)

    # ---- patch embedding: Linear(patch_len -> d_model, bias=False) + pos ---
    tok = _mm(patches, w_emb_ref[...]) + pos_ref[...]     # (TOT, D) f32

    # ---- masks, built once from O(TOT)-sized id vectors (no O(TOT^2) DMA) --
    # neg_bias[h*TOT + r, c] = 0 if token r and token c belong to the same
    # (batch, channel) series else -1e30  (block-diagonal attention).
    neg_bias = jnp.where(sid_r_ref[...] == sid_c_ref[...], 0.0, -1e30)  # (H*TOT, TOT)
    # hm[h*TOT + r, d] = 1 iff feature column d belongs to head h.
    hm = jnp.where(hd_r_ref[...] == hd_c_ref[...], 1.0, 0.0)            # (H*TOT, D)

    # ---- encoder layers (attention + FFN), all series & heads at once ------
    for l in range(n_layers):
        q = _mm(tok, wq_ref[l]) + bq_ref[l]               # (TOT, D)
        k = _mm(tok, wk_ref[l]) + bk_ref[l]
        v = _mm(tok, wv_ref[l]) + bv_ref[l]

        # replicate Q per head along sublanes and zero-mask other heads'
        # columns -> one wide matmul yields every head's scores at once.
        q_big = jnp.concatenate([q] * n_heads, axis=0) * hm      # (H*TOT, D)
        s = _mm_nt(q_big, k) * scale + neg_bias                  # (H*TOT, TOT)
        m = jnp.max(s, axis=-1, keepdims=True)
        p = jnp.exp(s - m)
        p = p * pl.reciprocal(jnp.sum(p, axis=-1, keepdims=True), approx=True)

        # one wide A@V matmul; keep only each head's own column block and
        # fold the H stacked row-blocks back down with aligned sublane adds.
        o = _mm(p, v) * hm                                       # (H*TOT, D)
        attn = o[0:TOT]
        for h in range(1, n_heads):
            attn = attn + o[h * TOT:(h + 1) * TOT]               # (TOT, D)
        attn = _mm(attn, wo_ref[l]) + bo_ref[l]                  # out proj

        x1 = _layer_norm(tok + attn, g1_ref[l], be1_ref[l])      # norm1
        y = jnp.maximum(_mm(x1, w1_ref[l]) + b1_ref[l], 0.0)     # conv1 + relu
        y = _mm(y, w2_ref[l]) + b2_ref[l]                        # conv2
        tok = _layer_norm(x1 + y, g2_ref[l], be2_ref[l])         # norm2

    enc = _layer_norm(tok, gf_ref[...], bf_ref[...])      # encoder's final LN

    # ---- FlattenHead: single (BC, N*D) x (N*D, pred_len) matmul ------------
    # enc_wide column block n = enc rows [n*BC, (n+1)*BC)  (aligned slices);
    # w_head is host re-packed so column n*D + d matches torch index d*N + n.
    enc_wide = jnp.concatenate(
        [enc[n * BC:(n + 1) * BC, :] for n in range(num_patch)], axis=1)
    y = _mm(enc_wide, w_head_ref[...]) + b_head_ref[...]  # (BC, pred_len)

    # ---- RevIN 'denorm' -----------------------------------------------------
    y = (y - ab_ref[...]) / (aw_ref[...] + EPS * EPS)
    out_ref[...] = y * std + mean


# --------------------------------------------------------------------------
# parameter construction (deterministic, synthetic)
# --------------------------------------------------------------------------
def _sinusoidal_pos_embedding(n, d_model):
    position = jnp.arange(n, dtype=jnp.float32)[:, None]
    div_term = jnp.exp(
        jnp.arange(0, d_model, 2, dtype=jnp.float32)
        * -(math.log(10000.0) / d_model))
    pe = jnp.zeros((n, d_model), jnp.float32)
    pe = pe.at[:, 0::2].set(jnp.sin(position * div_term))
    pe = pe.at[:, 1::2].set(jnp.cos(position * div_term))
    return pe


def init_params(cfg, key):
    keys = iter(jax.random.split(key, 128))

    def nrm(shape, scale=0.02):
        return (scale * jax.random.normal(next(keys), shape)).astype(jnp.float32)

    D, Dff, N = cfg.d_model, cfg.d_ff, cfg.num_patch
    params = {
        "revin_aw": jnp.ones((cfg.enc_in,), jnp.float32),
        "revin_ab": jnp.zeros((cfg.enc_in,), jnp.float32),
        "w_emb": nrm((cfg.patch_len, D)),          # Linear(patch_len, D, bias=False)
        "pos": _sinusoidal_pos_embedding(N, D),
        "layers": [],
        "gF": jnp.ones((D,), jnp.float32),
        "bF": jnp.zeros((D,), jnp.float32),
        "w_head": nrm((D * N, cfg.pred_len)),      # FlattenHead linear (in, out)
        "b_head": jnp.zeros((cfg.pred_len,), jnp.float32),
    }
    for _ in range(cfg.e_layers):
        params["layers"].append({
            "wq": nrm((D, D)), "bq": jnp.zeros((D,), jnp.float32),
            "wk": nrm((D, D)), "bk": jnp.zeros((D,), jnp.float32),
            "wv": nrm((D, D)), "bv": jnp.zeros((D,), jnp.float32),
            "wo": nrm((D, D)), "bo": jnp.zeros((D,), jnp.float32),
            "g1": jnp.ones((D,), jnp.float32), "be1": jnp.zeros((D,), jnp.float32),
            "w1": nrm((D, Dff)), "b1": jnp.zeros((Dff,), jnp.float32),
            "w2": nrm((Dff, D)), "b2": jnp.zeros((D,), jnp.float32),
            "g2": jnp.ones((D,), jnp.float32), "be2": jnp.zeros((D,), jnp.float32),
        })
    return params


def prepare_kernel_params(params, cfg, batch_size):
    """One-time re-layout of parameters into kernel-friendly packed arrays."""
    C, D, N, P = cfg.enc_in, cfg.d_model, cfg.num_patch, cfg.pred_len
    H, E = cfg.n_heads, cfg.d_model // cfg.n_heads
    BC = batch_size * C
    TOT = N * BC

    # per-(batch, channel)-row RevIN affine params (row bc = b*C + c)
    aw_row = jnp.tile(params["revin_aw"], batch_size).reshape(BC, 1)
    ab_row = jnp.tile(params["revin_ab"], batch_size).reshape(BC, 1)

    # positional embedding expanded to the n-major token-row order
    pos_exp = jnp.repeat(params["pos"], BC, axis=0)              # (TOT, D)

    # tiny O(TOT) id vectors; masks are built in-kernel from these.
    tok_idx = jnp.arange(H * TOT, dtype=jnp.int32) % TOT
    sid_r = (tok_idx % BC).astype(jnp.float32).reshape(H * TOT, 1)
    sid_c = (jnp.arange(TOT, dtype=jnp.int32) % BC
             ).astype(jnp.float32).reshape(1, TOT)
    hd_r = (jnp.arange(H * TOT, dtype=jnp.int32) // TOT
            ).astype(jnp.float32).reshape(H * TOT, 1)
    hd_c = (jnp.arange(D, dtype=jnp.int32) // E
            ).astype(jnp.float32).reshape(1, D)

    layers = params["layers"]
    sw = lambda k: jnp.stack([lp[k] for lp in layers], 0).astype(jnp.bfloat16)
    sb = lambda k: jnp.stack([lp[k].reshape(1, -1) for lp in layers], 0)

    # FlattenHead weight: torch flat index d*N + n  ->  packed row n*D + d
    w_head_packed = (params["w_head"].reshape(D, N, P).transpose(1, 0, 2)
                     .reshape(N * D, P).astype(jnp.bfloat16))

    return {
        "aw_row": aw_row, "ab_row": ab_row,
        "w_emb": params["w_emb"].astype(jnp.bfloat16), "pos_exp": pos_exp,
        "sid_r": sid_r, "sid_c": sid_c, "hd_r": hd_r, "hd_c": hd_c,
        "wq": sw("wq"), "bq": sb("bq"),
        "wk": sw("wk"), "bk": sb("bk"),
        "wv": sw("wv"), "bv": sb("bv"),
        "wo": sw("wo"), "bo": sb("bo"),
        "g1": sb("g1"), "be1": sb("be1"),
        "w1": sw("w1"), "b1": sb("b1"),
        "w2": sw("w2"), "b2": sb("b2"),
        "g2": sb("g2"), "be2": sb("be2"),
        "gF": params["gF"].reshape(1, D), "bF": params["bF"].reshape(1, D),
        "w_head": w_head_packed, "b_head": params["b_head"].reshape(1, P),
    }


# --------------------------------------------------------------------------
# forward pass (mirrors DownStreamingModel.forward) -- one pallas_call
# --------------------------------------------------------------------------
def build_forward(params, cfg, batch_size):
    pack = prepare_kernel_params(params, cfg, batch_size)
    BC = batch_size * cfg.enc_in

    kernel = functools.partial(
        _fused_forward_kernel,
        n_layers=cfg.e_layers, n_heads=cfg.n_heads, seq_len=cfg.seq_len,
        patch_len=cfg.patch_len, stride=cfg.stride, padding=cfg.padding,
        num_patch=cfg.num_patch, d_model=cfg.d_model, pred_len=cfg.pred_len)

    # grid=() -> single invocation, whole (tiny) operands resident in VMEM.
    call = pl.pallas_call(
        kernel,
        out_shape=jax.ShapeDtypeStruct((BC, cfg.pred_len), jnp.float32),
    )

    arg_order = ("aw_row", "ab_row", "w_emb", "pos_exp",
                 "sid_r", "sid_c", "hd_r", "hd_c",
                 "wq", "bq", "wk", "bk", "wv", "bv", "wo", "bo",
                 "g1", "be1", "w1", "b1", "w2", "b2", "g2", "be2",
                 "gF", "bF", "w_head", "b_head")

    @jax.jit
    def forward(x_enc, x_mark_enc=None, x_dec=None, x_mark_dec=None, mask=None):
        B, L, C = x_enc.shape
        # channels-first, one row per (batch, channel) series (cheap layout op)
        x2d = jnp.transpose(x_enc, (0, 2, 1)).reshape(B * C, L)
        y = call(x2d, *[pack[k] for k in arg_order])          # (B*C, pred_len)
        y = y.reshape(B, C, cfg.pred_len)
        return jnp.transpose(y, (0, 2, 1))                    # (B, pred_len, C)

    return forward


# --------------------------------------------------------------------------
if __name__ == "__main__":
    cfg = Cfg()
    key = jax.random.PRNGKey(0)
    kp, kx = jax.random.split(key)

    params = init_params(cfg, kp)

    B = 2
    x_enc = jax.random.normal(kx, (B, cfg.seq_len, cfg.enc_in), dtype=jnp.float32)
    # unused by the forward pass (kept only for signature parity)
    x_mark_enc = jnp.zeros((B, cfg.seq_len, 4), jnp.float32)
    x_dec = jnp.zeros((B, cfg.pred_len, cfg.enc_in), jnp.float32)
    x_mark_dec = jnp.zeros((B, cfg.pred_len, 4), jnp.float32)

    forward = build_forward(params, cfg, B)
    out = forward(x_enc, x_mark_enc, x_dec, x_mark_dec)
    out = jax.block_until_ready(out)

    assert out.shape == (B, cfg.pred_len, cfg.enc_in), out.shape
    assert bool(jnp.all(jnp.isfinite(out)))
    print("KERNEL_OK")
</pallas_src>

<mosaic_0001>
module attributes {stable_mosaic.version = 11 : i64} {
  func.func @_fused_forward_kernel(%arg0: memref<8x16xf32, #tpu.memory_space<vmem>>, %arg1: memref<8x1xf32, #tpu.memory_space<vmem>>, %arg2: memref<8x1xf32, #tpu.memory_space<vmem>>, %arg3: memref<4x32xbf16, #tpu.memory_space<vmem>>, %arg4: memref<40x32xf32, #tpu.memory_space<vmem>>, %arg5: memref<160x1xf32, #tpu.memory_space<vmem>>, %arg6: memref<1x40xf32, #tpu.memory_space<vmem>>, %arg7: memref<160x1xf32, #tpu.memory_space<vmem>>, %arg8: memref<1x32xf32, #tpu.memory_space<vmem>>, %arg9: memref<2x32x32xbf16, #tpu.memory_space<vmem>>, %arg10: memref<2x1x32xf32, #tpu.memory_space<vmem>>, %arg11: memref<2x32x32xbf16, #tpu.memory_space<vmem>>, %arg12: memref<2x1x32xf32, #tpu.memory_space<vmem>>, %arg13: memref<2x32x32xbf16, #tpu.memory_space<vmem>>, %arg14: memref<2x1x32xf32, #tpu.memory_space<vmem>>, %arg15: memref<2x32x32xbf16, #tpu.memory_space<vmem>>, %arg16: memref<2x1x32xf32, #tpu.memory_space<vmem>>, %arg17: memref<2x1x32xf32, #tpu.memory_space<vmem>>, %arg18: memref<2x1x32xf32, #tpu.memory_space<vmem>>, %arg19: memref<2x32x64xbf16, #tpu.memory_space<vmem>>, %arg20: memref<2x1x64xf32, #tpu.memory_space<vmem>>, %arg21: memref<2x64x32xbf16, #tpu.memory_space<vmem>>, %arg22: memref<2x1x32xf32, #tpu.memory_space<vmem>>, %arg23: memref<2x1x32xf32, #tpu.memory_space<vmem>>, %arg24: memref<2x1x32xf32, #tpu.memory_space<vmem>>, %arg25: memref<1x32xf32, #tpu.memory_space<vmem>>, %arg26: memref<1x32xf32, #tpu.memory_space<vmem>>, %arg27: memref<160x8xbf16, #tpu.memory_space<vmem>>, %arg28: memref<1x8xf32, #tpu.memory_space<vmem>>, %arg29: memref<8x8xf32, #tpu.memory_space<vmem>>) attributes {dimension_semantics = [], scalar_prefetch = 0 : i64, scratch_operands = 0 : i64, tpu.core_type = #tpu.core_type<tc>} {
    %c0 = arith.constant 0 : index
    %c0_0 = arith.constant 0 : index
    %0 = vector.load %arg0[%c0, %c0_0] : memref<8x16xf32, #tpu.memory_space<vmem>>, vector<8x16xf32>
    %cst = arith.constant dense<0.000000e+00> : vector<8xf32>
    %1 = vector.multi_reduction <add>, %0, %cst [1] : vector<8x16xf32> to vector<8xf32>
    %2 = vector.shape_cast %1 : vector<8xf32> to vector<8x1xf32>
    %cst_1 = arith.constant 1.600000e+01 : f32
    %3 = vector.broadcast %cst_1 : f32 to vector<8x1xf32>
    %4 = arith.divf %2, %3 : vector<8x1xf32>
    %5 = vector.broadcast %4 : vector<8x1xf32> to vector<8x16xf32>
    %6 = arith.subf %0, %5 : vector<8x16xf32>
    %7 = arith.mulf %6, %6 : vector<8x16xf32>
    %cst_2 = arith.constant dense<0.000000e+00> : vector<8xf32>
    %8 = vector.multi_reduction <add>, %7, %cst_2 [1] : vector<8x16xf32> to vector<8xf32>
    %9 = vector.shape_cast %8 : vector<8xf32> to vector<8x1xf32>
    %cst_3 = arith.constant 1.600000e+01 : f32
    %10 = vector.broadcast %cst_3 : f32 to vector<8x1xf32>
    %11 = arith.divf %9, %10 : vector<8x1xf32>
    %cst_4 = arith.constant 9.99999974E-6 : f32
    %12 = vector.broadcast %cst_4 : f32 to vector<8x1xf32>
    %13 = arith.addf %11, %12 : vector<8x1xf32>
    %14 = math.sqrt %13 : vector<8x1xf32>
    %15 = vector.broadcast %4 : vector<8x1xf32> to vector<8x16xf32>
    %16 = arith.subf %0, %15 : vector<8x16xf32>
    %17 = vector.broadcast %14 : vector<8x1xf32> to vector<8x16xf32>
    %18 = arith.divf %16, %17 : vector<8x16xf32>
    %c0_5 = arith.constant 0 : index
    %c0_6 = arith.constant 0 : index
    %19 = vector.load %arg1[%c0_5, %c0_6] : memref<8x1xf32, #tpu.memory_space<vmem>>, vector<8x1xf32>
    %20 = vector.broadcast %19 : vector<8x1xf32> to vector<8x16xf32>
    %21 = arith.mulf %18, %20 : vector<8x16xf32>
    %c0_7 = arith.constant 0 : index
    %c0_8 = arith.constant 0 : index
    %22 = vector.load %arg2[%c0_7, %c0_8] : memref<8x1xf32, #tpu.memory_space<vmem>>, vector<8x1xf32>
    %23 = vector.broadcast %22 : vector<8x1xf32> to vector<8x16xf32>
    %24 = arith.addf %21, %23 : vector<8x16xf32>
    %25 = vector.extract_strided_slice %24 {offsets = [0, 15], sizes = [8, 1], strides = [1, 1]} : vector<8x16xf32> to vector<8x1xf32>
    %26 = vector.shape_cast %25 : vector<8x1xf32> to vector<8x1xf32>
    %27 = vector.broadcast %26 : vector<8x1xf32> to vector<8x4xf32>
    %28 = tpu.concatenate %24, %27 in 1 : vector<8x16xf32>, vector<8x4xf32> -> vector<8x20xf32>
    %29 = vector.extract_strided_slice %28 {offsets = [0, 0], sizes = [8, 4], strides = [1, 1]} : vector<8x20xf32> to vector<8x4xf32>
    %30 = vector.extract_strided_slice %28 {offsets = [0, 4], sizes = [8, 4], strides = [1, 1]} : vector<8x20xf32> to vector<8x4xf32>
    %31 = vector.extract_strided_slice %28 {offsets = [0, 8], sizes = [8, 4], strides = [1, 1]} : vector<8x20xf32> to vector<8x4xf32>
    %32 = vector.extract_strided_slice %28 {offsets = [0, 12], sizes = [8, 4], strides = [1, 1]} : vector<8x20xf32> to vector<8x4xf32>
    %33 = vector.extract_strided_slice %28 {offsets = [0, 16], sizes = [8, 4], strides = [1, 1]} : vector<8x20xf32> to vector<8x4xf32>
    %34 = tpu.concatenate %29, %30, %31, %32, %33 in 0 : vector<8x4xf32>, vector<8x4xf32>, vector<8x4xf32>, vector<8x4xf32>, vector<8x4xf32> -> vector<40x4xf32>
    %c0_9 = arith.constant 0 : index
    %c0_10 = arith.constant 0 : index
    %35 = vector.load %arg3[%c0_9, %c0_10] : memref<4x32xbf16, #tpu.memory_space<vmem>>, vector<4x32xbf16>
    %36 = arith.truncf %34 : vector<40x4xf32> to vector<40x4xbf16>
    %cst_11 = arith.constant dense<0.000000e+00> : vector<40x32xf32>
    %37 = tpu.matmul %36, %35, %cst_11 {dimension_numbers = #tpu.dot_dimension_numbers<[1], [0], [0], [1], [0, 0, 1, 1], [], []>} : vector<40x4xbf16>, vector<4x32xbf16>, vector<40x32xf32> -> vector<40x32xf32>
    %c0_12 = arith.constant 0 : index
    %c0_13 = arith.constant 0 : index
    %38 = vector.load %arg4[%c0_12, %c0_13] : memref<40x32xf32, #tpu.memory_space<vmem>>, vector<40x32xf32>
    %39 = arith.addf %37, %38 : vector<40x32xf32>
    %c0_14 = arith.constant 0 : index
    %c0_15 = arith.constant 0 : index
    %40 = vector.load %arg5[%c0_14, %c0_15] : memref<160x1xf32, #tpu.memory_space<vmem>>, vector<160x1xf32>
    %c0_16 = arith.constant 0 : index
    %c0_17 = arith.constant 0 : index
    %41 = vector.load %arg6[%c0_16, %c0_17] : memref<1x40xf32, #tpu.memory_space<vmem>>, vector<1x40xf32>
    %42 = vector.broadcast %40 : vector<160x1xf32> to vector<160x40xf32>
    %43 = vector.broadcast %41 : vector<1x40xf32> to vector<160x40xf32>
    %44 = arith.cmpf oeq, %42, %43 : vector<160x40xf32>
    %cst_18 = arith.constant 0.000000e+00 : f32
    %cst_19 = arith.constant -1.000000e+30 : f32
    %45 = vector.broadcast %cst_18 : f32 to vector<160x40xf32>
    %46 = vector.broadcast %cst_19 : f32 to vector<160x40xf32>
    %47 = arith.select %44, %45, %46 : vector<160x40xi1>, vector<160x40xf32>
    %c0_20 = arith.constant 0 : index
    %c0_21 = arith.constant 0 : index
    %48 = vector.load %arg7[%c0_20, %c0_21] : memref<160x1xf32, #tpu.memory_space<vmem>>, vector<160x1xf32>
    %c0_22 = arith.constant 0 : index
    %c0_23 = arith.constant 0 : index
    %49 = vector.load %arg8[%c0_22, %c0_23] : memref<1x32xf32, #tpu.memory_space<vmem>>, vector<1x32xf32>
    %50 = vector.broadcast %48 : vector<160x1xf32> to vector<160x32xf32>
    %51 = vector.broadcast %49 : vector<1x32xf32> to vector<160x32xf32>
    %52 = arith.cmpf oeq, %50, %51 : vector<160x32xf32>
    %cst_24 = arith.constant 1.000000e+00 : f32
    %cst_25 = arith.constant 0.000000e+00 : f32
    %53 = vector.broadcast %cst_24 : f32 to vector<160x32xf32>
    %54 = vector.broadcast %cst_25 : f32 to vector<160x32xf32>
    %55 = arith.select %52, %53, %54 : vector<160x32xi1>, vector<160x32xf32>
    %c0_26 = arith.constant 0 : index
    %c0_27 = arith.constant 0 : index
    %c0_28 = arith.constant 0 : index
    %56 = vector.load %arg9[%c0_26, %c0_27, %c0_28] : memref<2x32x32xbf16, #tpu.memory_space<vmem>>, vector<1x32x32xbf16>
    %57 = vector.shape_cast %56 : vector<1x32x32xbf16> to vector<32x32xbf16>
    %58 = arith.truncf %39 : vector<40x32xf32> to vector<40x32xbf16>
    %cst_29 = arith.constant dense<0.000000e+00> : vector<40x32xf32>
    %59 = tpu.matmul %58, %57, %cst_29 {dimension_numbers = #tpu.dot_dimension_numbers<[1], [0], [0], [1], [0, 0, 1, 1], [], []>} : vector<40x32xbf16>, vector<32x32xbf16>, vector<40x32xf32> -> vector<40x32xf32>
    %c0_30 = arith.constant 0 : index
    %c0_31 = arith.constant 0 : index
    %c0_32 = arith.constant 0 : index
    %60 = vector.load %arg10[%c0_30, %c0_31, %c0_32] : memref<2x1x32xf32, #tpu.memory_space<vmem>>, vector<1x1x32xf32>
    %61 = vector.shape_cast %60 : vector<1x1x32xf32> to vector<1x32xf32>
    %62 = vector.broadcast %61 : vector<1x32xf32> to vector<40x32xf32>
    %63 = arith.addf %59, %62 : vector<40x32xf32>
    %c0_33 = arith.constant 0 : index
    %c0_34 = arith.constant 0 : index
    %c0_35 = arith.constant 0 : index
    %64 = vector.load %arg11[%c0_33, %c0_34, %c0_35] : memref<2x32x32xbf16, #tpu.memory_space<vmem>>, vector<1x32x32xbf16>
    %65 = vector.shape_cast %64 : vector<1x32x32xbf16> to vector<32x32xbf16>
    %66 = arith.truncf %39 : vector<40x32xf32> to vector<40x32xbf16>
    %cst_36 = arith.constant dense<0.000000e+00> : vector<40x32xf32>
    %67 = tpu.matmul %66, %65, %cst_36 {dimension_numbers = #tpu.dot_dimension_numbers<[1], [0], [0], [1], [0, 0, 1, 1], [], []>} : vector<40x32xbf16>, vector<32x32xbf16>, vector<40x32xf32> -> vector<40x32xf32>
    %c0_37 = arith.constant 0 : index
    %c0_38 = arith.constant 0 : index
    %c0_39 = arith.constant 0 : index
    %68 = vector.load %arg12[%c0_37, %c0_38, %c0_39] : memref<2x1x32xf32, #tpu.memory_space<vmem>>, vector<1x1x32xf32>
    %69 = vector.shape_cast %68 : vector<1x1x32xf32> to vector<1x32xf32>
    %70 = vector.broadcast %69 : vector<1x32xf32> to vector<40x32xf32>
    %71 = arith.addf %67, %70 : vector<40x32xf32>
    %c0_40 = arith.constant 0 : index
    %c0_41 = arith.constant 0 : index
    %c0_42 = arith.constant 0 : index
    %72 = vector.load %arg13[%c0_40, %c0_41, %c0_42] : memref<2x32x32xbf16, #tpu.memory_space<vmem>>, vector<1x32x32xbf16>
    %73 = vector.shape_cast %72 : vector<1x32x32xbf16> to vector<32x32xbf16>
    %74 = arith.truncf %39 : vector<40x32xf32> to vector<40x32xbf16>
    %cst_43 = arith.constant dense<0.000000e+00> : vector<40x32xf32>
    %75 = tpu.matmul %74, %73, %cst_43 {dimension_numbers = #tpu.dot_dimension_numbers<[1], [0], [0], [1], [0, 0, 1, 1], [], []>} : vector<40x32xbf16>, vector<32x32xbf16>, vector<40x32xf32> -> vector<40x32xf32>
    %c0_44 = arith.constant 0 : index
    %c0_45 = arith.constant 0 : index
    %c0_46 = arith.constant 0 : index
    %76 = vector.load %arg14[%c0_44, %c0_45, %c0_46] : memref<2x1x32xf32, #tpu.memory_space<vmem>>, vector<1x1x32xf32>
    %77 = vector.shape_cast %76 : vector<1x1x32xf32> to vector<1x32xf32>
    %78 = vector.broadcast %77 : vector<1x32xf32> to vector<40x32xf32>
    %79 = arith.addf %75, %78 : vector<40x32xf32>
    %80 = tpu.concatenate %63, %63, %63, %63 in 0 : vector<40x32xf32>, vector<40x32xf32>, vector<40x32xf32>, vector<40x32xf32> -> vector<160x32xf32>
    %81 = arith.mulf %80, %55 : vector<160x32xf32>
    %82 = arith.truncf %81 : vector<160x32xf32> to vector<160x32xbf16>
    %83 = arith.truncf %71 : vector<40x32xf32> to vector<40x32xbf16>
    %cst_47 = arith.constant dense<0.000000e+00> : vector<160x40xf32>
    %84 = tpu.matmul %82, %83, %cst_47 {dimension_numbers = #tpu.dot_dimension_numbers<[1], [1], [0], [0], [0, 0, 1, 0], [], []>} : vector<160x32xbf16>, vector<40x32xbf16>, vector<160x40xf32> -> vector<160x40xf32>
    %cst_48 = arith.constant 0.353553385 : f32
    %85 = vector.broadcast %cst_48 : f32 to vector<160x40xf32>
    %86 = arith.mulf %84, %85 : vector<160x40xf32>
    %87 = arith.addf %86, %47 : vector<160x40xf32>
    %cst_49 = arith.constant dense<0xFF800000> : vector<160xf32>
    %88 = vector.multi_reduction <maximumf>, %87, %cst_49 [1] : vector<160x40xf32> to vector<160xf32>
    %89 = vector.shape_cast %88 : vector<160xf32> to vector<160x1xf32>
    %90 = vector.broadcast %89 : vector<160x1xf32> to vector<160x40xf32>
    %91 = arith.subf %87, %90 : vector<160x40xf32>
    %92 = math.exp %91 : vector<160x40xf32>
    %cst_50 = arith.constant dense<0.000000e+00> : vector<160xf32>
    %93 = vector.multi_reduction <add>, %92, %cst_50 [1] : vector<160x40xf32> to vector<160xf32>
    %94 = vector.shape_cast %93 : vector<160xf32> to vector<160x1xf32>
    %95 = tpu.reciprocal %94 {approx = true} : vector<160x1xf32> -> vector<160x1xf32>
    %96 = vector.broadcast %95 : vector<160x1xf32> to vector<160x40xf32>
    %97 = arith.mulf %92, %96 : vector<160x40xf32>
    %98 = arith.truncf %97 : vector<160x40xf32> to vector<160x40xbf16>
    %99 = arith.truncf %79 : vector<40x32xf32> to vector<40x32xbf16>
    %cst_51 = arith.constant dense<0.000000e+00> : vector<160x32xf32>
    %100 = tpu.matmul %98, %99, %cst_51 {dimension_numbers = #tpu.dot_dimension_numbers<[1], [0], [0], [1], [0, 0, 1, 1], [], []>} : vector<160x40xbf16>, vector<40x32xbf16>, vector<160x32xf32> -> vector<160x32xf32>
    %101 = arith.mulf %100, %55 : vector<160x32xf32>
    %102 = vector.extract_strided_slice %101 {offsets = [0, 0], sizes = [40, 32], strides = [1, 1]} : vector<160x32xf32> to vector<40x32xf32>
    %103 = vector.extract_strided_slice %101 {offsets = [40, 0], sizes = [40, 32], strides = [1, 1]} : vector<160x32xf32> to vector<40x32xf32>
    %104 = arith.addf %102, %103 : vector<40x32xf32>
    %105 = vector.extract_strided_slice %101 {offsets = [80, 0], sizes = [40, 32], strides = [1, 1]} : vector<160x32xf32> to vector<40x32xf32>
    %106 = arith.addf %104, %105 : vector<40x32xf32>
    %107 = vector.extract_strided_slice %101 {offsets = [120, 0], sizes = [40, 32], strides = [1, 1]} : vector<160x32xf32> to vector<40x32xf32>
    %108 = arith.addf %106, %107 : vector<40x32xf32>
    %c0_52 = arith.constant 0 : index
    %c0_53 = arith.constant 0 : index
    %c0_54 = arith.constant 0 : index
    %109 = vector.load %arg15[%c0_52, %c0_53, %c0_54] : memref<2x32x32xbf16, #tpu.memory_space<vmem>>, vector<1x32x32xbf16>
    %110 = vector.shape_cast %109 : vector<1x32x32xbf16> to vector<32x32xbf16>
    %111 = arith.truncf %108 : vector<40x32xf32> to vector<40x32xbf16>
    %cst_55 = arith.constant dense<0.000000e+00> : vector<40x32xf32>
    %112 = tpu.matmul %111, %110, %cst_55 {dimension_numbers = #tpu.dot_dimension_numbers<[1], [0], [0], [1], [0, 0, 1, 1], [], []>} : vector<40x32xbf16>, vector<32x32xbf16>, vector<40x32xf32> -> vector<40x32xf32>
    %c0_56 = arith.constant 0 : index
    %c0_57 = arith.constant 0 : index
    %c0_58 = arith.constant 0 : index
    %113 = vector.load %arg16[%c0_56, %c0_57, %c0_58] : memref<2x1x32xf32, #tpu.memory_space<vmem>>, vector<1x1x32xf32>
    %114 = vector.shape_cast %113 : vector<1x1x32xf32> to vector<1x32xf32>
    %115 = vector.broadcast %114 : vector<1x32xf32> to vector<40x32xf32>
    %116 = arith.addf %112, %115 : vector<40x32xf32>
    %117 = arith.addf %39, %116 : vector<40x32xf32>
    %c0_59 = arith.constant 0 : index
    %c0_60 = arith.constant 0 : index
    %c0_61 = arith.constant 0 : index
    %118 = vector.load %arg17[%c0_59, %c0_60, %c0_61] : memref<2x1x32xf32, #tpu.memory_space<vmem>>, vector<1x1x32xf32>
    %119 = vector.shape_cast %118 : vector<1x1x32xf32> to vector<1x32xf32>
    %c0_62 = arith.constant 0 : index
    %c0_63 = arith.constant 0 : index
    %c0_64 = arith.constant 0 : index
    %120 = vector.load %arg18[%c0_62, %c0_63, %c0_64] : memref<2x1x32xf32, #tpu.memory_space<vmem>>, vector<1x1x32xf32>
    %121 = vector.shape_cast %120 : vector<1x1x32xf32> to vector<1x32xf32>
    %cst_65 = arith.constant dense<0.000000e+00> : vector<40xf32>
    %122 = vector.multi_reduction <add>, %117, %cst_65 [1] : vector<40x32xf32> to vector<40xf32>
    %123 = vector.shape_cast %122 : vector<40xf32> to vector<40x1xf32>
    %cst_66 = arith.constant 3.200000e+01 : f32
    %124 = vector.broadcast %cst_66 : f32 to vector<40x1xf32>
    %125 = arith.divf %123, %124 : vector<40x1xf32>
    %126 = vector.broadcast %125 : vector<40x1xf32> to vector<40x32xf32>
    %127 = arith.subf %117, %126 : vector<40x32xf32>
    %128 = arith.mulf %127, %127 : vector<40x32xf32>
    %cst_67 = arith.constant dense<0.000000e+00> : vector<40xf32>
    %129 = vector.multi_reduction <add>, %128, %cst_67 [1] : vector<40x32xf32> to vector<40xf32>
    %130 = vector.shape_cast %129 : vector<40xf32> to vector<40x1xf32>
    %cst_68 = arith.constant 3.200000e+01 : f32
    %131 = vector.broadcast %cst_68 : f32 to vector<40x1xf32>
    %132 = arith.divf %130, %131 : vector<40x1xf32>
    %133 = vector.broadcast %125 : vector<40x1xf32> to vector<40x32xf32>
    %134 = arith.subf %117, %133 : vector<40x32xf32>
    %cst_69 = arith.constant 9.99999974E-6 : f32
    %135 = vector.broadcast %cst_69 : f32 to vector<40x1xf32>
    %136 = arith.addf %132, %135 : vector<40x1xf32>
    %137 = math.rsqrt %136 : vector<40x1xf32>
    %138 = vector.broadcast %137 : vector<40x1xf32> to vector<40x32xf32>
    %139 = arith.mulf %134, %138 : vector<40x32xf32>
    %140 = vector.broadcast %119 : vector<1x32xf32> to vector<40x32xf32>
    %141 = arith.mulf %139, %140 : vector<40x32xf32>
    %142 = vector.broadcast %121 : vector<1x32xf32> to vector<40x32xf32>
    %143 = arith.addf %141, %142 : vector<40x32xf32>
    %c0_70 = arith.constant 0 : index
    %c0_71 = arith.constant 0 : index
    %c0_72 = arith.constant 0 : index
    %144 = vector.load %arg19[%c0_70, %c0_71, %c0_72] : memref<2x32x64xbf16, #tpu.memory_space<vmem>>, vector<1x32x64xbf16>
    %145 = vector.shape_cast %144 : vector<1x32x64xbf16> to vector<32x64xbf16>
    %146 = arith.truncf %143 : vector<40x32xf32> to vector<40x32xbf16>
    %cst_73 = arith.constant dense<0.000000e+00> : vector<40x64xf32>
    %147 = tpu.matmul %146, %145, %cst_73 {dimension_numbers = #tpu.dot_dimension_numbers<[1], [0], [0], [1], [0, 0, 1, 1], [], []>} : vector<40x32xbf16>, vector<32x64xbf16>, vector<40x64xf32> -> vector<40x64xf32>
    %c0_74 = arith.constant 0 : index
    %c0_75 = arith.constant 0 : index
    %c0_76 = arith.constant 0 : index
    %148 = vector.load %arg20[%c0_74, %c0_75, %c0_76] : memref<2x1x64xf32, #tpu.memory_space<vmem>>, vector<1x1x64xf32>
    %149 = vector.shape_cast %148 : vector<1x1x64xf32> to vector<1x64xf32>
    %150 = vector.broadcast %149 : vector<1x64xf32> to vector<40x64xf32>
    %151 = arith.addf %147, %150 : vector<40x64xf32>
    %cst_77 = arith.constant 0.000000e+00 : f32
    %152 = vector.broadcast %cst_77 : f32 to vector<40x64xf32>
    %153 = arith.maximumf %151, %152 : vector<40x64xf32>
    %c0_78 = arith.constant 0 : index
    %c0_79 = arith.constant 0 : index
    %c0_80 = arith.constant 0 : index
    %154 = vector.load %arg21[%c0_78, %c0_79, %c0_80] : memref<2x64x32xbf16, #tpu.memory_space<vmem>>, vector<1x64x32xbf16>
    %155 = vector.shape_cast %154 : vector<1x64x32xbf16> to vector<64x32xbf16>
    %156 = arith.truncf %153 : vector<40x64xf32> to vector<40x64xbf16>
    %cst_81 = arith.constant dense<0.000000e+00> : vector<40x32xf32>
    %157 = tpu.matmul %156, %155, %cst_81 {dimension_numbers = #tpu.dot_dimension_numbers<[1], [0], [0], [1], [0, 0, 1, 1], [], []>} : vector<40x64xbf16>, vector<64x32xbf16>, vector<40x32xf32> -> vector<40x32xf32>
    %c0_82 = arith.constant 0 : index
    %c0_83 = arith.constant 0 : index
    %c0_84 = arith.constant 0 : index
    %158 = vector.load %arg22[%c0_82, %c0_83, %c0_84] : memref<2x1x32xf32, #tpu.memory_space<vmem>>, vector<1x1x32xf32>
    %159 = vector.shape_cast %158 : vector<1x1x32xf32> to vector<1x32xf32>
    %160 = vector.broadcast %159 : vector<1x32xf32> to vector<40x32xf32>
    %161 = arith.addf %157, %160 : vector<40x32xf32>
    %162 = arith.addf %143, %161 : vector<40x32xf32>
    %c0_85 = arith.constant 0 : index
    %c0_86 = arith.constant 0 : index
    %c0_87 = arith.constant 0 : index
    %163 = vector.load %arg23[%c0_85, %c0_86, %c0_87] : memref<2x1x32xf32, #tpu.memory_space<vmem>>, vector<1x1x32xf32>
    %164 = vector.shape_cast %163 : vector<1x1x32xf32> to vector<1x32xf32>
    %c0_88 = arith.constant 0 : index
    %c0_89 = arith.constant 0 : index
    %c0_90 = arith.constant 0 : index
    %165 = vector.load %arg24[%c0_88, %c0_89, %c0_90] : memref<2x1x32xf32, #tpu.memory_space<vmem>>, vector<1x1x32xf32>
    %166 = vector.shape_cast %165 : vector<1x1x32xf32> to vector<1x32xf32>
    %cst_91 = arith.constant dense<0.000000e+00> : vector<40xf32>
    %167 = vector.multi_reduction <add>, %162, %cst_91 [1] : vector<40x32xf32> to vector<40xf32>
    %168 = vector.shape_cast %167 : vector<40xf32> to vector<40x1xf32>
    %cst_92 = arith.constant 3.200000e+01 : f32
    %169 = vector.broadcast %cst_92 : f32 to vector<40x1xf32>
    %170 = arith.divf %168, %169 : vector<40x1xf32>
    %171 = vector.broadcast %170 : vector<40x1xf32> to vector<40x32xf32>
    %172 = arith.subf %162, %171 : vector<40x32xf32>
    %173 = arith.mulf %172, %172 : vector<40x32xf32>
    %cst_93 = arith.constant dense<0.000000e+00> : vector<40xf32>
    %174 = vector.multi_reduction <add>, %173, %cst_93 [1] : vector<40x32xf32> to vector<40xf32>
    %175 = vector.shape_cast %174 : vector<40xf32> to vector<40x1xf32>
    %cst_94 = arith.constant 3.200000e+01 : f32
    %176 = vector.broadcast %cst_94 : f32 to vector<40x1xf32>
    %177 = arith.divf %175, %176 : vector<40x1xf32>
    %178 = vector.broadcast %170 : vector<40x1xf32> to vector<40x32xf32>
    %179 = arith.subf %162, %178 : vector<40x32xf32>
    %cst_95 = arith.constant 9.99999974E-6 : f32
    %180 = vector.broadcast %cst_95 : f32 to vector<40x1xf32>
    %181 = arith.addf %177, %180 : vector<40x1xf32>
    %182 = math.rsqrt %181 : vector<40x1xf32>
    %183 = vector.broadcast %182 : vector<40x1xf32> to vector<40x32xf32>
    %184 = arith.mulf %179, %183 : vector<40x32xf32>
    %185 = vector.broadcast %164 : vector<1x32xf32> to vector<40x32xf32>
    %186 = arith.mulf %184, %185 : vector<40x32xf32>
    %187 = vector.broadcast %166 : vector<1x32xf32> to vector<40x32xf32>
    %188 = arith.addf %186, %187 : vector<40x32xf32>
    %c1 = arith.constant 1 : index
    %c0_96 = arith.constant 0 : index
    %c0_97 = arith.constant 0 : index
    %189 = vector.load %arg9[%c1, %c0_96, %c0_97] : memref<2x32x32xbf16, #tpu.memory_space<vmem>>, vector<1x32x32xbf16>
    %190 = vector.shape_cast %189 : vector<1x32x32xbf16> to vector<32x32xbf16>
    %191 = arith.truncf %188 : vector<40x32xf32> to vector<40x32xbf16>
    %cst_98 = arith.constant dense<0.000000e+00> : vector<40x32xf32>
    %192 = tpu.matmul %191, %190, %cst_98 {dimension_numbers = #tpu.dot_dimension_numbers<[1], [0], [0], [1], [0, 0, 1, 1], [], []>} : vector<40x32xbf16>, vector<32x32xbf16>, vector<40x32xf32> -> vector<40x32xf32>
    %c1_99 = arith.constant 1 : index
    %c0_100 = arith.constant 0 : index
    %c0_101 = arith.constant 0 : index
    %193 = vector.load %arg10[%c1_99, %c0_100, %c0_101] : memref<2x1x32xf32, #tpu.memory_space<vmem>>, vector<1x1x32xf32>
    %194 = vector.shape_cast %193 : vector<1x1x32xf32> to vector<1x32xf32>
    %195 = vector.broadcast %194 : vector<1x32xf32> to vector<40x32xf32>
    %196 = arith.addf %192, %195 : vector<40x32xf32>
    %c1_102 = arith.constant 1 : index
    %c0_103 = arith.constant 0 : index
    %c0_104 = arith.constant 0 : index
    %197 = vector.load %arg11[%c1_102, %c0_103, %c0_104] : memref<2x32x32xbf16, #tpu.memory_space<vmem>>, vector<1x32x32xbf16>
    %198 = vector.shape_cast %197 : vector<1x32x32xbf16> to vector<32x32xbf16>
    %199 = arith.truncf %188 : vector<40x32xf32> to vector<40x32xbf16>
    %cst_105 = arith.constant dense<0.000000e+00> : vector<40x32xf32>
    %200 = tpu.matmul %199, %198, %cst_105 {dimension_numbers = #tpu.dot_dimension_numbers<[1], [0], [0], [1], [0, 0, 1, 1], [], []>} : vector<40x32xbf16>, vector<32x32xbf16>, vector<40x32xf32> -> vector<40x32xf32>
    %c1_106 = arith.constant 1 : index
    %c0_107 = arith.constant 0 : index
    %c0_108 = arith.constant 0 : index
    %201 = vector.load %arg12[%c1_106, %c0_107, %c0_108] : memref<2x1x32xf32, #tpu.memory_space<vmem>>, vector<1x1x32xf32>
    %202 = vector.shape_cast %201 : vector<1x1x32xf32> to vector<1x32xf32>
    %203 = vector.broadcast %202 : vector<1x32xf32> to vector<40x32xf32>
    %204 = arith.addf %200, %203 : vector<40x32xf32>
    %c1_109 = arith.constant 1 : index
    %c0_110 = arith.constant 0 : index
    %c0_111 = arith.constant 0 : index
    %205 = vector.load %arg13[%c1_109, %c0_110, %c0_111] : memref<2x32x32xbf16, #tpu.memory_space<vmem>>, vector<1x32x32xbf16>
    %206 = vector.shape_cast %205 : vector<1x32x32xbf16> to vector<32x32xbf16>
    %207 = arith.truncf %188 : vector<40x32xf32> to vector<40x32xbf16>
    %cst_112 = arith.constant dense<0.000000e+00> : vector<40x32xf32>
    %208 = tpu.matmul %207, %206, %cst_112 {dimension_numbers = #tpu.dot_dimension_numbers<[1], [0], [0], [1], [0, 0, 1, 1], [], []>} : vector<40x32xbf16>, vector<32x32xbf16>, vector<40x32xf32> -> vector<40x32xf32>
    %c1_113 = arith.constant 1 : index
    %c0_114 = arith.constant 0 : index
    %c0_115 = arith.constant 0 : index
    %209 = vector.load %arg14[%c1_113, %c0_114, %c0_115] : memref<2x1x32xf32, #tpu.memory_space<vmem>>, vector<1x1x32xf32>
    %210 = vector.shape_cast %209 : vector<1x1x32xf32> to vector<1x32xf32>
    %211 = vector.broadcast %210 : vector<1x32xf32> to vector<40x32xf32>
    %212 = arith.addf %208, %211 : vector<40x32xf32>
    %213 = tpu.concatenate %196, %196, %196, %196 in 0 : vector<40x32xf32>, vector<40x32xf32>, vector<40x32xf32>, vector<40x32xf32> -> vector<160x32xf32>
    %214 = arith.mulf %213, %55 : vector<160x32xf32>
    %215 = arith.truncf %214 : vector<160x32xf32> to vector<160x32xbf16>
    %216 = arith.truncf %204 : vector<40x32xf32> to vector<40x32xbf16>
    %cst_116 = arith.constant dense<0.000000e+00> : vector<160x40xf32>
    %217 = tpu.matmul %215, %216, %cst_116 {dimension_numbers = #tpu.dot_dimension_numbers<[1], [1], [0], [0], [0, 0, 1, 0], [], []>} : vector<160x32xbf16>, vector<40x32xbf16>, vector<160x40xf32> -> vector<160x40xf32>
    %cst_117 = arith.constant 0.353553385 : f32
    %218 = vector.broadcast %cst_117 : f32 to vector<160x40xf32>
    %219 = arith.mulf %217, %218 : vector<160x40xf32>
    %220 = arith.addf %219, %47 : vector<160x40xf32>
    %cst_118 = arith.constant dense<0xFF800000> : vector<160xf32>
    %221 = vector.multi_reduction <maximumf>, %220, %cst_118 [1] : vector<160x40xf32> to vector<160xf32>
    %222 = vector.shape_cast %221 : vector<160xf32> to vector<160x1xf32>
    %223 = vector.broadcast %222 : vector<160x1xf32> to vector<160x40xf32>
    %224 = arith.subf %220, %223 : vector<160x40xf32>
    %225 = math.exp %224 : vector<160x40xf32>
    %cst_119 = arith.constant dense<0.000000e+00> : vector<160xf32>
    %226 = vector.multi_reduction <add>, %225, %cst_119 [1] : vector<160x40xf32> to vector<160xf32>
    %227 = vector.shape_cast %226 : vector<160xf32> to vector<160x1xf32>
    %228 = tpu.reciprocal %227 {approx = true} : vector<160x1xf32> -> vector<160x1xf32>
    %229 = vector.broadcast %228 : vector<160x1xf32> to vector<160x40xf32>
    %230 = arith.mulf %225, %229 : vector<160x40xf32>
    %231 = arith.truncf %230 : vector<160x40xf32> to vector<160x40xbf16>
    %232 = arith.truncf %212 : vector<40x32xf32> to vector<40x32xbf16>
    %cst_120 = arith.constant dense<0.000000e+00> : vector<160x32xf32>
    %233 = tpu.matmul %231, %232, %cst_120 {dimension_numbers = #tpu.dot_dimension_numbers<[1], [0], [0], [1], [0, 0, 1, 1], [], []>} : vector<160x40xbf16>, vector<40x32xbf16>, vector<160x32xf32> -> vector<160x32xf32>
    %234 = arith.mulf %233, %55 : vector<160x32xf32>
    %235 = vector.extract_strided_slice %234 {offsets = [0, 0], sizes = [40, 32], strides = [1, 1]} : vector<160x32xf32> to vector<40x32xf32>
    %236 = vector.extract_strided_slice %234 {offsets = [40, 0], sizes = [40, 32], strides = [1, 1]} : vector<160x32xf32> to vector<40x32xf32>
    %237 = arith.addf %235, %236 : vector<40x32xf32>
    %238 = vector.extract_strided_slice %234 {offsets = [80, 0], sizes = [40, 32], strides = [1, 1]} : vector<160x32xf32> to vector<40x32xf32>
    %239 = arith.addf %237, %238 : vector<40x32xf32>
    %240 = vector.extract_strided_slice %234 {offsets = [120, 0], sizes = [40, 32], strides = [1, 1]} : vector<160x32xf32> to vector<40x32xf32>
    %241 = arith.addf %239, %240 : vector<40x32xf32>
    %c1_121 = arith.constant 1 : index
    %c0_122 = arith.constant 0 : index
    %c0_123 = arith.constant 0 : index
    %242 = vector.load %arg15[%c1_121, %c0_122, %c0_123] : memref<2x32x32xbf16, #tpu.memory_space<vmem>>, vector<1x32x32xbf16>
    %243 = vector.shape_cast %242 : vector<1x32x32xbf16> to vector<32x32xbf16>
    %244 = arith.truncf %241 : vector<40x32xf32> to vector<40x32xbf16>
    %cst_124 = arith.constant dense<0.000000e+00> : vector<40x32xf32>
    %245 = tpu.matmul %244, %243, %cst_124 {dimension_numbers = #tpu.dot_dimension_numbers<[1], [0], [0], [1], [0, 0, 1, 1], [], []>} : vector<40x32xbf16>, vector<32x32xbf16>, vector<40x32xf32> -> vector<40x32xf32>
    %c1_125 = arith.constant 1 : index
    %c0_126 = arith.constant 0 : index
    %c0_127 = arith.constant 0 : index
    %246 = vector.load %arg16[%c1_125, %c0_126, %c0_127] : memref<2x1x32xf32, #tpu.memory_space<vmem>>, vector<1x1x32xf32>
    %247 = vector.shape_cast %246 : vector<1x1x32xf32> to vector<1x32xf32>
    %248 = vector.broadcast %247 : vector<1x32xf32> to vector<40x32xf32>
    %249 = arith.addf %245, %248 : vector<40x32xf32>
    %250 = arith.addf %188, %249 : vector<40x32xf32>
    %c1_128 = arith.constant 1 : index
    %c0_129 = arith.constant 0 : index
    %c0_130 = arith.constant 0 : index
    %251 = vector.load %arg17[%c1_128, %c0_129, %c0_130] : memref<2x1x32xf32, #tpu.memory_space<vmem>>, vector<1x1x32xf32>
    %252 = vector.shape_cast %251 : vector<1x1x32xf32> to vector<1x32xf32>
    %c1_131 = arith.constant 1 : index
    %c0_132 = arith.constant 0 : index
    %c0_133 = arith.constant 0 : index
    %253 = vector.load %arg18[%c1_131, %c0_132, %c0_133] : memref<2x1x32xf32, #tpu.memory_space<vmem>>, vector<1x1x32xf32>
    %254 = vector.shape_cast %253 : vector<1x1x32xf32> to vector<1x32xf32>
    %cst_134 = arith.constant dense<0.000000e+00> : vector<40xf32>
    %255 = vector.multi_reduction <add>, %250, %cst_134 [1] : vector<40x32xf32> to vector<40xf32>
    %256 = vector.shape_cast %255 : vector<40xf32> to vector<40x1xf32>
    %cst_135 = arith.constant 3.200000e+01 : f32
    %257 = vector.broadcast %cst_135 : f32 to vector<40x1xf32>
    %258 = arith.divf %256, %257 : vector<40x1xf32>
    %259 = vector.broadcast %258 : vector<40x1xf32> to vector<40x32xf32>
    %260 = arith.subf %250, %259 : vector<40x32xf32>
    %261 = arith.mulf %260, %260 : vector<40x32xf32>
    %cst_136 = arith.constant dense<0.000000e+00> : vector<40xf32>
    %262 = vector.multi_reduction <add>, %261, %cst_136 [1] : vector<40x32xf32> to vector<40xf32>
    %263 = vector.shape_cast %262 : vector<40xf32> to vector<40x1xf32>
    %cst_137 = arith.constant 3.200000e+01 : f32
    %264 = vector.broadcast %cst_137 : f32 to vector<40x1xf32>
    %265 = arith.divf %263, %264 : vector<40x1xf32>
    %266 = vector.broadcast %258 : vector<40x1xf32> to vector<40x32xf32>
    %267 = arith.subf %250, %266 : vector<40x32xf32>
    %cst_138 = arith.constant 9.99999974E-6 : f32
    %268 = vector.broadcast %cst_138 : f32 to vector<40x1xf32>
    %269 = arith.addf %265, %268 : vector<40x1xf32>
    %270 = math.rsqrt %269 : vector<40x1xf32>
    %271 = vector.broadcast %270 : vector<40x1xf32> to vector<40x32xf32>
    %272 = arith.mulf %267, %271 : vector<40x32xf32>
    %273 = vector.broadcast %252 : vector<1x32xf32> to vector<40x32xf32>
    %274 = arith.mulf %272, %273 : vector<40x32xf32>
    %275 = vector.broadcast %254 : vector<1x32xf32> to vector<40x32xf32>
    %276 = arith.addf %274, %275 : vector<40x32xf32>
    %c1_139 = arith.constant 1 : index
    %c0_140 = arith.constant 0 : index
    %c0_141 = arith.constant 0 : index
    %277 = vector.load %arg19[%c1_139, %c0_140, %c0_141] : memref<2x32x64xbf16, #tpu.memory_space<vmem>>, vector<1x32x64xbf16>
    %278 = vector.shape_cast %277 : vector<1x32x64xbf16> to vector<32x64xbf16>
    %279 = arith.truncf %276 : vector<40x32xf32> to vector<40x32xbf16>
    %cst_142 = arith.constant dense<0.000000e+00> : vector<40x64xf32>
    %280 = tpu.matmul %279, %278, %cst_142 {dimension_numbers = #tpu.dot_dimension_numbers<[1], [0], [0], [1], [0, 0, 1, 1], [], []>} : vector<40x32xbf16>, vector<32x64xbf16>, vector<40x64xf32> -> vector<40x64xf32>
    %c1_143 = arith.constant 1 : index
    %c0_144 = arith.constant 0 : index
    %c0_145 = arith.constant 0 : index
    %281 = vector.load %arg20[%c1_143, %c0_144, %c0_145] : memref<2x1x64xf32, #tpu.memory_space<vmem>>, vector<1x1x64xf32>
    %282 = vector.shape_cast %281 : vector<1x1x64xf32> to vector<1x64xf32>
    %283 = vector.broadcast %282 : vector<1x64xf32> to vector<40x64xf32>
    %284 = arith.addf %280, %283 : vector<40x64xf32>
    %cst_146 = arith.constant 0.000000e+00 : f32
    %285 = vector.broadcast %cst_146 : f32 to vector<40x64xf32>
    %286 = arith.maximumf %284, %285 : vector<40x64xf32>
    %c1_147 = arith.constant 1 : index
    %c0_148 = arith.constant 0 : index
    %c0_149 = arith.constant 0 : index
    %287 = vector.load %arg21[%c1_147, %c0_148, %c0_149] : memref<2x64x32xbf16, #tpu.memory_space<vmem>>, vector<1x64x32xbf16>
    %288 = vector.shape_cast %287 : vector<1x64x32xbf16> to vector<64x32xbf16>
    %289 = arith.truncf %286 : vector<40x64xf32> to vector<40x64xbf16>
    %cst_150 = arith.constant dense<0.000000e+00> : vector<40x32xf32>
    %290 = tpu.matmul %289, %288, %cst_150 {dimension_numbers = #tpu.dot_dimension_numbers<[1], [0], [0], [1], [0, 0, 1, 1], [], []>} : vector<40x64xbf16>, vector<64x32xbf16>, vector<40x32xf32> -> vector<40x32xf32>
    %c1_151 = arith.constant 1 : index
    %c0_152 = arith.constant 0 : index
    %c0_153 = arith.constant 0 : index
    %291 = vector.load %arg22[%c1_151, %c0_152, %c0_153] : memref<2x1x32xf32, #tpu.memory_space<vmem>>, vector<1x1x32xf32>
    %292 = vector.shape_cast %291 : vector<1x1x32xf32> to vector<1x32xf32>
    %293 = vector.broadcast %292 : vector<1x32xf32> to vector<40x32xf32>
    %294 = arith.addf %290, %293 : vector<40x32xf32>
    %295 = arith.addf %276, %294 : vector<40x32xf32>
    %c1_154 = arith.constant 1 : index
    %c0_155 = arith.constant 0 : index
    %c0_156 = arith.constant 0 : index
    %296 = vector.load %arg23[%c1_154, %c0_155, %c0_156] : memref<2x1x32xf32, #tpu.memory_space<vmem>>, vector<1x1x32xf32>
    %297 = vector.shape_cast %296 : vector<1x1x32xf32> to vector<1x32xf32>
    %c1_157 = arith.constant 1 : index
    %c0_158 = arith.constant 0 : index
    %c0_159 = arith.constant 0 : index
    %298 = vector.load %arg24[%c1_157, %c0_158, %c0_159] : memref<2x1x32xf32, #tpu.memory_space<vmem>>, vector<1x1x32xf32>
    %299 = vector.shape_cast %298 : vector<1x1x32xf32> to vector<1x32xf32>
    %cst_160 = arith.constant dense<0.000000e+00> : vector<40xf32>
    %300 = vector.multi_reduction <add>, %295, %cst_160 [1] : vector<40x32xf32> to vector<40xf32>
    %301 = vector.shape_cast %300 : vector<40xf32> to vector<40x1xf32>
    %cst_161 = arith.constant 3.200000e+01 : f32
    %302 = vector.broadcast %cst_161 : f32 to vector<40x1xf32>
    %303 = arith.divf %301, %302 : vector<40x1xf32>
    %304 = vector.broadcast %303 : vector<40x1xf32> to vector<40x32xf32>
    %305 = arith.subf %295, %304 : vector<40x32xf32>
    %306 = arith.mulf %305, %305 : vector<40x32xf32>
    %cst_162 = arith.constant dense<0.000000e+00> : vector<40xf32>
    %307 = vector.multi_reduction <add>, %306, %cst_162 [1] : vector<40x32xf32> to vector<40xf32>
    %308 = vector.shape_cast %307 : vector<40xf32> to vector<40x1xf32>
    %cst_163 = arith.constant 3.200000e+01 : f32
    %309 = vector.broadcast %cst_163 : f32 to vector<40x1xf32>
    %310 = arith.divf %308, %309 : vector<40x1xf32>
    %311 = vector.broadcast %303 : vector<40x1xf32> to vector<40x32xf32>
    %312 = arith.subf %295, %311 : vector<40x32xf32>
    %cst_164 = arith.constant 9.99999974E-6 : f32
    %313 = vector.broadcast %cst_164 : f32 to vector<40x1xf32>
    %314 = arith.addf %310, %313 : vector<40x1xf32>
    %315 = math.rsqrt %314 : vector<40x1xf32>
    %316 = vector.broadcast %315 : vector<40x1xf32> to vector<40x32xf32>
    %317 = arith.mulf %312, %316 : vector<40x32xf32>
    %318 = vector.broadcast %297 : vector<1x32xf32> to vector<40x32xf32>
    %319 = arith.mulf %317, %318 : vector<40x32xf32>
    %320 = vector.broadcast %299 : vector<1x32xf32> to vector<40x32xf32>
    %321 = arith.addf %319, %320 : vector<40x32xf32>
    %c0_165 = arith.constant 0 : index
    %c0_166 = arith.constant 0 : index
    %322 = vector.load %arg25[%c0_165, %c0_166] : memref<1x32xf32, #tpu.memory_space<vmem>>, vector<1x32xf32>
    %c0_167 = arith.constant 0 : index
    %c0_168 = arith.constant 0 : index
    %323 = vector.load %arg26[%c0_167, %c0_168] : memref<1x32xf32, #tpu.memory_space<vmem>>, vector<1x32xf32>
    %cst_169 = arith.constant dense<0.000000e+00> : vector<40xf32>
    %324 = vector.multi_reduction <add>, %321, %cst_169 [1] : vector<40x32xf32> to vector<40xf32>
    %325 = vector.shape_cast %324 : vector<40xf32> to vector<40x1xf32>
    %cst_170 = arith.constant 3.200000e+01 : f32
    %326 = vector.broadcast %cst_170 : f32 to vector<40x1xf32>
    %327 = arith.divf %325, %326 : vector<40x1xf32>
    %328 = vector.broadcast %327 : vector<40x1xf32> to vector<40x32xf32>
    %329 = arith.subf %321, %328 : vector<40x32xf32>
    %330 = arith.mulf %329, %329 : vector<40x32xf32>
    %cst_171 = arith.constant dense<0.000000e+00> : vector<40xf32>
    %331 = vector.multi_reduction <add>, %330, %cst_171 [1] : vector<40x32xf32> to vector<40xf32>
    %332 = vector.shape_cast %331 : vector<40xf32> to vector<40x1xf32>
    %cst_172 = arith.constant 3.200000e+01 : f32
    %333 = vector.broadcast %cst_172 : f32 to vector<40x1xf32>
    %334 = arith.divf %332, %333 : vector<40x1xf32>
    %335 = vector.broadcast %327 : vector<40x1xf32> to vector<40x32xf32>
    %336 = arith.subf %321, %335 : vector<40x32xf32>
    %cst_173 = arith.constant 9.99999974E-6 : f32
    %337 = vector.broadcast %cst_173 : f32 to vector<40x1xf32>
    %338 = arith.addf %334, %337 : vector<40x1xf32>
    %339 = math.rsqrt %338 : vector<40x1xf32>
    %340 = vector.broadcast %339 : vector<40x1xf32> to vector<40x32xf32>
    %341 = arith.mulf %336, %340 : vector<40x32xf32>
    %342 = vector.broadcast %322 : vector<1x32xf32> to vector<40x32xf32>
    %343 = arith.mulf %341, %342 : vector<40x32xf32>
    %344 = vector.broadcast %323 : vector<1x32xf32> to vector<40x32xf32>
    %345 = arith.addf %343, %344 : vector<40x32xf32>
    %346 = vector.extract_strided_slice %345 {offsets = [0, 0], sizes = [8, 32], strides = [1, 1]} : vector<40x32xf32> to vector<8x32xf32>
    %347 = vector.extract_strided_slice %345 {offsets = [8, 0], sizes = [8, 32], strides = [1, 1]} : vector<40x32xf32> to vector<8x32xf32>
    %348 = vector.extract_strided_slice %345 {offsets = [16, 0], sizes = [8, 32], strides = [1, 1]} : vector<40x32xf32> to vector<8x32xf32>
    %349 = vector.extract_strided_slice %345 {offsets = [24, 0], sizes = [8, 32], strides = [1, 1]} : vector<40x32xf32> to vector<8x32xf32>
    %350 = vector.extract_strided_slice %345 {offsets = [32, 0], sizes = [8, 32], strides = [1, 1]} : vector<40x32xf32> to vector<8x32xf32>
    %351 = tpu.concatenate %346, %347, %348, %349, %350 in 1 : vector<8x32xf32>, vector<8x32xf32>, vector<8x32xf32>, vector<8x32xf32>, vector<8x32xf32> -> vector<8x160xf32>
    %c0_174 = arith.constant 0 : index
    %c0_175 = arith.constant 0 : index
    %352 = vector.load %arg27[%c0_174, %c0_175] : memref<160x8xbf16, #tpu.memory_space<vmem>>, vector<160x8xbf16>
    %353 = arith.truncf %351 : vector<8x160xf32> to vector<8x160xbf16>
    %cst_176 = arith.constant dense<0.000000e+00> : vector<8x8xf32>
    %354 = tpu.matmul %353, %352, %cst_176 {dimension_numbers = #tpu.dot_dimension_numbers<[1], [0], [0], [1], [0, 0, 1, 1], [], []>} : vector<8x160xbf16>, vector<160x8xbf16>, vector<8x8xf32> -> vector<8x8xf32>
    %c0_177 = arith.constant 0 : index
    %c0_178 = arith.constant 0 : index
    %355 = vector.load %arg28[%c0_177, %c0_178] : memref<1x8xf32, #tpu.memory_space<vmem>>, vector<1x8xf32>
    %356 = vector.broadcast %355 : vector<1x8xf32> to vector<8x8xf32>
    %357 = arith.addf %354, %356 : vector<8x8xf32>
    %c0_179 = arith.constant 0 : index
    %c0_180 = arith.constant 0 : index
    %358 = vector.load %arg2[%c0_179, %c0_180] : memref<8x1xf32, #tpu.memory_space<vmem>>, vector<8x1xf32>
    %359 = vector.broadcast %358 : vector<8x1xf32> to vector<8x8xf32>
    %360 = arith.subf %357, %359 : vector<8x8xf32>
    %c0_181 = arith.constant 0 : index
    %c0_182 = arith.constant 0 : index
    %361 = vector.load %arg1[%c0_181, %c0_182] : memref<8x1xf32, #tpu.memory_space<vmem>>, vector<8x1xf32>
    %cst_183 = arith.constant 1.000000e-10 : f32
    %362 = vector.broadcast %cst_183 : f32 to vector<8x1xf32>
    %363 = arith.addf %361, %362 : vector<8x1xf32>
    %364 = vector.broadcast %363 : vector<8x1xf32> to vector<8x8xf32>
    %365 = arith.divf %360, %364 : vector<8x8xf32>
    %366 = vector.broadcast %14 : vector<8x1xf32> to vector<8x8xf32>
    %367 = arith.mulf %365, %366 : vector<8x8xf32>
    %368 = vector.broadcast %4 : vector<8x1xf32> to vector<8x8xf32>
    %369 = arith.addf %367, %368 : vector<8x8xf32>
    %c0_184 = arith.constant 0 : index
    %c0_185 = arith.constant 0 : index
    %370 = vector.load %arg29[%c0_184, %c0_185] : memref<8x8xf32, #tpu.memory_space<vmem>>, vector<8x8xf32>
    tpu.vector_store %arg29[%c0_184, %c0_185], %369 {strides = array<i32>} : memref<8x8xf32, #tpu.memory_space<vmem>>, vector<8x8xf32>,
    return
  }
}

</mosaic_0001>

<llo_original>
// kernel: forward.1
$region0: #{forward.1}
  #allocation0 [shape = 'u32[]', space=smem, size = 0x4, offset = 0x4, fixed_abs, tag = 'smem constant byte address 0x4 - core index']
  #allocation1 [shape = 'u32[72,128]{1,0:T(1,128)}', space=vmem, size = 0x9000, scoped, tag = 'internal scratch']
  %s0 = inlined_call_operand.smem [shape: u32[30], index: -1, kind: input, shape index: {}]
  %s1 = sld [smem:[%s0]]
  %s2 = scalar_lea.smem %s0, 1
  %s3 = sld [smem:[%s2]]
  %s4 = scalar_lea.smem %s0, 2
  %s5 = sld [smem:[%s4]]
  %s6 = scalar_lea.smem %s0, 3
  %s7 = sld [smem:[%s6]]
  %s8 = scalar_lea.smem %s0, 4
  %s9 = sld [smem:[%s8]]
  %s10 = scalar_lea.smem %s0, 5
  %s11 = sld [smem:[%s10]]
  %s12 = scalar_lea.smem %s0, 6
  %s13 = sld [smem:[%s12]]
  %s14 = scalar_lea.smem %s0, 7
  %s15 = sld [smem:[%s14]]
  %s16 = scalar_lea.smem %s0, 8
  %s17 = sld [smem:[%s16]]
  %s18 = scalar_lea.smem %s0, 9
  %s19 = sld [smem:[%s18]]
  %s20 = scalar_lea.smem %s0, 10
  %s21 = sld [smem:[%s20]]
  %s22 = scalar_lea.smem %s0, 11
  %s23 = sld [smem:[%s22]]
  %s24 = scalar_lea.smem %s0, 12
  %s25 = sld [smem:[%s24]]
  %s26 = scalar_lea.smem %s0, 13
  %s27 = sld [smem:[%s26]]
  %s28 = scalar_lea.smem %s0, 14
  %s29 = sld [smem:[%s28]]
  %s30 = scalar_lea.smem %s0, 15
  %s31 = sld [smem:[%s30]]
  %s32 = scalar_lea.smem %s0, 16
  %s33 = sld [smem:[%s32]]
  %s34 = scalar_lea.smem %s0, 17
  %s35 = sld [smem:[%s34]]
  %s36 = scalar_lea.smem %s0, 18
  %s37 = sld [smem:[%s36]]
  %s38 = scalar_lea.smem %s0, 19
  %s39 = sld [smem:[%s38]]
  %s40 = scalar_lea.smem %s0, 20
  %s41 = sld [smem:[%s40]]
  %s42 = scalar_lea.smem %s0, 21
  %s43 = sld [smem:[%s42]]
  %s44 = scalar_lea.smem %s0, 22
  %s45 = sld [smem:[%s44]]
  %s46 = scalar_lea.smem %s0, 23
  %s47 = sld [smem:[%s46]]
  %s48 = scalar_lea.smem %s0, 24
  %s49 = sld [smem:[%s48]]
  %s50 = scalar_lea.smem %s0, 25
  %s51 = sld [smem:[%s50]]
  %s52 = scalar_lea.smem %s0, 26
  %s53 = sld [smem:[%s52]]
  %s54 = scalar_lea.smem %s0, 27
  %s55 = sld [smem:[%s54]]
  %s56 = scalar_lea.smem %s0, 28
  %s57 = sld [smem:[%s56]]
  %s58 = scalar_lea.smem %s0, 29
  %s59 = sld [smem:[%s58]]
  %s60 = sld [smem:[#allocation0]]
  $region162: #{forward.1} parent=0
    _
  %s62 = ssub.s32 1, %s60
  %s63 = scalar_select 0, %s62, %s60
  $region1: #{forward.1} parent=0
    #allocation2 [shape = 'u8[20480]{0}', space=vmem, size = 0x5000, scoped, tag = 'input window, operand 4, single buffered']
    #allocation3 [shape = 's32[1]{0}', space=sflag, size = 0x4, scoped, tag = 'scoped memory for forward.1']
    #allocation4 [shape = 's32[1]{0}', space=sflag, size = 0x4, scoped, tag = 'scoped memory for forward.1']
    #allocation5 [shape = 'u8[81920]{0}', space=vmem, size = 0x14000, scoped, tag = 'input window, operand 5, single buffered']
    #allocation6 [shape = 's32[1]{0}', space=sflag, size = 0x4, scoped, tag = 'scoped memory for forward.1']
    #allocation7 [shape = 'u8[81920]{0}', space=vmem, size = 0x14000, scoped, tag = 'input window, operand 7, single buffered']
    #allocation8 [shape = 'u8[16384]{0}', space=vmem, size = 0x4000, scoped, tag = 'input window, operand 9, single buffered']
    #allocation9 [shape = 's32[1]{0}', space=sflag, size = 0x4, scoped, tag = 'scoped memory for forward.1']
    #allocation10 [shape = 'u8[16384]{0}', space=vmem, size = 0x4000, scoped, tag = 'input window, operand 11, single buffered']
    #allocation11 [shape = 'u8[16384]{0}', space=vmem, size = 0x4000, scoped, tag = 'input window, operand 13, single buffered']
    #allocation12 [shape = 's32[1]{0}', space=sflag, size = 0x4, scoped, tag = 'scoped memory for forward.1']
    #allocation13 [shape = 'u8[16384]{0}', space=vmem, size = 0x4000, scoped, tag = 'input window, operand 15, single buffered']
    #allocation14 [shape = 'u8[32768]{0}', space=vmem, size = 0x8000, scoped, tag = 'input window, operand 21, single buffered']
    #allocation15 [shape = 's32[1]{0}', space=sflag, size = 0x4, scoped, tag = 'scoped memory for forward.1']
    #allocation16 [shape = 'u8[40960]{0}', space=vmem, size = 0xa000, scoped, tag = 'input window, operand 27, single buffered']
    #allocation17 [shape = 'u8[4096]{0}', space=vmem, size = 0x1000, scoped, tag = 'output window, operand 0, single buffered']
    %64 = vsyncpa [#allocation3], 0
    %65 = vsyncpa [#allocation6], 0
    %66 = vsyncpa [#allocation9], 0
    %67 = vsyncpa [#allocation12], 0
    %68 = vsyncpa [#allocation15], 0
    %69 = vsyncpa [#allocation4], 0
    // Predicated region
    $region2: #{forward.1} parent=1 // pred_check
      _
    $region3: #{forward.1} parent=1 // pred_check_branch
      %71 = sbr.rel (0) target = $region5
    $region4: #{forward.1} parent=1 // pred_region
      _
    $region5: #{forward.1} parent=1 // pred_fallthru
      _
    // Predicated region
    $region6: #{forward.1} parent=1 // pred_check
      _
    $region7: #{forward.1} parent=1 // pred_check_branch
      %73 = sbr.rel (0) target = $region9
    $region8: #{forward.1} parent=1 // pred_region
      _
    $region9: #{forward.1} parent=1 // pred_fallthru
      _
    // Predicated region
    $region10: #{forward.1} parent=1 // pred_check
      _
    $region11: #{forward.1} parent=1 // pred_check_branch
      %75 = sbr.rel (0) target = $region13
    $region12: #{forward.1} parent=1 // pred_region
      _
    $region13: #{forward.1} parent=1 // pred_fallthru
      _
    // Predicated region
    $region14: #{forward.1} parent=1 // pred_check
      _
    $region15: #{forward.1} parent=1 // pred_check_branch
      %77 = sbr.rel (0) target = $region17
    $region16: #{forward.1} parent=1 // pred_region
      _
    $region17: #{forward.1} parent=1 // pred_fallthru
      _
    // Predicated region
    $region18: #{forward.1} parent=1 // pred_check
      _
    $region19: #{forward.1} parent=1 // pred_check_branch
      %79 = sbr.rel (0) target = $region21
    $region20: #{forward.1} parent=1 // pred_region
      %81 = vsyncadd [#allocation3], 0
      %s82 = sshll.u32 %s9, 4
      %s83 = int_to_ptr.hbm [resolvable:$true] %s82
      %s84 = sshll.u32 [#allocation2], 4
      %s85 = int_to_ptr.vmem [resolvable:$true] %s84
      %90 = dma.hbm_to_vmem [thread:$0]  %s83, 640, %s85, [#allocation3], 128, 128, 8
    $region21: #{forward.1} parent=1 // pred_fallthru
      _
    // Predicated region
    $region22: #{forward.1} parent=1 // pred_check
      _
    $region23: #{forward.1} parent=1 // pred_check_branch
      %92 = sbr.rel (0) target = $region25
    $region24: #{forward.1} parent=1 // pred_region
      %94 = vsyncadd [#allocation6], 0
      %s95 = sshll.u32 %s11, 4
      %s96 = int_to_ptr.hbm [resolvable:$true] %s95
      %s97 = sshll.u32 [#allocation5], 4
      %s98 = int_to_ptr.vmem [resolvable:$true] %s97
      %103 = dma.hbm_to_vmem [thread:$0]  %s96, 2560, %s98, [#allocation6], 128, 128, 8
    $region25: #{forward.1} parent=1 // pred_fallthru
      _
    // Predicated region
    $region26: #{forward.1} parent=1 // pred_check
      _
    $region27: #{forward.1} parent=1 // pred_check_branch
      %105 = sbr.rel (0) target = $region29
    $region28: #{forward.1} parent=1 // pred_region
      _
    $region29: #{forward.1} parent=1 // pred_fallthru
      _
    // Predicated region
    $region30: #{forward.1} parent=1 // pred_check
      _
    $region31: #{forward.1} parent=1 // pred_check_branch
      %107 = sbr.rel (0) target = $region33
    $region32: #{forward.1} parent=1 // pred_region
      %109 = vsyncadd [#allocation6], 0
      %s110 = sshll.u32 %s15, 4
      %s111 = int_to_ptr.hbm [resolvable:$true] %s110
      %s112 = sshll.u32 [#allocation7], 4
      %s113 = int_to_ptr.vmem [resolvable:$true] %s112
      %118 = dma.hbm_to_vmem [thread:$0]  %s111, 2560, %s113, [#allocation6], 128, 128, 8
    $region33: #{forward.1} parent=1 // pred_fallthru
      _
    // Predicated region
    $region34: #{forward.1} parent=1 // pred_check
      _
    $region35: #{forward.1} parent=1 // pred_check_branch
      %120 = sbr.rel (0) target = $region37
    $region36: #{forward.1} parent=1 // pred_region
      _
    $region37: #{forward.1} parent=1 // pred_fallthru
      _
    // Predicated region
    $region38: #{forward.1} parent=1 // pred_check
      _
    $region39: #{forward.1} parent=1 // pred_check_branch
      %122 = sbr.rel (0) target = $region41
    $region40: #{forward.1} parent=1 // pred_region
      %124 = vsyncadd [#allocation9], 0
      %s125 = sshll.u32 %s19, 4
      %s126 = int_to_ptr.hbm [resolvable:$true] %s125
      %s127 = sshll.u32 [#allocation8], 4
      %s128 = int_to_ptr.vmem [resolvable:$true] %s127
      %133 = dma.hbm_to_vmem [thread:$0]  %s126, 512, %s128, [#allocation9], 64, 64, 4
    $region41: #{forward.1} parent=1 // pred_fallthru
      _
    // Predicated region
    $region42: #{forward.1} parent=1 // pred_check
      _
    $region43: #{forward.1} parent=1 // pred_check_branch
      %135 = sbr.rel (0) target = $region45
    $region44: #{forward.1} parent=1 // pred_region
      _
    $region45: #{forward.1} parent=1 // pred_fallthru
      _
    // Predicated region
    $region46: #{forward.1} parent=1 // pred_check
      _
    $region47: #{forward.1} parent=1 // pred_check_branch
      %137 = sbr.rel (0) target = $region49
    $region48: #{forward.1} parent=1 // pred_region
      %139 = vsyncadd [#allocation9], 0
      %s140 = sshll.u32 %s23, 4
      %s141 = int_to_ptr.hbm [resolvable:$true] %s140
      %s142 = sshll.u32 [#allocation10], 4
      %s143 = int_to_ptr.vmem [resolvable:$true] %s142
      %148 = dma.hbm_to_vmem [thread:$0]  %s141, 512, %s143, [#allocation9], 64, 64, 4
    $region49: #{forward.1} parent=1 // pred_fallthru
      _
    // Predicated region
    $region50: #{forward.1} parent=1 // pred_check
      _
    $region51: #{forward.1} parent=1 // pred_check_branch
      %150 = sbr.rel (0) target = $region53
    $region52: #{forward.1} parent=1 // pred_region
      _
    $region53: #{forward.1} parent=1 // pred_fallthru
      _
    // Predicated region
    $region54: #{forward.1} parent=1 // pred_check
      _
    $region55: #{forward.1} parent=1 // pred_check_branch
      %152 = sbr.rel (0) target = $region57
    $region56: #{forward.1} parent=1 // pred_region
      %154 = vsyncadd [#allocation12], 0
      %s155 = sshll.u32 %s27, 4
      %s156 = int_to_ptr.hbm [resolvable:$true] %s155
      %s157 = sshll.u32 [#allocation11], 4
      %s158 = int_to_ptr.vmem [resolvable:$true] %s157
      %163 = dma.hbm_to_vmem [thread:$0]  %s156, 512, %s158, [#allocation12], 64, 64, 4
    $region57: #{forward.1} parent=1 // pred_fallthru
      _
    // Predicated region
    $region58: #{forward.1} parent=1 // pred_check
      _
    $region59: #{forward.1} parent=1 // pred_check_branch
      %165 = sbr.rel (0) target = $region61
    $region60: #{forward.1} parent=1 // pred_region
      _
    $region61: #{forward.1} parent=1 // pred_fallthru
      _
    // Predicated region
    $region62: #{forward.1} parent=1 // pred_check
      _
    $region63: #{forward.1} parent=1 // pred_check_branch
      %167 = sbr.rel (0) target = $region65
    $region64: #{forward.1} parent=1 // pred_region
      %169 = vsyncadd [#allocation12], 0
      %s170 = sshll.u32 %s31, 4
      %s171 = int_to_ptr.hbm [resolvable:$true] %s170
      %s172 = sshll.u32 [#allocation13], 4
      %s173 = int_to_ptr.vmem [resolvable:$true] %s172
      %178 = dma.hbm_to_vmem [thread:$0]  %s171, 512, %s173, [#allocation12], 64, 64, 4
    $region65: #{forward.1} parent=1 // pred_fallthru
      _
    // Predicated region
    $region66: #{forward.1} parent=1 // pred_check
      _
    $region67: #{forward.1} parent=1 // pred_check_branch
      %180 = sbr.rel (0) target = $region69
    $region68: #{forward.1} parent=1 // pred_region
      _
    $region69: #{forward.1} parent=1 // pred_fallthru
      _
    // Predicated region
    $region70: #{forward.1} parent=1 // pred_check
      _
    $region71: #{forward.1} parent=1 // pred_check_branch
      %182 = sbr.rel (0) target = $region73
    $region72: #{forward.1} parent=1 // pred_region
      _
    $region73: #{forward.1} parent=1 // pred_fallthru
      _
    // Predicated region
    $region74: #{forward.1} parent=1 // pred_check
      _
    $region75: #{forward.1} parent=1 // pred_check_branch
      %184 = sbr.rel (0) target = $region77
    $region76: #{forward.1} parent=1 // pred_region
      _
    $region77: #{forward.1} parent=1 // pred_fallthru
      _
    // Predicated region
    $region78: #{forward.1} parent=1 // pred_check
      _
    $region79: #{forward.1} parent=1 // pred_check_branch
      %186 = sbr.rel (0) target = $region81
    $region80: #{forward.1} parent=1 // pred_region
      _
    $region81: #{forward.1} parent=1 // pred_fallthru
      _
    // Predicated region
    $region82: #{forward.1} parent=1 // pred_check
      _
    $region83: #{forward.1} parent=1 // pred_check_branch
      %188 = sbr.rel (0) target = $region85
    $region84: #{forward.1} parent=1 // pred_region
      _
    $region85: #{forward.1} parent=1 // pred_fallthru
      _
    // Predicated region
    $region86: #{forward.1} parent=1 // pred_check
      _
    $region87: #{forward.1} parent=1 // pred_check_branch
      %190 = sbr.rel (0) target = $region89
    $region88: #{forward.1} parent=1 // pred_region
      %192 = vsyncadd [#allocation15], 0
      %s193 = sshll.u32 %s43, 4
      %s194 = int_to_ptr.hbm [resolvable:$true] %s193
      %s195 = sshll.u32 [#allocation14], 4
      %s196 = int_to_ptr.vmem [resolvable:$true] %s195
      %201 = dma.hbm_to_vmem [thread:$0]  %s194, 1024, %s196, [#allocation15], 64, 64, 4
    $region89: #{forward.1} parent=1 // pred_fallthru
      _
    // Predicated region
    $region90: #{forward.1} parent=1 // pred_check
      _
    $region91: #{forward.1} parent=1 // pred_check_branch
      %203 = sbr.rel (0) target = $region93
    $region92: #{forward.1} parent=1 // pred_region
      _
    $region93: #{forward.1} parent=1 // pred_fallthru
      _
    // Predicated region
    $region94: #{forward.1} parent=1 // pred_check
      _
    $region95: #{forward.1} parent=1 // pred_check_branch
      %205 = sbr.rel (0) target = $region97
    $region96: #{forward.1} parent=1 // pred_region
      _
    $region97: #{forward.1} parent=1 // pred_fallthru
      _
    // Predicated region
    $region98: #{forward.1} parent=1 // pred_check
      _
    $region99: #{forward.1} parent=1 // pred_check_branch
      %207 = sbr.rel (0) target = $region101
    $region100: #{forward.1} parent=1 // pred_region
      _
    $region101: #{forward.1} parent=1 // pred_fallthru
      _
    // Predicated region
    $region102: #{forward.1} parent=1 // pred_check
      _
    $region103: #{forward.1} parent=1 // pred_check_branch
      %209 = sbr.rel (0) target = $region105
    $region104: #{forward.1} parent=1 // pred_region
      _
    $region105: #{forward.1} parent=1 // pred_fallthru
      _
    // Predicated region
    $region106: #{forward.1} parent=1 // pred_check
      _
    $region107: #{forward.1} parent=1 // pred_check_branch
      %211 = sbr.rel (0) target = $region109
    $region108: #{forward.1} parent=1 // pred_region
      _
    $region109: #{forward.1} parent=1 // pred_fallthru
      _
    // Predicated region
    $region110: #{forward.1} parent=1 // pred_check
      _
    $region111: #{forward.1} parent=1 // pred_check_branch
      %213 = sbr.rel (0) target = $region113
    $region112: #{forward.1} parent=1 // pred_region
      %215 = vsyncadd [#allocation15], 0
      %s216 = sshll.u32 %s55, 4
      %s217 = int_to_ptr.hbm [resolvable:$true] %s216
      %s218 = sshll.u32 [#allocation16], 4
      %s219 = int_to_ptr.vmem [resolvable:$true] %s218
      %224 = dma.hbm_to_vmem [thread:$0]  %s217, 1280, %s219, [#allocation15], 64, 64, 4
    $region113: #{forward.1} parent=1 // pred_fallthru
      _
    // Predicated region
    $region114: #{forward.1} parent=1 // pred_check
      _
    $region115: #{forward.1} parent=1 // pred_check_branch
      %226 = sbr.rel (0) target = $region117
    $region116: #{forward.1} parent=1 // pred_region
      _
    $region117: #{forward.1} parent=1 // pred_fallthru
      _
    // Predicated region
    $region118: #{forward.1} parent=1 // pred_check
      _
    $region119: #{forward.1} parent=1 // pred_check_branch
      %228 = sbr.rel (0) target = $region121
    $region120: #{forward.1} parent=1 // pred_region
      %230 = dma.done [#allocation3], 640
    $region121: #{forward.1} parent=1 // pred_fallthru
      _
    // Predicated region
    $region122: #{forward.1} parent=1 // pred_check
      _
    $region123: #{forward.1} parent=1 // pred_check_branch
      %232 = sbr.rel (0) target = $region125
    $region124: #{forward.1} parent=1 // pred_region
      %234 = dma.done [#allocation6], 2560
    $region125: #{forward.1} parent=1 // pred_fallthru
      _
    // Predicated region
    $region126: #{forward.1} parent=1 // pred_check
      _
    $region127: #{forward.1} parent=1 // pred_check_branch
      %236 = sbr.rel (0) target = $region129
    $region128: #{forward.1} parent=1 // pred_region
      %238 = dma.done [#allocation6], 2560
    $region129: #{forward.1} parent=1 // pred_fallthru
      _
    // Predicated region
    $region130: #{forward.1} parent=1 // pred_check
      _
    $region131: #{forward.1} parent=1 // pred_check_branch
      %240 = sbr.rel (0) target = $region133
    $region132: #{forward.1} parent=1 // pred_region
      %242 = dma.done [#allocation9], 512
    $region133: #{forward.1} parent=1 // pred_fallthru
      _
    // Predicated region
    $region134: #{forward.1} parent=1 // pred_check
      _
    $region135: #{forward.1} parent=1 // pred_check_branch
      %244 = sbr.rel (0) target = $region137
    $region136: #{forward.1} parent=1 // pred_region
      %246 = dma.done [#allocation9], 512
    $region137: #{forward.1} parent=1 // pred_fallthru
      _
    // Predicated region
    $region138: #{forward.1} parent=1 // pred_check
      _
    $region139: #{forward.1} parent=1 // pred_check_branch
      %248 = sbr.rel (0) target = $region141
    $region140: #{forward.1} parent=1 // pred_region
      %250 = dma.done [#allocation12], 512
    $region141: #{forward.1} parent=1 // pred_fallthru
      _
    // Predicated region
    $region142: #{forward.1} parent=1 // pred_check
      _
    $region143: #{forward.1} parent=1 // pred_check_branch
      %252 = sbr.rel (0) target = $region145
    $region144: #{forward.1} parent=1 // pred_region
      %254 = dma.done [#allocation12], 512
    $region145: #{forward.1} parent=1 // pred_fallthru
      _
    // Predicated region
    $region146: #{forward.1} parent=1 // pred_check
      _
    $region147: #{forward.1} parent=1 // pred_check_branch
      %256 = sbr.rel (0) target = $region149
    $region148: #{forward.1} parent=1 // pred_region
      %258 = dma.done [#allocation15], 1024
    $region149: #{forward.1} parent=1 // pred_fallthru
      _
    // Predicated region
    $region150: #{forward.1} parent=1 // pred_check
      _
    $region151: #{forward.1} parent=1 // pred_check_branch
      %260 = sbr.rel (0) target = $region153
    $region152: #{forward.1} parent=1 // pred_region
      %262 = dma.done [#allocation15], 1280
    $region153: #{forward.1} parent=1 // pred_fallthru
      _
    %v264 = vld [vmem:[%s1] sm:$0xff]
    %vm265 = vcmask 130048
    %v266 = vsel %vm265, %v264, 0.0
    %267 = vadd.xlane.f32.xlu0 %v266
    %v268 = vpop.xlane.xlu0 %267
    %v269 = vrcp.pop 16.0
    %v270 = vmul.f32 16.0, %v269
    %v271 = vsub.f32 1.0, %v270
    %v272 = vmul.f32 %v269, %v271
    %v273 = vadd.f32 %v269, %v272
    %vm274 = vweird.f32 %v269
    %v275 = vsel %vm274, %v269, %v273
    %v276 = vmul.f32 %v268, %v275
    %v277 = vsub.f32 %v264, %v276
    %v278 = vmul.f32 %v277, %v277
    %v279 = vsel %vm265, %v278, 0.0
    %280 = vadd.xlane.f32.xlu0 %v279
    %v281 = vpop.xlane.xlu0 %280
    %v282 = vmul.f32 %v281, %v275
    %v283 = vadd.f32 %v282, 1e-05
    %v284 = vrsqrt.pop %v283
    %v285 = vmul.f32 %v284, %v283
    %v286 = vmul.f32 %v285, %v284
    %v287 = vmul.f32 0.5, %v286
    %v288 = vsub.f32 1.5, %v287
    %v289 = vmul.f32 %v284, %v288
    %v290 = vmul.f32 %v283, %v289
    %vm291 = vcmp.eq.f32.partialorder %v283, inf
    %v292 = vsel %vm291, %v283, %v290
    %vm293 = vcmp.eq.f32.partialorder %v283, 0.0
    %v294 = vand.u32 %v283, 2147483648
    %v295 = vsel %vm293, %v294, %v292
    %v296 = vrcp.pop %v295
    %v297 = vmul.f32 %v295, %v296
    %v298 = vsub.f32 1.0, %v297
    %v299 = vmul.f32 %v296, %v298
    %v300 = vadd.f32 %v296, %v299
    %vm301 = vweird.f32 %v295
    %vm302 = vweird.f32 %v296
    %vm303 = vmor %vm301, %vm302
    %v304 = vsel %vm303, %v296, %v300
    %v305 = vand.u32 2147483647, %v295
    %vm306 = vcmp.eq.f32.partialorder %v305, 8.507059e+37
    %v307 = vand.u32 %v295, 2147483648
    %v308 = vor.u32 1.1754944e-38, %v307
    %v309 = vsel %vm306, %v308, %v304
    %v310 = vmul.f32 %v277, %v309
    %v311 = vld [vmem:[%s3] sm:$0xff]
    %313 = vset.pattern.permute.xlu0 0
    %314 = vperm.xlu0 %313, %v311
    %v315 = vpop.permute.xlu0 %314
    %v317 = vmul.f32 %v310, %v315
    %v318 = vld [vmem:[%s5] sm:$0xff]
    %320 = vset.pattern.permute.xlu0 0
    %321 = vperm.xlu0 %320, %v318
    %v322 = vpop.permute.xlu0 %321
    %v324 = vadd.f32 %v317, %v322
    %326 = vset.pattern.permute.xlu0 15
    %327 = vperm.xlu0 %326, %v324
    %v328 = vpop.permute.xlu0 %327
    %v330 = vsel %vm265, %v324, %v328
    %332 = vrot.lane.b32.xlu0 %v330, 124
    %v333 = vpop.permute.xlu0 %332
    %335 = vrot.lane.b32.xlu0 %v330, 120
    %v336 = vpop.permute.xlu0 %335
    %338 = vrot.lane.b32.xlu0 %v330, 116
    %v339 = vpop.permute.xlu0 %338
    %341 = vrot.lane.b32.xlu0 %v330, 112
    %v342 = vpop.permute.xlu0 %341
    %v344 = vld [vmem:[%s7] sm:$0x3]
    %v345 = vpack.c.bf16 %v333, %v330
    %v346 = vpack.c.bf16 %v339, %v336
    %v347 = vpack.c.bf16 %v342, %v342
    %v348 = vld [vmem:[#allocation2] sm:$0xff]
    %v349 = vld [vmem:[#allocation2 + $0x8] sm:$0xff]
    %v350 = vld [vmem:[#allocation2 + $0x10] sm:$0xff]
    %v351 = vld [vmem:[#allocation2 + $0x18] sm:$0xff]
    %v352 = vld [vmem:[#allocation2 + $0x20] sm:$0xff]
    %vm353 = vcmask 31744
    %v355 = vsel %vm353, %v345, 0
    %v358 = vsel %vm353, %v346, 0
    %v361 = vsel %vm353, %v347, 0
    %vm363 = vcmask 1041408
    %v365 = vsel %vm363, %v344, 0
    %367 = vmatpush.bf16.msra.mxu0 0
    %368 = vmatpush.bf16.msra.mxu0 0
    %369 = vmatpush.bf16.msra.mxu0 0
    %370 = vmatpush.bf16.msra.mxu0 0
    %371 = vmatpush.bf16.msra.mxu0 0
    %372 = vmatpush.bf16.msra.mxu0 0
    %373 = vmatpush.bf16.msra.mxu0 0
    %374 = vmatpush.bf16.msra.mxu0 %v365
    %375 = vmatmul.bf16.gmra.mxu0 %v355
    %v376 = vpop.f32.mrf.mxu0
    %v377 = vadd.f32 %v348, %v376
    %v378 = vpop.f32.mrf.mxu0
    %v379 = vadd.f32 %v349, %v378
    %380 = vmatmul.bf16.gmra.mxu0 %v358
    %v381 = vpop.f32.mrf.mxu0
    %v382 = vadd.f32 %v350, %v381
    %v383 = vpop.f32.mrf.mxu0
    %v384 = vadd.f32 %v351, %v383
    %385 = vmatmul.bf16.gmra.mxu0 %v361
    %v386 = vpop.f32.mrf.mxu0
    %v387 = vadd.f32 %v352, %v386
    %v388 = vpop.f32.mrf.mxu0
    %389 = vdwg.mxu0
    %v390 = vld [vmem:[#allocation5] sm:$0xff]
    %v391 = vld [vmem:[#allocation5 + $0x8] sm:$0xff]
    %v392 = vld [vmem:[#allocation5 + $0x10] sm:$0xff]
    %v393 = vld [vmem:[#allocation5 + $0x18] sm:$0xff]
    %v394 = vld [vmem:[#allocation5 + $0x20] sm:$0xff]
    %v395 = vld [vmem:[#allocation5 + $0x28] sm:$0xff]
    %v396 = vld [vmem:[#allocation5 + $0x30] sm:$0xff]
    %v397 = vld [vmem:[#allocation5 + $0x38] sm:$0xff]
    %v398 = vld [vmem:[#allocation5 + $0x40] sm:$0xff]
    %v399 = vld [vmem:[#allocation5 + $0x48] sm:$0xff]
    %v400 = vld [vmem:[#allocation5 + $0x50] sm:$0xff]
    %v401 = vld [vmem:[#allocation5 + $0x58] sm:$0xff]
    %v402 = vld [vmem:[#allocation5 + $0x60] sm:$0xff]
    %v403 = vld [vmem:[#allocation5 + $0x68] sm:$0xff]
    %v404 = vld [vmem:[#allocation5 + $0x70] sm:$0xff]
    %v405 = vld [vmem:[#allocation5 + $0x78] sm:$0xff]
    %v406 = vld [vmem:[#allocation5 + $0x80] sm:$0xff]
    %v407 = vld [vmem:[#allocation5 + $0x88] sm:$0xff]
    %v408 = vld [vmem:[#allocation5 + $0x90] sm:$0xff]
    %v409 = vld [vmem:[#allocation5 + $0x98] sm:$0xff]
    %v410 = vld [vmem:[%s13] sm:$0x1]
    %412 = vset.pattern.permute.xlu0 0
    %413 = vperm.xlu0 %412, %v390
    %v414 = vpop.permute.xlu0 %413
    %417 = vset.pattern.permute.xlu0 0
    %418 = vperm.xlu0 %417, %v391
    %v419 = vpop.permute.xlu0 %418
    %422 = vset.pattern.permute.xlu0 0
    %423 = vperm.xlu0 %422, %v392
    %v424 = vpop.permute.xlu0 %423
    %427 = vset.pattern.permute.xlu0 0
    %428 = vperm.xlu0 %427, %v393
    %v429 = vpop.permute.xlu0 %428
    %432 = vset.pattern.permute.xlu0 0
    %433 = vperm.xlu0 %432, %v394
    %v434 = vpop.permute.xlu0 %433
    %437 = vset.pattern.permute.xlu0 0
    %438 = vperm.xlu0 %437, %v395
    %v439 = vpop.permute.xlu0 %438
    %442 = vset.pattern.permute.xlu0 0
    %443 = vperm.xlu0 %442, %v396
    %v444 = vpop.permute.xlu0 %443
    %447 = vset.pattern.permute.xlu0 0
    %448 = vperm.xlu0 %447, %v397
    %v449 = vpop.permute.xlu0 %448
    %452 = vset.pattern.permute.xlu0 0
    %453 = vperm.xlu0 %452, %v398
    %v454 = vpop.permute.xlu0 %453
    %457 = vset.pattern.permute.xlu0 0
    %458 = vperm.xlu0 %457, %v399
    %v459 = vpop.permute.xlu0 %458
    %462 = vset.pattern.permute.xlu0 0
    %463 = vperm.xlu0 %462, %v400
    %v464 = vpop.permute.xlu0 %463
    %467 = vset.pattern.permute.xlu0 0
    %468 = vperm.xlu0 %467, %v401
    %v469 = vpop.permute.xlu0 %468
    %472 = vset.pattern.permute.xlu0 0
    %473 = vperm.xlu0 %472, %v402
    %v474 = vpop.permute.xlu0 %473
    %477 = vset.pattern.permute.xlu0 0
    %478 = vperm.xlu0 %477, %v403
    %v479 = vpop.permute.xlu0 %478
    %482 = vset.pattern.permute.xlu0 0
    %483 = vperm.xlu0 %482, %v404
    %v484 = vpop.permute.xlu0 %483
    %487 = vset.pattern.permute.xlu0 0
    %488 = vperm.xlu0 %487, %v405
    %v489 = vpop.permute.xlu0 %488
    %492 = vset.pattern.permute.xlu0 0
    %493 = vperm.xlu0 %492, %v406
    %v494 = vpop.permute.xlu0 %493
    %497 = vset.pattern.permute.xlu0 0
    %498 = vperm.xlu0 %497, %v407
    %v499 = vpop.permute.xlu0 %498
    %502 = vset.pattern.permute.xlu0 0
    %503 = vperm.xlu0 %502, %v408
    %v504 = vpop.permute.xlu0 %503
    %507 = vset.pattern.permute.xlu0 0
    %508 = vperm.xlu0 %507, %v409
    %v509 = vpop.permute.xlu0 %508
    %v512 = vperm.slane %v410, 0
    %vm514 = vcmp.eq.f32.partialorder %v414, %v512
    %vm515 = vcmp.eq.f32.partialorder %v419, %v512
    %vm516 = vcmp.eq.f32.partialorder %v424, %v512
    %vm517 = vcmp.eq.f32.partialorder %v429, %v512
    %vm518 = vcmp.eq.f32.partialorder %v434, %v512
    %vm519 = vcmp.eq.f32.partialorder %v439, %v512
    %vm520 = vcmp.eq.f32.partialorder %v444, %v512
    %vm521 = vcmp.eq.f32.partialorder %v449, %v512
    %vm522 = vcmp.eq.f32.partialorder %v454, %v512
    %vm523 = vcmp.eq.f32.partialorder %v459, %v512
    %vm524 = vcmp.eq.f32.partialorder %v464, %v512
    %vm525 = vcmp.eq.f32.partialorder %v469, %v512
    %vm526 = vcmp.eq.f32.partialorder %v474, %v512
    %vm527 = vcmp.eq.f32.partialorder %v479, %v512
    %vm528 = vcmp.eq.f32.partialorder %v484, %v512
    %vm529 = vcmp.eq.f32.partialorder %v489, %v512
    %vm530 = vcmp.eq.f32.partialorder %v494, %v512
    %vm531 = vcmp.eq.f32.partialorder %v499, %v512
    %vm532 = vcmp.eq.f32.partialorder %v504, %v512
    %vm533 = vcmp.eq.f32.partialorder %v509, %v512
    %v534 = vsel %vm514, 0.0, -1e+30
    %v535 = vsel %vm515, 0.0, -1e+30
    %v536 = vsel %vm516, 0.0, -1e+30
    %v537 = vsel %vm517, 0.0, -1e+30
    %v538 = vsel %vm518, 0.0, -1e+30
    %v539 = vsel %vm519, 0.0, -1e+30
    %v540 = vsel %vm520, 0.0, -1e+30
    %v541 = vsel %vm521, 0.0, -1e+30
    %v542 = vsel %vm522, 0.0, -1e+30
    %v543 = vsel %vm523, 0.0, -1e+30
    %v544 = vsel %vm524, 0.0, -1e+30
    %v545 = vsel %vm525, 0.0, -1e+30
    %v546 = vsel %vm526, 0.0, -1e+30
    %v547 = vsel %vm527, 0.0, -1e+30
    %v548 = vsel %vm528, 0.0, -1e+30
    %v549 = vsel %vm529, 0.0, -1e+30
    %v550 = vsel %vm530, 0.0, -1e+30
    %v551 = vsel %vm531, 0.0, -1e+30
    %v552 = vsel %vm532, 0.0, -1e+30
    %v553 = vsel %vm533, 0.0, -1e+30
    %v554 = vld [vmem:[#allocation7] sm:$0xff]
    %v555 = vld [vmem:[#allocation7 + $0x8] sm:$0xff]
    %v556 = vld [vmem:[#allocation7 + $0x10] sm:$0xff]
    %v557 = vld [vmem:[#allocation7 + $0x18] sm:$0xff]
    %v558 = vld [vmem:[#allocation7 + $0x20] sm:$0xff]
    %v559 = vld [vmem:[#allocation7 + $0x28] sm:$0xff]
    %v560 = vld [vmem:[#allocation7 + $0x30] sm:$0xff]
    %v561 = vld [vmem:[#allocation7 + $0x38] sm:$0xff]
    %v562 = vld [vmem:[#allocation7 + $0x40] sm:$0xff]
    %v563 = vld [vmem:[#allocation7 + $0x48] sm:$0xff]
    %v564 = vld [vmem:[#allocation7 + $0x50] sm:$0xff]
    %v565 = vld [vmem:[#allocation7 + $0x58] sm:$0xff]
    %v566 = vld [vmem:[#allocation7 + $0x60] sm:$0xff]
    %v567 = vld [vmem:[#allocation7 + $0x68] sm:$0xff]
    %v568 = vld [vmem:[#allocation7 + $0x70] sm:$0xff]
    %v569 = vld [vmem:[#allocation7 + $0x78] sm:$0xff]
    %v570 = vld [vmem:[#allocation7 + $0x80] sm:$0xff]
    %v571 = vld [vmem:[#allocation7 + $0x88] sm:$0xff]
    %v572 = vld [vmem:[#allocation7 + $0x90] sm:$0xff]
    %v573 = vld [vmem:[#allocation7 + $0x98] sm:$0xff]
    %v574 = vld [vmem:[%s17] sm:$0x1]
    %576 = vset.pattern.permute.xlu0 0
    %577 = vperm.xlu0 %576, %v554
    %v578 = vpop.permute.xlu0 %577
    %581 = vset.pattern.permute.xlu0 0
    %582 = vperm.xlu0 %581, %v555
    %v583 = vpop.permute.xlu0 %582
    %586 = vset.pattern.permute.xlu0 0
    %587 = vperm.xlu0 %586, %v556
    %v588 = vpop.permute.xlu0 %587
    %591 = vset.pattern.permute.xlu0 0
    %592 = vperm.xlu0 %591, %v557
    %v593 = vpop.permute.xlu0 %592
    %596 = vset.pattern.permute.xlu0 0
    %597 = vperm.xlu0 %596, %v558
    %v598 = vpop.permute.xlu0 %597
    %601 = vset.pattern.permute.xlu0 0
    %602 = vperm.xlu0 %601, %v559
    %v603 = vpop.permute.xlu0 %602
    %606 = vset.pattern.permute.xlu0 0
    %607 = vperm.xlu0 %606, %v560
    %v608 = vpop.permute.xlu0 %607
    %611 = vset.pattern.permute.xlu0 0
    %612 = vperm.xlu0 %611, %v561
    %v613 = vpop.permute.xlu0 %612
    %616 = vset.pattern.permute.xlu0 0
    %617 = vperm.xlu0 %616, %v562
    %v618 = vpop.permute.xlu0 %617
    %621 = vset.pattern.permute.xlu0 0
    %622 = vperm.xlu0 %621, %v563
    %v623 = vpop.permute.xlu0 %622
    %626 = vset.pattern.permute.xlu0 0
    %627 = vperm.xlu0 %626, %v564
    %v628 = vpop.permute.xlu0 %627
    %631 = vset.pattern.permute.xlu0 0
    %632 = vperm.xlu0 %631, %v565
    %v633 = vpop.permute.xlu0 %632
    %636 = vset.pattern.permute.xlu0 0
    %637 = vperm.xlu0 %636, %v566
    %v638 = vpop.permute.xlu0 %637
    %641 = vset.pattern.permute.xlu0 0
    %642 = vperm.xlu0 %641, %v567
    %v643 = vpop.permute.xlu0 %642
    %646 = vset.pattern.permute.xlu0 0
    %647 = vperm.xlu0 %646, %v568
    %v648 = vpop.permute.xlu0 %647
    %651 = vset.pattern.permute.xlu0 0
    %652 = vperm.xlu0 %651, %v569
    %v653 = vpop.permute.xlu0 %652
    %656 = vset.pattern.permute.xlu0 0
    %657 = vperm.xlu0 %656, %v570
    %v658 = vpop.permute.xlu0 %657
    %661 = vset.pattern.permute.xlu0 0
    %662 = vperm.xlu0 %661, %v571
    %v663 = vpop.permute.xlu0 %662
    %666 = vset.pattern.permute.xlu0 0
    %667 = vperm.xlu0 %666, %v572
    %v668 = vpop.permute.xlu0 %667
    %671 = vset.pattern.permute.xlu0 0
    %672 = vperm.xlu0 %671, %v573
    %v673 = vpop.permute.xlu0 %672
    %v676 = vperm.slane %v574, 0
    %vm678 = vcmp.eq.f32.partialorder %v578, %v676
    %vm679 = vcmp.eq.f32.partialorder %v583, %v676
    %vm680 = vcmp.eq.f32.partialorder %v588, %v676
    %vm681 = vcmp.eq.f32.partialorder %v593, %v676
    %vm682 = vcmp.eq.f32.partialorder %v598, %v676
    %vm683 = vcmp.eq.f32.partialorder %v603, %v676
    %vm684 = vcmp.eq.f32.partialorder %v608, %v676
    %vm685 = vcmp.eq.f32.partialorder %v613, %v676
    %vm686 = vcmp.eq.f32.partialorder %v618, %v676
    %vm687 = vcmp.eq.f32.partialorder %v623, %v676
    %vm688 = vcmp.eq.f32.partialorder %v628, %v676
    %vm689 = vcmp.eq.f32.partialorder %v633, %v676
    %vm690 = vcmp.eq.f32.partialorder %v638, %v676
    %vm691 = vcmp.eq.f32.partialorder %v643, %v676
    %vm692 = vcmp.eq.f32.partialorder %v648, %v676
    %vm693 = vcmp.eq.f32.partialorder %v653, %v676
    %vm694 = vcmp.eq.f32.partialorder %v658, %v676
    %vm695 = vcmp.eq.f32.partialorder %v663, %v676
    %vm696 = vcmp.eq.f32.partialorder %v668, %v676
    %vm697 = vcmp.eq.f32.partialorder %v673, %v676
    %v698 = vsel %vm678, 1.0, 0.0
    %v699 = vsel %vm679, 1.0, 0.0
    %v700 = vsel %vm680, 1.0, 0.0
    %v701 = vsel %vm681, 1.0, 0.0
    %v702 = vsel %vm682, 1.0, 0.0
    %v703 = vsel %vm683, 1.0, 0.0
    %v704 = vsel %vm684, 1.0, 0.0
    %v705 = vsel %vm685, 1.0, 0.0
    %v706 = vsel %vm686, 1.0, 0.0
    %v707 = vsel %vm687, 1.0, 0.0
    %v708 = vsel %vm688, 1.0, 0.0
    %v709 = vsel %vm689, 1.0, 0.0
    %v710 = vsel %vm690, 1.0, 0.0
    %v711 = vsel %vm691, 1.0, 0.0
    %v712 = vsel %vm692, 1.0, 0.0
    %v713 = vsel %vm693, 1.0, 0.0
    %v714 = vsel %vm694, 1.0, 0.0
    %v715 = vsel %vm695, 1.0, 0.0
    %v716 = vsel %vm696, 1.0, 0.0
    %v717 = vsel %vm697, 1.0, 0.0
    %v718 = vld [vmem:[#allocation8] sm:$0xf]
    %v719 = vld [vmem:[#allocation8 + $0x4] sm:$0xf]
    %v720 = vld [vmem:[#allocation8 + $0x8] sm:$0xf]
    %v721 = vld [vmem:[#allocation8 + $0xc] sm:$0xf]
    %v722 = vpack.c.bf16 %v379, %v377
    %v723 = vpack.c.bf16 %v384, %v382
    %v724 = vpack.c.bf16 %v387, %v387
    %v725 = vld [vmem:[%s21] sm:$0x1]
    %v727 = vperm.slane %v725, 0
    %v733 = vunpack.c.l.b16 %v718
    %v734 = vunpack.c.l.b16 %v719
    %v735 = vunpack.c.l.b16 %v720
    %v736 = vunpack.c.l.b16 %v721
    %v737 = vpack.c.b16 %v734, %v733
    %v738 = vpack.c.b16 %v736, %v735
    %vm741 = vcmask 261120
    %v743 = vsel %vm741, %v722, 0
    %v746 = vsel %vm741, %v723, 0
    %v749 = vsel %vm741, %v724, 0
    %751 = vmatpush.bf16.msra.mxu0 0
    %752 = vmatpush.bf16.msra.mxu0 0
    %753 = vmatpush.bf16.msra.mxu0 0
    %754 = vmatpush.bf16.msra.mxu0 0
    %755 = vmatpush.bf16.msra.mxu0 0
    %756 = vmatpush.bf16.msra.mxu0 0
    %757 = vmatpush.bf16.msra.mxu0 %v738
    %758 = vmatpush.bf16.msra.mxu0 %v737
    %759 = vmatmul.bf16.gmra.mxu0 %v743
    %v760 = vpop.f32.mrf.mxu0
    %v761 = vadd.f32 %v727, %v760
    %v762 = vpop.f32.mrf.mxu0
    %v763 = vadd.f32 %v727, %v762
    %764 = vmatmul.bf16.gmra.mxu0 %v746
    %v765 = vpop.f32.mrf.mxu0
    %v766 = vadd.f32 %v727, %v765
    %v767 = vpop.f32.mrf.mxu0
    %v768 = vadd.f32 %v727, %v767
    %769 = vmatmul.bf16.gmra.mxu0 %v749
    %v770 = vpop.f32.mrf.mxu0
    %v771 = vadd.f32 %v727, %v770
    %v772 = vpop.f32.mrf.mxu0
    %773 = vdwg.mxu0
    %v774 = vld [vmem:[#allocation10] sm:$0xf]
    %v775 = vld [vmem:[#allocation10 + $0x4] sm:$0xf]
    %v776 = vld [vmem:[#allocation10 + $0x8] sm:$0xf]
    %v777 = vld [vmem:[#allocation10 + $0xc] sm:$0xf]
    %v778 = vld [vmem:[%s25] sm:$0x1]
    %v780 = vperm.slane %v778, 0
    %v786 = vunpack.c.l.b16 %v774
    %v787 = vunpack.c.l.b16 %v775
    %v788 = vunpack.c.l.b16 %v776
    %v789 = vunpack.c.l.b16 %v777
    %v790 = vpack.c.b16 %v787, %v786
    %v791 = vpack.c.b16 %v789, %v788
    %794 = vmatpush.bf16.msra.mxu0 0
    %795 = vmatpush.bf16.msra.mxu0 0
    %796 = vmatpush.bf16.msra.mxu0 0
    %797 = vmatpush.bf16.msra.mxu0 0
    %798 = vmatpush.bf16.msra.mxu0 0
    %799 = vmatpush.bf16.msra.mxu0 0
    %800 = vmatpush.bf16.msra.mxu0 %v791
    %801 = vmatpush.bf16.msra.mxu0 %v790
    %802 = vmatmul.bf16.gmra.mxu0 %v743
    %v803 = vpop.f32.mrf.mxu0
    %v804 = vadd.f32 %v780, %v803
    %v805 = vpop.f32.mrf.mxu0
    %v806 = vadd.f32 %v780, %v805
    %807 = vmatmul.bf16.gmra.mxu0 %v746
    %v808 = vpop.f32.mrf.mxu0
    %v809 = vadd.f32 %v780, %v808
    %v810 = vpop.f32.mrf.mxu0
    %v811 = vadd.f32 %v780, %v810
    %812 = vmatmul.bf16.gmra.mxu0 %v749
    %v813 = vpop.f32.mrf.mxu0
    %v814 = vadd.f32 %v780, %v813
    %v815 = vpop.f32.mrf.mxu0
    %816 = vdwg.mxu0
    %v817 = vld [vmem:[#allocation11] sm:$0xf]
    %v818 = vld [vmem:[#allocation11 + $0x4] sm:$0xf]
    %v819 = vld [vmem:[#allocation11 + $0x8] sm:$0xf]
    %v820 = vld [vmem:[#allocation11 + $0xc] sm:$0xf]
    %v821 = vld [vmem:[%s29] sm:$0x1]
    %v823 = vperm.slane %v821, 0
    %v829 = vunpack.c.l.b16 %v817
    %v830 = vunpack.c.l.b16 %v818
    %v831 = vunpack.c.l.b16 %v819
    %v832 = vunpack.c.l.b16 %v820
    %v833 = vpack.c.b16 %v830, %v829
    %v834 = vpack.c.b16 %v832, %v831
    %837 = vmatpush.bf16.msra.mxu0 0
    %838 = vmatpush.bf16.msra.mxu0 0
    %839 = vmatpush.bf16.msra.mxu0 0
    %840 = vmatpush.bf16.msra.mxu0 0
    %841 = vmatpush.bf16.msra.mxu0 0
    %842 = vmatpush.bf16.msra.mxu0 0
    %843 = vmatpush.bf16.msra.mxu0 %v834
    %844 = vmatpush.bf16.msra.mxu0 %v833
    %845 = vmatmul.bf16.gmra.mxu0 %v743
    %v846 = vpop.f32.mrf.mxu0
    %v847 = vadd.f32 %v823, %v846
    %v848 = vpop.f32.mrf.mxu0
    %v849 = vadd.f32 %v823, %v848
    %850 = vmatmul.bf16.gmra.mxu0 %v746
    %v851 = vpop.f32.mrf.mxu0
    %v852 = vadd.f32 %v823, %v851
    %v853 = vpop.f32.mrf.mxu0
    %v854 = vadd.f32 %v823, %v853
    %855 = vmatmul.bf16.gmra.mxu0 %v749
    %v856 = vpop.f32.mrf.mxu0
    %v857 = vadd.f32 %v823, %v856
    %v858 = vpop.f32.mrf.mxu0
    %859 = vdwg.mxu0
    %v860 = vmul.f32 %v761, %v698
    %v861 = vmul.f32 %v763, %v699
    %v862 = vmul.f32 %v766, %v700
    %v863 = vmul.f32 %v768, %v701
    %v864 = vmul.f32 %v771, %v702
    %v865 = vmul.f32 %v761, %v703
    %v866 = vmul.f32 %v763, %v704
    %v867 = vmul.f32 %v766, %v705
    %v868 = vmul.f32 %v768, %v706
    %v869 = vmul.f32 %v771, %v707
    %v870 = vmul.f32 %v761, %v708
    %v871 = vmul.f32 %v763, %v709
    %v872 = vmul.f32 %v766, %v710
    %v873 = vmul.f32 %v768, %v711
    %v874 = vmul.f32 %v771, %v712
    %v875 = vmul.f32 %v761, %v713
    %v876 = vmul.f32 %v763, %v714
    %v877 = vmul.f32 %v766, %v715
    %v878 = vmul.f32 %v768, %v716
    %v879 = vmul.f32 %v771, %v717
    %v880 = vpack.c.bf16 %v861, %v860
    %v881 = vpack.c.bf16 %v863, %v862
    %v882 = vpack.c.bf16 %v865, %v864
    %v883 = vpack.c.bf16 %v867, %v866
    %v884 = vpack.c.bf16 %v869, %v868
    %v885 = vpack.c.bf16 %v871, %v870
    %v886 = vpack.c.bf16 %v873, %v872
    %v887 = vpack.c.bf16 %v875, %v874
    %v888 = vpack.c.bf16 %v877, %v876
    %v889 = vpack.c.bf16 %v879, %v878
    %v890 = vpack.c.bf16 %v806, %v804
    %v891 = vpack.c.bf16 %v811, %v809
    %v892 = vpack.c.bf16 %v814, %v814
    %v894 = vsel %vm741, %v880, 0
    %v897 = vsel %vm741, %v881, 0
    %v900 = vsel %vm741, %v882, 0
    %v903 = vsel %vm741, %v883, 0
    %v906 = vsel %vm741, %v884, 0
    %v909 = vsel %vm741, %v885, 0
    %v912 = vsel %vm741, %v886, 0
    %v915 = vsel %vm741, %v887, 0
    %v918 = vsel %vm741, %v888, 0
    %v921 = vsel %vm741, %v889, 0
    %v924 = vsel %vm741, %v890, 0
    %v927 = vsel %vm741, %v891, 0
    %v930 = vsel %vm741, %v892, 0
    %932 = vmatpush.bf16.xpose.msra.mxu0 0
    %933 = vmatpush.bf16.xpose.msra.mxu0 0
    %934 = vmatpush.bf16.xpose.msra.mxu0 0
    %935 = vmatpush.bf16.xpose.msra.mxu0 0
    %936 = vmatpush.bf16.xpose.msra.mxu0 0
    %937 = vmatpush.bf16.xpose.msra.mxu0 %v930
    %938 = vmatpush.bf16.xpose.msra.mxu0 %v927
    %939 = vmatpush.bf16.xpose.msra.mxu0 %v924
    %940 = vmatmul.bf16.gmra.mxu0 %v894
    %v941 = vpop.f32.mrf.mxu0
    %v942 = vadd.f32 0.0, %v941
    %v943 = vpop.f32.mrf.mxu0
    %v944 = vadd.f32 0.0, %v943
    %945 = vmatmul.bf16.gmra.mxu0 %v897
    %v946 = vpop.f32.mrf.mxu0
    %v947 = vadd.f32 0.0, %v946
    %v948 = vpop.f32.mrf.mxu0
    %v949 = vadd.f32 0.0, %v948
    %950 = vmatmul.bf16.gmra.mxu0 %v900
    %v951 = vpop.f32.mrf.mxu0
    %v952 = vadd.f32 0.0, %v951
    %v953 = vpop.f32.mrf.mxu0
    %v954 = vadd.f32 0.0, %v953
    %955 = vmatmul.bf16.gmra.mxu0 %v903
    %v956 = vpop.f32.mrf.mxu0
    %v957 = vadd.f32 0.0, %v956
    %v958 = vpop.f32.mrf.mxu0
    %v959 = vadd.f32 0.0, %v958
    %960 = vmatmul.bf16.gmra.mxu0 %v906
    %v961 = vpop.f32.mrf.mxu0
    %v962 = vadd.f32 0.0, %v961
    %v963 = vpop.f32.mrf.mxu0
    %v964 = vadd.f32 0.0, %v963
    %965 = vmatmul.bf16.gmra.mxu0 %v909
    %v966 = vpop.f32.mrf.mxu0
    %v967 = vadd.f32 0.0, %v966
    %v968 = vpop.f32.mrf.mxu0
    %v969 = vadd.f32 0.0, %v968
    %970 = vmatmul.bf16.gmra.mxu0 %v912
    %v971 = vpop.f32.mrf.mxu0
    %v972 = vadd.f32 0.0, %v971
    %v973 = vpop.f32.mrf.mxu0
    %v974 = vadd.f32 0.0, %v973
    %975 = vmatmul.bf16.gmra.mxu0 %v915
    %v976 = vpop.f32.mrf.mxu0
    %v977 = vadd.f32 0.0, %v976
    %v978 = vpop.f32.mrf.mxu0
    %v979 = vadd.f32 0.0, %v978
    %980 = vmatmul.bf16.gmra.mxu0 %v918
    %v981 = vpop.f32.mrf.mxu0
    %v982 = vadd.f32 0.0, %v981
    %v983 = vpop.f32.mrf.mxu0
    %v984 = vadd.f32 0.0, %v983
    %985 = vmatmul.bf16.gmra.mxu0 %v921
    %v986 = vpop.f32.mrf.mxu0
    %v987 = vadd.f32 0.0, %v986
    %v988 = vpop.f32.mrf.mxu0
    %v989 = vadd.f32 0.0, %v988
    %990 = vdwg.mxu0
    %v991 = vmul.f32 %v942, 0.35355338
    %v992 = vmul.f32 %v944, 0.35355338
    %v993 = vmul.f32 %v947, 0.35355338
    %v994 = vmul.f32 %v949, 0.35355338
    %v995 = vmul.f32 %v952, 0.35355338
    %v996 = vmul.f32 %v954, 0.35355338
    %v997 = vmul.f32 %v957, 0.35355338
    %v998 = vmul.f32 %v959, 0.35355338
    %v999 = vmul.f32 %v962, 0.35355338
    %v1000 = vmul.f32 %v964, 0.35355338
    %v1001 = vmul.f32 %v967, 0.35355338
    %v1002 = vmul.f32 %v969, 0.35355338
    %v1003 = vmul.f32 %v972, 0.35355338
    %v1004 = vmul.f32 %v974, 0.35355338
    %v1005 = vmul.f32 %v977, 0.35355338
    %v1006 = vmul.f32 %v979, 0.35355338
    %v1007 = vmul.f32 %v982, 0.35355338
    %v1008 = vmul.f32 %v984, 0.35355338
    %v1009 = vmul.f32 %v987, 0.35355338
    %v1010 = vmul.f32 %v989, 0.35355338
    %v1011 = vadd.f32 %v991, %v534
    %v1012 = vadd.f32 %v992, %v535
    %v1013 = vadd.f32 %v993, %v536
    %v1014 = vadd.f32 %v994, %v537
    %v1015 = vadd.f32 %v995, %v538
    %v1016 = vadd.f32 %v996, %v539
    %v1017 = vadd.f32 %v997, %v540
    %v1018 = vadd.f32 %v998, %v541
    %v1019 = vadd.f32 %v999, %v542
    %v1020 = vadd.f32 %v1000, %v543
    %v1021 = vadd.f32 %v1001, %v544
    %v1022 = vadd.f32 %v1002, %v545
    %v1023 = vadd.f32 %v1003, %v546
    %v1024 = vadd.f32 %v1004, %v547
    %v1025 = vadd.f32 %v1005, %v548
    %v1026 = vadd.f32 %v1006, %v549
    %v1027 = vadd.f32 %v1007, %v550
    %v1028 = vadd.f32 %v1008, %v551
    %v1029 = vadd.f32 %v1009, %v552
    %v1030 = vadd.f32 %v1010, %v553
    %vm1031 = vcmask 326656
    %v1032 = vsel %vm1031, %v1011, -inf
    %1033 = vmax.xlane.f32.xlu0 %v1032
    %v1034 = vpop.xlane.xlu0 %1033
    %v1035 = vsel %vm1031, %v1012, -inf
    %1036 = vmax.xlane.f32.xlu0 %v1035
    %v1037 = vpop.xlane.xlu0 %1036
    %v1038 = vsel %vm1031, %v1013, -inf
    %1039 = vmax.xlane.f32.xlu0 %v1038
    %v1040 = vpop.xlane.xlu0 %1039
    %v1041 = vsel %vm1031, %v1014, -inf
    %1042 = vmax.xlane.f32.xlu0 %v1041
    %v1043 = vpop.xlane.xlu0 %1042
    %v1044 = vsel %vm1031, %v1015, -inf
    %1045 = vmax.xlane.f32.xlu0 %v1044
    %v1046 = vpop.xlane.xlu0 %1045
    %v1047 = vsel %vm1031, %v1016, -inf
    %1048 = vmax.xlane.f32.xlu0 %v1047
    %v1049 = vpop.xlane.xlu0 %1048
    %v1050 = vsel %vm1031, %v1017, -inf
    %1051 = vmax.xlane.f32.xlu0 %v1050
    %v1052 = vpop.xlane.xlu0 %1051
    %v1053 = vsel %vm1031, %v1018, -inf
    %1054 = vmax.xlane.f32.xlu0 %v1053
    %v1055 = vpop.xlane.xlu0 %1054
    %v1056 = vsel %vm1031, %v1019, -inf
    %1057 = vmax.xlane.f32.xlu0 %v1056
    %v1058 = vpop.xlane.xlu0 %1057
    %v1059 = vsel %vm1031, %v1020, -inf
    %1060 = vmax.xlane.f32.xlu0 %v1059
    %v1061 = vpop.xlane.xlu0 %1060
    %v1062 = vsel %vm1031, %v1021, -inf
    %1063 = vmax.xlane.f32.xlu0 %v1062
    %v1064 = vpop.xlane.xlu0 %1063
    %v1065 = vsel %vm1031, %v1022, -inf
    %1066 = vmax.xlane.f32.xlu0 %v1065
    %v1067 = vpop.xlane.xlu0 %1066
    %v1068 = vsel %vm1031, %v1023, -inf
    %1069 = vmax.xlane.f32.xlu0 %v1068
    %v1070 = vpop.xlane.xlu0 %1069
    %v1071 = vsel %vm1031, %v1024, -inf
    %1072 = vmax.xlane.f32.xlu0 %v1071
    %v1073 = vpop.xlane.xlu0 %1072
    %v1074 = vsel %vm1031, %v1025, -inf
    %1075 = vmax.xlane.f32.xlu0 %v1074
    %v1076 = vpop.xlane.xlu0 %1075
    %v1077 = vsel %vm1031, %v1026, -inf
    %1078 = vmax.xlane.f32.xlu0 %v1077
    %v1079 = vpop.xlane.xlu0 %1078
    %v1080 = vsel %vm1031, %v1027, -inf
    %1081 = vmax.xlane.f32.xlu0 %v1080
    %v1082 = vpop.xlane.xlu0 %1081
    %v1083 = vsel %vm1031, %v1028, -inf
    %1084 = vmax.xlane.f32.xlu0 %v1083
    %v1085 = vpop.xlane.xlu0 %1084
    %v1086 = vsel %vm1031, %v1029, -inf
    %1087 = vmax.xlane.f32.xlu0 %v1086
    %v1088 = vpop.xlane.xlu0 %1087
    %v1089 = vsel %vm1031, %v1030, -inf
    %1090 = vmax.xlane.f32.xlu0 %v1089
    %v1091 = vpop.xlane.xlu0 %1090
    %v1092 = vsub.f32 %v1011, %v1034
    %v1093 = vsub.f32 %v1012, %v1037
    %v1094 = vsub.f32 %v1013, %v1040
    %v1095 = vsub.f32 %v1014, %v1043
    %v1096 = vsub.f32 %v1015, %v1046
    %v1097 = vsub.f32 %v1016, %v1049
    %v1098 = vsub.f32 %v1017, %v1052
    %v1099 = vsub.f32 %v1018, %v1055
    %v1100 = vsub.f32 %v1019, %v1058
    %v1101 = vsub.f32 %v1020, %v1061
    %v1102 = vsub.f32 %v1021, %v1064
    %v1103 = vsub.f32 %v1022, %v1067
    %v1104 = vsub.f32 %v1023, %v1070
    %v1105 = vsub.f32 %v1024, %v1073
    %v1106 = vsub.f32 %v1025, %v1076
    %v1107 = vsub.f32 %v1026, %v1079
    %v1108 = vsub.f32 %v1027, %v1082
    %v1109 = vsub.f32 %v1028, %v1085
    %v1110 = vsub.f32 %v1029, %v1088
    %v1111 = vsub.f32 %v1030, %v1091
    %v1112 = vmul.f32 %v1092, 1.442695
    %v1113 = vpow.pop %v1112
    %v1114 = vmul.f32 %v1093, 1.442695
    %v1115 = vpow.pop %v1114
    %v1116 = vmul.f32 %v1094, 1.442695
    %v1117 = vpow.pop %v1116
    %v1118 = vmul.f32 %v1095, 1.442695
    %v1119 = vpow.pop %v1118
    %v1120 = vmul.f32 %v1096, 1.442695
    %v1121 = vpow.pop %v1120
    %v1122 = vmul.f32 %v1097, 1.442695
    %v1123 = vpow.pop %v1122
    %v1124 = vmul.f32 %v1098, 1.442695
    %v1125 = vpow.pop %v1124
    %v1126 = vmul.f32 %v1099, 1.442695
    %v1127 = vpow.pop %v1126
    %v1128 = vmul.f32 %v1100, 1.442695
    %v1129 = vpow.pop %v1128
    %v1130 = vmul.f32 %v1101, 1.442695
    %v1131 = vpow.pop %v1130
    %v1132 = vmul.f32 %v1102, 1.442695
    %v1133 = vpow.pop %v1132
    %v1134 = vmul.f32 %v1103, 1.442695
    %v1135 = vpow.pop %v1134
    %v1136 = vmul.f32 %v1104, 1.442695
    %v1137 = vpow.pop %v1136
    %v1138 = vmul.f32 %v1105, 1.442695
    %v1139 = vpow.pop %v1138
    %v1140 = vmul.f32 %v1106, 1.442695
    %v1141 = vpow.pop %v1140
    %v1142 = vmul.f32 %v1107, 1.442695
    %v1143 = vpow.pop %v1142
    %v1144 = vmul.f32 %v1108, 1.442695
    %v1145 = vpow.pop %v1144
    %v1146 = vmul.f32 %v1109, 1.442695
    %v1147 = vpow.pop %v1146
    %v1148 = vmul.f32 %v1110, 1.442695
    %v1149 = vpow.pop %v1148
    %v1150 = vmul.f32 %v1111, 1.442695
    %v1151 = vpow.pop %v1150
    %v1152 = vsel %vm1031, %v1113, 0.0
    %1153 = vadd.xlane.f32.xlu0 %v1152
    %v1154 = vpop.xlane.xlu0 %1153
    %v1155 = vsel %vm1031, %v1115, 0.0
    %1156 = vadd.xlane.f32.xlu0 %v1155
    %v1157 = vpop.xlane.xlu0 %1156
    %v1158 = vsel %vm1031, %v1117, 0.0
    %1159 = vadd.xlane.f32.xlu0 %v1158
    %v1160 = vpop.xlane.xlu0 %1159
    %v1161 = vsel %vm1031, %v1119, 0.0
    %1162 = vadd.xlane.f32.xlu0 %v1161
    %v1163 = vpop.xlane.xlu0 %1162
    %v1164 = vsel %vm1031, %v1121, 0.0
    %1165 = vadd.xlane.f32.xlu0 %v1164
    %v1166 = vpop.xlane.xlu0 %1165
    %v1167 = vsel %vm1031, %v1123, 0.0
    %1168 = vadd.xlane.f32.xlu0 %v1167
    %v1169 = vpop.xlane.xlu0 %1168
    %v1170 = vsel %vm1031, %v1125, 0.0
    %1171 = vadd.xlane.f32.xlu0 %v1170
    %v1172 = vpop.xlane.xlu0 %1171
    %v1173 = vsel %vm1031, %v1127, 0.0
    %1174 = vadd.xlane.f32.xlu0 %v1173
    %v1175 = vpop.xlane.xlu0 %1174
    %v1176 = vsel %vm1031, %v1129, 0.0
    %1177 = vadd.xlane.f32.xlu0 %v1176
    %v1178 = vpop.xlane.xlu0 %1177
    %v1179 = vsel %vm1031, %v1131, 0.0
    %1180 = vadd.xlane.f32.xlu0 %v1179
    %v1181 = vpop.xlane.xlu0 %1180
    %v1182 = vsel %vm1031, %v1133, 0.0
    %1183 = vadd.xlane.f32.xlu0 %v1182
    %v1184 = vpop.xlane.xlu0 %1183
    %v1185 = vsel %vm1031, %v1135, 0.0
    %1186 = vadd.xlane.f32.xlu0 %v1185
    %v1187 = vpop.xlane.xlu0 %1186
    %v1188 = vsel %vm1031, %v1137, 0.0
    %1189 = vadd.xlane.f32.xlu0 %v1188
    %v1190 = vpop.xlane.xlu0 %1189
    %v1191 = vsel %vm1031, %v1139, 0.0
    %1192 = vadd.xlane.f32.xlu0 %v1191
    %v1193 = vpop.xlane.xlu0 %1192
    %v1194 = vsel %vm1031, %v1141, 0.0
    %1195 = vadd.xlane.f32.xlu0 %v1194
    %v1196 = vpop.xlane.xlu0 %1195
    %v1197 = vsel %vm1031, %v1143, 0.0
    %1198 = vadd.xlane.f32.xlu0 %v1197
    %v1199 = vpop.xlane.xlu0 %1198
    %v1200 = vsel %vm1031, %v1145, 0.0
    %1201 = vadd.xlane.f32.xlu0 %v1200
    %v1202 = vpop.xlane.xlu0 %1201
    %v1203 = vsel %vm1031, %v1147, 0.0
    %1204 = vadd.xlane.f32.xlu0 %v1203
    %v1205 = vpop.xlane.xlu0 %1204
    %v1206 = vsel %vm1031, %v1149, 0.0
    %1207 = vadd.xlane.f32.xlu0 %v1206
    %v1208 = vpop.xlane.xlu0 %1207
    %v1209 = vsel %vm1031, %v1151, 0.0
    %1210 = vadd.xlane.f32.xlu0 %v1209
    %v1211 = vpop.xlane.xlu0 %1210
    %v1212 = vrcp.pop %v1154
    %v1213 = vrcp.pop %v1157
    %v1214 = vrcp.pop %v1160
    %v1215 = vrcp.pop %v1163
    %v1216 = vrcp.pop %v1166
    %v1217 = vrcp.pop %v1169
    %v1218 = vrcp.pop %v1172
    %v1219 = vrcp.pop %v1175
    %v1220 = vrcp.pop %v1178
    %v1221 = vrcp.pop %v1181
    %v1222 = vrcp.pop %v1184
    %v1223 = vrcp.pop %v1187
    %v1224 = vrcp.pop %v1190
    %v1225 = vrcp.pop %v1193
    %v1226 = vrcp.pop %v1196
    %v1227 = vrcp.pop %v1199
    %v1228 = vrcp.pop %v1202
    %v1229 = vrcp.pop %v1205
    %v1230 = vrcp.pop %v1208
    %v1231 = vrcp.pop %v1211
    %v1232 = vmul.f32 %v1113, %v1212
    %v1233 = vmul.f32 %v1115, %v1213
    %v1234 = vmul.f32 %v1117, %v1214
    %v1235 = vmul.f32 %v1119, %v1215
    %v1236 = vmul.f32 %v1121, %v1216
    %v1237 = vmul.f32 %v1123, %v1217
    %v1238 = vmul.f32 %v1125, %v1218
    %v1239 = vmul.f32 %v1127, %v1219
    %v1240 = vmul.f32 %v1129, %v1220
    %v1241 = vmul.f32 %v1131, %v1221
    %v1242 = vmul.f32 %v1133, %v1222
    %v1243 = vmul.f32 %v1135, %v1223
    %v1244 = vmul.f32 %v1137, %v1224
    %v1245 = vmul.f32 %v1139, %v1225
    %v1246 = vmul.f32 %v1141, %v1226
    %v1247 = vmul.f32 %v1143, %v1227
    %v1248 = vmul.f32 %v1145, %v1228
    %v1249 = vmul.f32 %v1147, %v1229
    %v1250 = vmul.f32 %v1149, %v1230
    %v1251 = vmul.f32 %v1151, %v1231
    %v1252 = vpack.c.bf16 %v1233, %v1232
    %v1253 = vpack.c.bf16 %v1235, %v1234
    %v1254 = vpack.c.bf16 %v1237, %v1236
    %v1255 = vpack.c.bf16 %v1239, %v1238
    %v1256 = vpack.c.bf16 %v1241, %v1240
    %v1257 = vpack.c.bf16 %v1243, %v1242
    %v1258 = vpack.c.bf16 %v1245, %v1244
    %v1259 = vpack.c.bf16 %v1247, %v1246
    %v1260 = vpack.c.bf16 %v1249, %v1248
    %v1261 = vpack.c.bf16 %v1251, %v1250
    %v1262 = vpack.c.bf16 %v849, %v847
    %v1263 = vpack.c.bf16 %v854, %v852
    %v1264 = vpack.c.bf16 %v857, %v857
    %v1266 = vsel %vm1031, %v1252, 0
    %v1269 = vsel %vm1031, %v1253, 0
    %v1272 = vsel %vm1031, %v1254, 0
    %v1275 = vsel %vm1031, %v1255, 0
    %v1278 = vsel %vm1031, %v1256, 0
    %v1281 = vsel %vm1031, %v1257, 0
    %v1284 = vsel %vm1031, %v1258, 0
    %v1287 = vsel %vm1031, %v1259, 0
    %v1290 = vsel %vm1031, %v1260, 0
    %v1293 = vsel %vm1031, %v1261, 0
    %vm1295 = vcmask 1043456
    %v1297 = vsel %vm1295, %v1264, 0
    %1299 = vmatpush.bf16.msra.mxu0 0
    %1300 = vmatpush.bf16.msra.mxu0 0
    %1301 = vmatpush.bf16.msra.mxu0 0
    %1302 = vmatpush.bf16.msra.mxu0 0
    %1303 = vmatpush.bf16.msra.mxu0 0
    %1304 = vmatpush.bf16.msra.mxu0 %v1297
    %1305 = vmatpush.bf16.msra.mxu0 %v1263
    %1306 = vmatpush.bf16.msra.mxu0 %v1262
    %1307 = vmatmul.bf16.gmra.mxu0 %v1266
    %v1308 = vpop.f32.mrf.mxu0
    %v1309 = vadd.f32 0.0, %v1308
    %v1310 = vpop.f32.mrf.mxu0
    %v1311 = vadd.f32 0.0, %v1310
    %1312 = vmatmul.bf16.gmra.mxu0 %v1269
    %v1313 = vpop.f32.mrf.mxu0
    %v1314 = vadd.f32 0.0, %v1313
    %v1315 = vpop.f32.mrf.mxu0
    %v1316 = vadd.f32 0.0, %v1315
    %1317 = vmatmul.bf16.gmra.mxu0 %v1272
    %v1318 = vpop.f32.mrf.mxu0
    %v1319 = vadd.f32 0.0, %v1318
    %v1320 = vpop.f32.mrf.mxu0
    %v1321 = vadd.f32 0.0, %v1320
    %1322 = vmatmul.bf16.gmra.mxu0 %v1275
    %v1323 = vpop.f32.mrf.mxu0
    %v1324 = vadd.f32 0.0, %v1323
    %v1325 = vpop.f32.mrf.mxu0
    %v1326 = vadd.f32 0.0, %v1325
    %1327 = vmatmul.bf16.gmra.mxu0 %v1278
    %v1328 = vpop.f32.mrf.mxu0
    %v1329 = vadd.f32 0.0, %v1328
    %v1330 = vpop.f32.mrf.mxu0
    %v1331 = vadd.f32 0.0, %v1330
    %1332 = vmatmul.bf16.gmra.mxu0 %v1281
    %v1333 = vpop.f32.mrf.mxu0
    %v1334 = vadd.f32 0.0, %v1333
    %v1335 = vpop.f32.mrf.mxu0
    %v1336 = vadd.f32 0.0, %v1335
    %1337 = vmatmul.bf16.gmra.mxu0 %v1284
    %v1338 = vpop.f32.mrf.mxu0
    %v1339 = vadd.f32 0.0, %v1338
    %v1340 = vpop.f32.mrf.mxu0
    %v1341 = vadd.f32 0.0, %v1340
    %1342 = vmatmul.bf16.gmra.mxu0 %v1287
    %v1343 = vpop.f32.mrf.mxu0
    %v1344 = vadd.f32 0.0, %v1343
    %v1345 = vpop.f32.mrf.mxu0
    %v1346 = vadd.f32 0.0, %v1345
    %1347 = vmatmul.bf16.gmra.mxu0 %v1290
    %v1348 = vpop.f32.mrf.mxu0
    %v1349 = vadd.f32 0.0, %v1348
    %v1350 = vpop.f32.mrf.mxu0
    %v1351 = vadd.f32 0.0, %v1350
    %1352 = vmatmul.bf16.gmra.mxu0 %v1293
    %v1353 = vpop.f32.mrf.mxu0
    %v1354 = vadd.f32 0.0, %v1353
    %v1355 = vpop.f32.mrf.mxu0
    %v1356 = vadd.f32 0.0, %v1355
    %1357 = vdwg.mxu0
    %v1358 = vmul.f32 %v1309, %v698
    %v1359 = vmul.f32 %v1311, %v699
    %v1360 = vmul.f32 %v1314, %v700
    %v1361 = vmul.f32 %v1316, %v701
    %v1362 = vmul.f32 %v1319, %v702
    %v1363 = vmul.f32 %v1321, %v703
    %v1364 = vmul.f32 %v1324, %v704
    %v1365 = vmul.f32 %v1326, %v705
    %v1366 = vmul.f32 %v1329, %v706
    %v1367 = vmul.f32 %v1331, %v707
    %v1368 = vmul.f32 %v1334, %v708
    %v1369 = vmul.f32 %v1336, %v709
    %v1370 = vmul.f32 %v1339, %v710
    %v1371 = vmul.f32 %v1341, %v711
    %v1372 = vmul.f32 %v1344, %v712
    %v1373 = vmul.f32 %v1346, %v713
    %v1374 = vmul.f32 %v1349, %v714
    %v1375 = vmul.f32 %v1351, %v715
    %v1376 = vmul.f32 %v1354, %v716
    %v1377 = vmul.f32 %v1356, %v717
    %v1378 = vadd.f32 %v1358, %v1363
    %v1379 = vadd.f32 %v1359, %v1364
    %v1380 = vadd.f32 %v1360, %v1365
    %v1381 = vadd.f32 %v1361, %v1366
    %v1382 = vadd.f32 %v1362, %v1367
    %v1383 = vadd.f32 %v1378, %v1368
    %v1384 = vadd.f32 %v1379, %v1369
    %v1385 = vadd.f32 %v1380, %v1370
    %v1386 = vadd.f32 %v1381, %v1371
    %v1387 = vadd.f32 %v1382, %v1372
    %v1388 = vadd.f32 %v1383, %v1373
    %v1389 = vadd.f32 %v1384, %v1374
    %v1390 = vadd.f32 %v1385, %v1375
    %v1391 = vadd.f32 %v1386, %v1376
    %v1392 = vadd.f32 %v1387, %v1377
    %v1393 = vld [vmem:[#allocation13] sm:$0xf]
    %v1394 = vld [vmem:[#allocation13 + $0x4] sm:$0xf]
    %v1395 = vld [vmem:[#allocation13 + $0x8] sm:$0xf]
    %v1396 = vld [vmem:[#allocation13 + $0xc] sm:$0xf]
    %v1397 = vpack.c.bf16 %v1389, %v1388
    %v1398 = vpack.c.bf16 %v1391, %v1390
    %v1399 = vpack.c.bf16 %v1392, %v1392
    %v1400 = vld [vmem:[%s33] sm:$0x1]
    %v1402 = vperm.slane %v1400, 0
    %v1408 = vunpack.c.l.b16 %v1393
    %v1409 = vunpack.c.l.b16 %v1394
    %v1410 = vunpack.c.l.b16 %v1395
    %v1411 = vunpack.c.l.b16 %v1396
    %v1412 = vpack.c.b16 %v1409, %v1408
    %v1413 = vpack.c.b16 %v1411, %v1410
    %v1417 = vsel %vm741, %v1397, 0
    %v1420 = vsel %vm741, %v1398, 0
    %v1423 = vsel %vm741, %v1399, 0
    %1425 = vmatpush.bf16.msra.mxu0 0
    %1426 = vmatpush.bf16.msra.mxu0 0
    %1427 = vmatpush.bf16.msra.mxu0 0
    %1428 = vmatpush.bf16.msra.mxu0 0
    %1429 = vmatpush.bf16.msra.mxu0 0
    %1430 = vmatpush.bf16.msra.mxu0 0
    %1431 = vmatpush.bf16.msra.mxu0 %v1413
    %1432 = vmatpush.bf16.msra.mxu0 %v1412
    %1433 = vmatmul.bf16.gmra.mxu0 %v1417
    %v1434 = vpop.f32.mrf.mxu0
    %v1435 = vadd.f32 %v1402, %v1434
    %v1436 = vpop.f32.mrf.mxu0
    %v1437 = vadd.f32 %v1402, %v1436
    %1438 = vmatmul.bf16.gmra.mxu0 %v1420
    %v1439 = vpop.f32.mrf.mxu0
    %v1440 = vadd.f32 %v1402, %v1439
    %v1441 = vpop.f32.mrf.mxu0
    %v1442 = vadd.f32 %v1402, %v1441
    %1443 = vmatmul.bf16.gmra.mxu0 %v1423
    %v1444 = vpop.f32.mrf.mxu0
    %v1445 = vadd.f32 %v1402, %v1444
    %v1446 = vpop.f32.mrf.mxu0
    %1447 = vdwg.mxu0
    %v1448 = vadd.f32 %v377, %v1435
    %v1449 = vadd.f32 %v379, %v1437
    %v1450 = vadd.f32 %v382, %v1440
    %v1451 = vadd.f32 %v384, %v1442
    %v1452 = vadd.f32 %v387, %v1445
    %v1453 = vld [vmem:[%s35] sm:$0x1]
    %v1454 = vld [vmem:[%s37] sm:$0x1]
    %v1455 = vsel %vm741, %v1448, 0.0
    %1456 = vadd.xlane.f32.xlu0 %v1455
    %v1457 = vpop.xlane.xlu0 %1456
    %v1458 = vsel %vm741, %v1449, 0.0
    %1459 = vadd.xlane.f32.xlu0 %v1458
    %v1460 = vpop.xlane.xlu0 %1459
    %v1461 = vsel %vm741, %v1450, 0.0
    %1462 = vadd.xlane.f32.xlu0 %v1461
    %v1463 = vpop.xlane.xlu0 %1462
    %v1464 = vsel %vm741, %v1451, 0.0
    %1465 = vadd.xlane.f32.xlu0 %v1464
    %v1466 = vpop.xlane.xlu0 %1465
    %v1467 = vsel %vm741, %v1452, 0.0
    %1468 = vadd.xlane.f32.xlu0 %v1467
    %v1469 = vpop.xlane.xlu0 %1468
    %v1470 = vrcp.pop 32.0
    %v1471 = vmul.f32 32.0, %v1470
    %v1472 = vsub.f32 1.0, %v1471
    %v1473 = vmul.f32 %v1470, %v1472
    %v1474 = vadd.f32 %v1470, %v1473
    %vm1475 = vweird.f32 %v1470
    %v1476 = vsel %vm1475, %v1470, %v1474
    %v1477 = vmul.f32 %v1457, %v1476
    %v1478 = vmul.f32 %v1460, %v1476
    %v1479 = vmul.f32 %v1463, %v1476
    %v1480 = vmul.f32 %v1466, %v1476
    %v1481 = vmul.f32 %v1469, %v1476
    %v1482 = vsub.f32 %v1448, %v1477
    %v1483 = vsub.f32 %v1449, %v1478
    %v1484 = vsub.f32 %v1450, %v1479
    %v1485 = vsub.f32 %v1451, %v1480
    %v1486 = vsub.f32 %v1452, %v1481
    %v1487 = vmul.f32 %v1482, %v1482
    %v1488 = vmul.f32 %v1483, %v1483
    %v1489 = vmul.f32 %v1484, %v1484
    %v1490 = vmul.f32 %v1485, %v1485
    %v1491 = vmul.f32 %v1486, %v1486
    %v1492 = vsel %vm741, %v1487, 0.0
    %1493 = vadd.xlane.f32.xlu0 %v1492
    %v1494 = vpop.xlane.xlu0 %1493
    %v1495 = vsel %vm741, %v1488, 0.0
    %1496 = vadd.xlane.f32.xlu0 %v1495
    %v1497 = vpop.xlane.xlu0 %1496
    %v1498 = vsel %vm741, %v1489, 0.0
    %1499 = vadd.xlane.f32.xlu0 %v1498
    %v1500 = vpop.xlane.xlu0 %1499
    %v1501 = vsel %vm741, %v1490, 0.0
    %1502 = vadd.xlane.f32.xlu0 %v1501
    %v1503 = vpop.xlane.xlu0 %1502
    %v1504 = vsel %vm741, %v1491, 0.0
    %1505 = vadd.xlane.f32.xlu0 %v1504
    %v1506 = vpop.xlane.xlu0 %1505
    %v1507 = vmul.f32 %v1494, %v1476
    %v1508 = vmul.f32 %v1497, %v1476
    %v1509 = vmul.f32 %v1500, %v1476
    %v1510 = vmul.f32 %v1503, %v1476
    %v1511 = vmul.f32 %v1506, %v1476
    %v1512 = vadd.f32 %v1507, 1e-05
    %v1513 = vadd.f32 %v1508, 1e-05
    %v1514 = vadd.f32 %v1509, 1e-05
    %v1515 = vadd.f32 %v1510, 1e-05
    %v1516 = vadd.f32 %v1511, 1e-05
    %v1517 = vrsqrt.pop %v1512
    %v1518 = vmul.f32 %v1517, %v1512
    %v1519 = vmul.f32 %v1518, %v1517
    %v1520 = vmul.f32 0.5, %v1519
    %v1521 = vsub.f32 1.5, %v1520
    %v1522 = vmul.f32 %v1517, %v1521
    %vm1523 = vweird.f32 %v1512
    %vm1524 = vweird.f32 %v1517
    %vm1525 = vmor %vm1523, %vm1524
    %v1526 = vsel %vm1525, %v1517, %v1522
    %v1527 = vrsqrt.pop %v1513
    %v1528 = vmul.f32 %v1527, %v1513
    %v1529 = vmul.f32 %v1528, %v1527
    %v1530 = vmul.f32 0.5, %v1529
    %v1531 = vsub.f32 1.5, %v1530
    %v1532 = vmul.f32 %v1527, %v1531
    %vm1533 = vweird.f32 %v1513
    %vm1534 = vweird.f32 %v1527
    %vm1535 = vmor %vm1533, %vm1534
    %v1536 = vsel %vm1535, %v1527, %v1532
    %v1537 = vrsqrt.pop %v1514
    %v1538 = vmul.f32 %v1537, %v1514
    %v1539 = vmul.f32 %v1538, %v1537
    %v1540 = vmul.f32 0.5, %v1539
    %v1541 = vsub.f32 1.5, %v1540
    %v1542 = vmul.f32 %v1537, %v1541
    %vm1543 = vweird.f32 %v1514
    %vm1544 = vweird.f32 %v1537
    %vm1545 = vmor %vm1543, %vm1544
    %v1546 = vsel %vm1545, %v1537, %v1542
    %v1547 = vrsqrt.pop %v1515
    %v1548 = vmul.f32 %v1547, %v1515
    %v1549 = vmul.f32 %v1548, %v1547
    %v1550 = vmul.f32 0.5, %v1549
    %v1551 = vsub.f32 1.5, %v1550
    %v1552 = vmul.f32 %v1547, %v1551
    %vm1553 = vweird.f32 %v1515
    %vm1554 = vweird.f32 %v1547
    %vm1555 = vmor %vm1553, %vm1554
    %v1556 = vsel %vm1555, %v1547, %v1552
    %v1557 = vrsqrt.pop %v1516
    %v1558 = vmul.f32 %v1557, %v1516
    %v1559 = vmul.f32 %v1558, %v1557
    %v1560 = vmul.f32 0.5, %v1559
    %v1561 = vsub.f32 1.5, %v1560
    %v1562 = vmul.f32 %v1557, %v1561
    %vm1563 = vweird.f32 %v1516
    %vm1564 = vweird.f32 %v1557
    %vm1565 = vmor %vm1563, %vm1564
    %v1566 = vsel %vm1565, %v1557, %v1562
    %v1567 = vmul.f32 %v1482, %v1526
    %v1568 = vmul.f32 %v1483, %v1536
    %v1569 = vmul.f32 %v1484, %v1546
    %v1570 = vmul.f32 %v1485, %v1556
    %v1571 = vmul.f32 %v1486, %v1566
    %v1573 = vperm.slane %v1453, 0
    %v1575 = vmul.f32 %v1567, %v1573
    %v1576 = vmul.f32 %v1568, %v1573
    %v1577 = vmul.f32 %v1569, %v1573
    %v1578 = vmul.f32 %v1570, %v1573
    %v1579 = vmul.f32 %v1571, %v1573
    %v1581 = vperm.slane %v1454, 0
    %v1583 = vadd.f32 %v1575, %v1581
    %v1584 = vadd.f32 %v1576, %v1581
    %v1585 = vadd.f32 %v1577, %v1581
    %v1586 = vadd.f32 %v1578, %v1581
    %v1587 = vadd.f32 %v1579, %v1581
    %v1588 = vld [vmem:[%s39] sm:$0xf]
    %v1589 = vld [vmem:[%s39 + $0x4] sm:$0xf]
    %v1590 = vld [vmem:[%s39 + $0x8] sm:$0xf]
    %v1591 = vld [vmem:[%s39 + $0xc] sm:$0xf]
    %v1592 = vpack.c.bf16 %v1584, %v1583
    %v1593 = vpack.c.bf16 %v1586, %v1585
    %v1594 = vpack.c.bf16 %v1587, %v1587
    %v1595 = vld [vmem:[%s41] sm:$0x1]
    %v1597 = vperm.slane %v1595, 0
    %v1603 = vunpack.c.l.b16 %v1588
    %v1604 = vunpack.c.l.b16 %v1589
    %v1605 = vunpack.c.l.b16 %v1590
    %v1606 = vunpack.c.l.b16 %v1591
    %v1607 = vpack.c.b16 %v1604, %v1603
    %v1608 = vpack.c.b16 %v1606, %v1605
    %v1612 = vsel %vm741, %v1592, 0
    %v1615 = vsel %vm741, %v1593, 0
    %v1618 = vsel %vm741, %v1594, 0
    %1620 = vmatpush.bf16.msra.mxu0 0
    %1621 = vmatpush.bf16.msra.mxu0 0
    %1622 = vmatpush.bf16.msra.mxu0 0
    %1623 = vmatpush.bf16.msra.mxu0 0
    %1624 = vmatpush.bf16.msra.mxu0 0
    %1625 = vmatpush.bf16.msra.mxu0 0
    %1626 = vmatpush.bf16.msra.mxu0 %v1608
    %1627 = vmatpush.bf16.msra.mxu0 %v1607
    %1628 = vmatmul.bf16.gmra.mxu0 %v1612
    %v1629 = vpop.f32.mrf.mxu0
    %v1630 = vadd.f32 %v1597, %v1629
    %v1631 = vpop.f32.mrf.mxu0
    %v1632 = vadd.f32 %v1597, %v1631
    %1633 = vmatmul.bf16.gmra.mxu0 %v1615
    %v1634 = vpop.f32.mrf.mxu0
    %v1635 = vadd.f32 %v1597, %v1634
    %v1636 = vpop.f32.mrf.mxu0
    %v1637 = vadd.f32 %v1597, %v1636
    %1638 = vmatmul.bf16.gmra.mxu0 %v1618
    %v1639 = vpop.f32.mrf.mxu0
    %v1640 = vadd.f32 %v1597, %v1639
    %v1641 = vpop.f32.mrf.mxu0
    %1642 = vdwg.mxu0
    %v1643 = vmax.f32 %v1630, 0.0
    %v1644 = vmax.f32 %v1632, 0.0
    %v1645 = vmax.f32 %v1635, 0.0
    %v1646 = vmax.f32 %v1637, 0.0
    %v1647 = vmax.f32 %v1640, 0.0
    %v1648 = vld [vmem:[#allocation14] sm:$0xf]
    %v1649 = vld [vmem:[#allocation14 + $0x4] sm:$0xf]
    %v1650 = vld [vmem:[#allocation14 + $0x8] sm:$0xf]
    %v1651 = vld [vmem:[#allocation14 + $0xc] sm:$0xf]
    %v1652 = vld [vmem:[#allocation14 + $0x10] sm:$0xf]
    %v1653 = vld [vmem:[#allocation14 + $0x14] sm:$0xf]
    %v1654 = vld [vmem:[#allocation14 + $0x18] sm:$0xf]
    %v1655 = vld [vmem:[#allocation14 + $0x1c] sm:$0xf]
    %v1656 = vpack.c.bf16 %v1644, %v1643
    %v1657 = vpack.c.bf16 %v1646, %v1645
    %v1658 = vpack.c.bf16 %v1647, %v1647
    %v1659 = vld [vmem:[%s45] sm:$0x1]
    %v1661 = vperm.slane %v1659, 0
    %v1671 = vunpack.c.l.b16 %v1648
    %v1672 = vunpack.c.l.b16 %v1649
    %v1673 = vunpack.c.l.b16 %v1650
    %v1674 = vunpack.c.l.b16 %v1651
    %v1675 = vunpack.c.l.b16 %v1652
    %v1676 = vunpack.c.l.b16 %v1653
    %v1677 = vunpack.c.l.b16 %v1654
    %v1678 = vunpack.c.l.b16 %v1655
    %v1679 = vpack.c.b16 %v1672, %v1671
    %v1680 = vpack.c.b16 %v1674, %v1673
    %v1681 = vpack.c.b16 %v1676, %v1675
    %v1682 = vpack.c.b16 %v1678, %v1677
    %vm1687 = vcmask 523264
    %v1689 = vsel %vm1687, %v1656, 0
    %v1692 = vsel %vm1687, %v1657, 0
    %v1695 = vsel %vm1687, %v1658, 0
    %1697 = vmatpush.bf16.msra.mxu0 0
    %1698 = vmatpush.bf16.msra.mxu0 0
    %1699 = vmatpush.bf16.msra.mxu0 0
    %1700 = vmatpush.bf16.msra.mxu0 0
    %1701 = vmatpush.bf16.msra.mxu0 %v1682
    %1702 = vmatpush.bf16.msra.mxu0 %v1681
    %1703 = vmatpush.bf16.msra.mxu0 %v1680
    %1704 = vmatpush.bf16.msra.mxu0 %v1679
    %1705 = vmatmul.bf16.gmra.mxu0 %v1689
    %v1706 = vpop.f32.mrf.mxu0
    %v1707 = vadd.f32 %v1661, %v1706
    %v1708 = vpop.f32.mrf.mxu0
    %v1709 = vadd.f32 %v1661, %v1708
    %1710 = vmatmul.bf16.gmra.mxu0 %v1692
    %v1711 = vpop.f32.mrf.mxu0
    %v1712 = vadd.f32 %v1661, %v1711
    %v1713 = vpop.f32.mrf.mxu0
    %v1714 = vadd.f32 %v1661, %v1713
    %1715 = vmatmul.bf16.gmra.mxu0 %v1695
    %v1716 = vpop.f32.mrf.mxu0
    %v1717 = vadd.f32 %v1661, %v1716
    %v1718 = vpop.f32.mrf.mxu0
    %1719 = vdwg.mxu0
    %v1720 = vadd.f32 %v1583, %v1707
    %v1721 = vadd.f32 %v1584, %v1709
    %v1722 = vadd.f32 %v1585, %v1712
    %v1723 = vadd.f32 %v1586, %v1714
    %v1724 = vadd.f32 %v1587, %v1717
    %v1725 = vld [vmem:[%s47] sm:$0x1]
    %v1726 = vld [vmem:[%s49] sm:$0x1]
    %v1727 = vsel %vm741, %v1720, 0.0
    %1728 = vadd.xlane.f32.xlu0 %v1727
    %v1729 = vpop.xlane.xlu0 %1728
    %v1730 = vsel %vm741, %v1721, 0.0
    %1731 = vadd.xlane.f32.xlu0 %v1730
    %v1732 = vpop.xlane.xlu0 %1731
    %v1733 = vsel %vm741, %v1722, 0.0
    %1734 = vadd.xlane.f32.xlu0 %v1733
    %v1735 = vpop.xlane.xlu0 %1734
    %v1736 = vsel %vm741, %v1723, 0.0
    %1737 = vadd.xlane.f32.xlu0 %v1736
    %v1738 = vpop.xlane.xlu0 %1737
    %v1739 = vsel %vm741, %v1724, 0.0
    %1740 = vadd.xlane.f32.xlu0 %v1739
    %v1741 = vpop.xlane.xlu0 %1740
    %v1742 = vmul.f32 %v1729, %v1476
    %v1743 = vmul.f32 %v1732, %v1476
    %v1744 = vmul.f32 %v1735, %v1476
    %v1745 = vmul.f32 %v1738, %v1476
    %v1746 = vmul.f32 %v1741, %v1476
    %v1747 = vsub.f32 %v1720, %v1742
    %v1748 = vsub.f32 %v1721, %v1743
    %v1749 = vsub.f32 %v1722, %v1744
    %v1750 = vsub.f32 %v1723, %v1745
    %v1751 = vsub.f32 %v1724, %v1746
    %v1752 = vmul.f32 %v1747, %v1747
    %v1753 = vmul.f32 %v1748, %v1748
    %v1754 = vmul.f32 %v1749, %v1749
    %v1755 = vmul.f32 %v1750, %v1750
    %v1756 = vmul.f32 %v1751, %v1751
    %v1757 = vsel %vm741, %v1752, 0.0
    %1758 = vadd.xlane.f32.xlu0 %v1757
    %v1759 = vpop.xlane.xlu0 %1758
    %v1760 = vsel %vm741, %v1753, 0.0
    %1761 = vadd.xlane.f32.xlu0 %v1760
    %v1762 = vpop.xlane.xlu0 %1761
    %v1763 = vsel %vm741, %v1754, 0.0
    %1764 = vadd.xlane.f32.xlu0 %v1763
    %v1765 = vpop.xlane.xlu0 %1764
    %v1766 = vsel %vm741, %v1755, 0.0
    %1767 = vadd.xlane.f32.xlu0 %v1766
    %v1768 = vpop.xlane.xlu0 %1767
    %v1769 = vsel %vm741, %v1756, 0.0
    %1770 = vadd.xlane.f32.xlu0 %v1769
    %v1771 = vpop.xlane.xlu0 %1770
    %v1772 = vmul.f32 %v1759, %v1476
    %v1773 = vmul.f32 %v1762, %v1476
    %v1774 = vmul.f32 %v1765, %v1476
    %v1775 = vmul.f32 %v1768, %v1476
    %v1776 = vmul.f32 %v1771, %v1476
    %v1777 = vadd.f32 %v1772, 1e-05
    %v1778 = vadd.f32 %v1773, 1e-05
    %v1779 = vadd.f32 %v1774, 1e-05
    %v1780 = vadd.f32 %v1775, 1e-05
    %v1781 = vadd.f32 %v1776, 1e-05
    %v1782 = vrsqrt.pop %v1777
    %v1783 = vmul.f32 %v1782, %v1777
    %v1784 = vmul.f32 %v1783, %v1782
    %v1785 = vmul.f32 0.5, %v1784
    %v1786 = vsub.f32 1.5, %v1785
    %v1787 = vmul.f32 %v1782, %v1786
    %vm1788 = vweird.f32 %v1777
    %vm1789 = vweird.f32 %v1782
    %vm1790 = vmor %vm1788, %vm1789
    %v1791 = vsel %vm1790, %v1782, %v1787
    %v1792 = vrsqrt.pop %v1778
    %v1793 = vmul.f32 %v1792, %v1778
    %v1794 = vmul.f32 %v1793, %v1792
    %v1795 = vmul.f32 0.5, %v1794
    %v1796 = vsub.f32 1.5, %v1795
    %v1797 = vmul.f32 %v1792, %v1796
    %vm1798 = vweird.f32 %v1778
    %vm1799 = vweird.f32 %v1792
    %vm1800 = vmor %vm1798, %vm1799
    %v1801 = vsel %vm1800, %v1792, %v1797
    %v1802 = vrsqrt.pop %v1779
    %v1803 = vmul.f32 %v1802, %v1779
    %v1804 = vmul.f32 %v1803, %v1802
    %v1805 = vmul.f32 0.5, %v1804
    %v1806 = vsub.f32 1.5, %v1805
    %v1807 = vmul.f32 %v1802, %v1806
    %vm1808 = vweird.f32 %v1779
    %vm1809 = vweird.f32 %v1802
    %vm1810 = vmor %vm1808, %vm1809
    %v1811 = vsel %vm1810, %v1802, %v1807
    %v1812 = vrsqrt.pop %v1780
    %v1813 = vmul.f32 %v1812, %v1780
    %v1814 = vmul.f32 %v1813, %v1812
    %v1815 = vmul.f32 0.5, %v1814
    %v1816 = vsub.f32 1.5, %v1815
    %v1817 = vmul.f32 %v1812, %v1816
    %vm1818 = vweird.f32 %v1780
    %vm1819 = vweird.f32 %v1812
    %vm1820 = vmor %vm1818, %vm1819
    %v1821 = vsel %vm1820, %v1812, %v1817
    %v1822 = vrsqrt.pop %v1781
    %v1823 = vmul.f32 %v1822, %v1781
    %v1824 = vmul.f32 %v1823, %v1822
    %v1825 = vmul.f32 0.5, %v1824
    %v1826 = vsub.f32 1.5, %v1825
    %v1827 = vmul.f32 %v1822, %v1826
    %vm1828 = vweird.f32 %v1781
    %vm1829 = vweird.f32 %v1822
    %vm1830 = vmor %vm1828, %vm1829
    %v1831 = vsel %vm1830, %v1822, %v1827
    %v1832 = vmul.f32 %v1747, %v1791
    %v1833 = vmul.f32 %v1748, %v1801
    %v1834 = vmul.f32 %v1749, %v1811
    %v1835 = vmul.f32 %v1750, %v1821
    %v1836 = vmul.f32 %v1751, %v1831
    %v1838 = vperm.slane %v1725, 0
    %v1840 = vmul.f32 %v1832, %v1838
    %v1841 = vmul.f32 %v1833, %v1838
    %v1842 = vmul.f32 %v1834, %v1838
    %v1843 = vmul.f32 %v1835, %v1838
    %v1844 = vmul.f32 %v1836, %v1838
    %v1846 = vperm.slane %v1726, 0
    %v1848 = vadd.f32 %v1840, %v1846
    %v1849 = vadd.f32 %v1841, %v1846
    %v1850 = vadd.f32 %v1842, %v1846
    %v1851 = vadd.f32 %v1843, %v1846
    %v1852 = vadd.f32 %v1844, %v1846
    %s1853 = scalar_lea.vmem [#allocation8], 16
    %v1854 = vld [vmem:[%s1853] sm:$0xf]
    %v1855 = vld [vmem:[%s1853 + $0x4] sm:$0xf]
    %v1856 = vld [vmem:[%s1853 + $0x8] sm:$0xf]
    %v1857 = vld [vmem:[%s1853 + $0xc] sm:$0xf]
    %v1858 = vpack.c.bf16 %v1849, %v1848
    %v1859 = vpack.c.bf16 %v1851, %v1850
    %v1860 = vpack.c.bf16 %v1852, %v1852
    %s1861 = scalar_lea.vmem %s21, 1
    %v1862 = vld [vmem:[%s1861] sm:$0x1]
    %v1864 = vperm.slane %v1862, 0
    %v1870 = vunpack.c.l.b16 %v1854
    %v1871 = vunpack.c.l.b16 %v1855
    %v1872 = vunpack.c.l.b16 %v1856
    %v1873 = vunpack.c.l.b16 %v1857
    %v1874 = vpack.c.b16 %v1871, %v1870
    %v1875 = vpack.c.b16 %v1873, %v1872
    %v1879 = vsel %vm741, %v1858, 0
    %v1882 = vsel %vm741, %v1859, 0
    %v1885 = vsel %vm741, %v1860, 0
    %1887 = vmatpush.bf16.msra.mxu0 0
    %1888 = vmatpush.bf16.msra.mxu0 0
    %1889 = vmatpush.bf16.msra.mxu0 0
    %1890 = vmatpush.bf16.msra.mxu0 0
    %1891 = vmatpush.bf16.msra.mxu0 0
    %1892 = vmatpush.bf16.msra.mxu0 0
    %1893 = vmatpush.bf16.msra.mxu0 %v1875
    %1894 = vmatpush.bf16.msra.mxu0 %v1874
    %1895 = vmatmul.bf16.gmra.mxu0 %v1879
    %v1896 = vpop.f32.mrf.mxu0
    %v1897 = vadd.f32 %v1864, %v1896
    %v1898 = vpop.f32.mrf.mxu0
    %v1899 = vadd.f32 %v1864, %v1898
    %1900 = vmatmul.bf16.gmra.mxu0 %v1882
    %v1901 = vpop.f32.mrf.mxu0
    %v1902 = vadd.f32 %v1864, %v1901
    %v1903 = vpop.f32.mrf.mxu0
    %v1904 = vadd.f32 %v1864, %v1903
    %1905 = vmatmul.bf16.gmra.mxu0 %v1885
    %v1906 = vpop.f32.mrf.mxu0
    %v1907 = vadd.f32 %v1864, %v1906
    %v1908 = vpop.f32.mrf.mxu0
    %1909 = vdwg.mxu0
    %s1910 = scalar_lea.vmem [#allocation10], 16
    %v1911 = vld [vmem:[%s1910] sm:$0xf]
    %v1912 = vld [vmem:[%s1910 + $0x4] sm:$0xf]
    %v1913 = vld [vmem:[%s1910 + $0x8] sm:$0xf]
    %v1914 = vld [vmem:[%s1910 + $0xc] sm:$0xf]
    %s1915 = scalar_lea.vmem %s25, 1
    %v1916 = vld [vmem:[%s1915] sm:$0x1]
    %v1918 = vperm.slane %v1916, 0
    %v1924 = vunpack.c.l.b16 %v1911
    %v1925 = vunpack.c.l.b16 %v1912
    %v1926 = vunpack.c.l.b16 %v1913
    %v1927 = vunpack.c.l.b16 %v1914
    %v1928 = vpack.c.b16 %v1925, %v1924
    %v1929 = vpack.c.b16 %v1927, %v1926
    %1932 = vmatpush.bf16.msra.mxu0 0
    %1933 = vmatpush.bf16.msra.mxu0 0
    %1934 = vmatpush.bf16.msra.mxu0 0
    %1935 = vmatpush.bf16.msra.mxu0 0
    %1936 = vmatpush.bf16.msra.mxu0 0
    %1937 = vmatpush.bf16.msra.mxu0 0
    %1938 = vmatpush.bf16.msra.mxu0 %v1929
    %1939 = vmatpush.bf16.msra.mxu0 %v1928
    %1940 = vmatmul.bf16.gmra.mxu0 %v1879
    %v1941 = vpop.f32.mrf.mxu0
    %v1942 = vadd.f32 %v1918, %v1941
    %v1943 = vpop.f32.mrf.mxu0
    %v1944 = vadd.f32 %v1918, %v1943
    %1945 = vmatmul.bf16.gmra.mxu0 %v1882
    %v1946 = vpop.f32.mrf.mxu0
    %v1947 = vadd.f32 %v1918, %v1946
    %v1948 = vpop.f32.mrf.mxu0
    %v1949 = vadd.f32 %v1918, %v1948
    %1950 = vmatmul.bf16.gmra.mxu0 %v1885
    %v1951 = vpop.f32.mrf.mxu0
    %v1952 = vadd.f32 %v1918, %v1951
    %v1953 = vpop.f32.mrf.mxu0
    %1954 = vdwg.mxu0
    %s1955 = scalar_lea.vmem [#allocation11], 16
    %v1956 = vld [vmem:[%s1955] sm:$0xf]
    %v1957 = vld [vmem:[%s1955 + $0x4] sm:$0xf]
    %v1958 = vld [vmem:[%s1955 + $0x8] sm:$0xf]
    %v1959 = vld [vmem:[%s1955 + $0xc] sm:$0xf]
    %s1960 = scalar_lea.vmem %s29, 1
    %v1961 = vld [vmem:[%s1960] sm:$0x1]
    %v1963 = vperm.slane %v1961, 0
    %v1969 = vunpack.c.l.b16 %v1956
    %v1970 = vunpack.c.l.b16 %v1957
    %v1971 = vunpack.c.l.b16 %v1958
    %v1972 = vunpack.c.l.b16 %v1959
    %v1973 = vpack.c.b16 %v1970, %v1969
    %v1974 = vpack.c.b16 %v1972, %v1971
    %1977 = vmatpush.bf16.msra.mxu0 0
    %1978 = vmatpush.bf16.msra.mxu0 0
    %1979 = vmatpush.bf16.msra.mxu0 0
    %1980 = vmatpush.bf16.msra.mxu0 0
    %1981 = vmatpush.bf16.msra.mxu0 0
    %1982 = vmatpush.bf16.msra.mxu0 0
    %1983 = vmatpush.bf16.msra.mxu0 %v1974
    %1984 = vmatpush.bf16.msra.mxu0 %v1973
    %1985 = vmatmul.bf16.gmra.mxu0 %v1879
    %v1986 = vpop.f32.mrf.mxu0
    %v1987 = vadd.f32 %v1963, %v1986
    %v1988 = vpop.f32.mrf.mxu0
    %v1989 = vadd.f32 %v1963, %v1988
    %1990 = vmatmul.bf16.gmra.mxu0 %v1882
    %v1991 = vpop.f32.mrf.mxu0
    %v1992 = vadd.f32 %v1963, %v1991
    %v1993 = vpop.f32.mrf.mxu0
    %v1994 = vadd.f32 %v1963, %v1993
    %1995 = vmatmul.bf16.gmra.mxu0 %v1885
    %v1996 = vpop.f32.mrf.mxu0
    %v1997 = vadd.f32 %v1963, %v1996
    %v1998 = vpop.f32.mrf.mxu0
    %1999 = vdwg.mxu0
    %v2000 = vmul.f32 %v1897, %v698
    %v2001 = vmul.f32 %v1899, %v699
    %v2002 = vmul.f32 %v1902, %v700
    %v2003 = vmul.f32 %v1904, %v701
    %v2004 = vmul.f32 %v1907, %v702
    %v2005 = vmul.f32 %v1897, %v703
    %v2006 = vmul.f32 %v1899, %v704
    %v2007 = vmul.f32 %v1902, %v705
    %v2008 = vmul.f32 %v1904, %v706
    %v2009 = vmul.f32 %v1907, %v707
    %v2010 = vmul.f32 %v1897, %v708
    %v2011 = vmul.f32 %v1899, %v709
    %v2012 = vmul.f32 %v1902, %v710
    %v2013 = vmul.f32 %v1904, %v711
    %v2014 = vmul.f32 %v1907, %v712
    %v2015 = vmul.f32 %v1897, %v713
    %v2016 = vmul.f32 %v1899, %v714
    %v2017 = vmul.f32 %v1902, %v715
    %v2018 = vmul.f32 %v1904, %v716
    %v2019 = vmul.f32 %v1907, %v717
    %v2020 = vpack.c.bf16 %v2001, %v2000
    %v2021 = vpack.c.bf16 %v2003, %v2002
    %v2022 = vpack.c.bf16 %v2005, %v2004
    %v2023 = vpack.c.bf16 %v2007, %v2006
    %v2024 = vpack.c.bf16 %v2009, %v2008
    %v2025 = vpack.c.bf16 %v2011, %v2010
    %v2026 = vpack.c.bf16 %v2013, %v2012
    %v2027 = vpack.c.bf16 %v2015, %v2014
    %v2028 = vpack.c.bf16 %v2017, %v2016
    %v2029 = vpack.c.bf16 %v2019, %v2018
    %v2030 = vpack.c.bf16 %v1944, %v1942
    %v2031 = vpack.c.bf16 %v1949, %v1947
    %v2032 = vpack.c.bf16 %v1952, %v1952
    %v2034 = vsel %vm741, %v2020, 0
    %v2037 = vsel %vm741, %v2021, 0
    %v2040 = vsel %vm741, %v2022, 0
    %v2043 = vsel %vm741, %v2023, 0
    %v2046 = vsel %vm741, %v2024, 0
    %v2049 = vsel %vm741, %v2025, 0
    %v2052 = vsel %vm741, %v2026, 0
    %v2055 = vsel %vm741, %v2027, 0
    %v2058 = vsel %vm741, %v2028, 0
    %v2061 = vsel %vm741, %v2029, 0
    %v2064 = vsel %vm741, %v2030, 0
    %v2067 = vsel %vm741, %v2031, 0
    %v2070 = vsel %vm741, %v2032, 0
    %2072 = vmatpush.bf16.xpose.msra.mxu0 0
    %2073 = vmatpush.bf16.xpose.msra.mxu0 0
    %2074 = vmatpush.bf16.xpose.msra.mxu0 0
    %2075 = vmatpush.bf16.xpose.msra.mxu0 0
    %2076 = vmatpush.bf16.xpose.msra.mxu0 0
    %2077 = vmatpush.bf16.xpose.msra.mxu0 %v2070
    %2078 = vmatpush.bf16.xpose.msra.mxu0 %v2067
    %2079 = vmatpush.bf16.xpose.msra.mxu0 %v2064
    %2080 = vmatmul.bf16.gmra.mxu0 %v2034
    %v2081 = vpop.f32.mrf.mxu0
    %v2082 = vadd.f32 0.0, %v2081
    %v2083 = vpop.f32.mrf.mxu0
    %v2084 = vadd.f32 0.0, %v2083
    %2085 = vmatmul.bf16.gmra.mxu0 %v2037
    %v2086 = vpop.f32.mrf.mxu0
    %v2087 = vadd.f32 0.0, %v2086
    %v2088 = vpop.f32.mrf.mxu0
    %v2089 = vadd.f32 0.0, %v2088
    %2090 = vmatmul.bf16.gmra.mxu0 %v2040
    %v2091 = vpop.f32.mrf.mxu0
    %v2092 = vadd.f32 0.0, %v2091
    %v2093 = vpop.f32.mrf.mxu0
    %v2094 = vadd.f32 0.0, %v2093
    %2095 = vmatmul.bf16.gmra.mxu0 %v2043
    %v2096 = vpop.f32.mrf.mxu0
    %v2097 = vadd.f32 0.0, %v2096
    %v2098 = vpop.f32.mrf.mxu0
    %v2099 = vadd.f32 0.0, %v2098
    %2100 = vmatmul.bf16.gmra.mxu0 %v2046
    %v2101 = vpop.f32.mrf.mxu0
    %v2102 = vadd.f32 0.0, %v2101
    %v2103 = vpop.f32.mrf.mxu0
    %v2104 = vadd.f32 0.0, %v2103
    %2105 = vmatmul.bf16.gmra.mxu0 %v2049
    %v2106 = vpop.f32.mrf.mxu0
    %v2107 = vadd.f32 0.0, %v2106
    %v2108 = vpop.f32.mrf.mxu0
    %v2109 = vadd.f32 0.0, %v2108
    %2110 = vmatmul.bf16.gmra.mxu0 %v2052
    %v2111 = vpop.f32.mrf.mxu0
    %v2112 = vadd.f32 0.0, %v2111
    %v2113 = vpop.f32.mrf.mxu0
    %v2114 = vadd.f32 0.0, %v2113
    %2115 = vmatmul.bf16.gmra.mxu0 %v2055
    %v2116 = vpop.f32.mrf.mxu0
    %v2117 = vadd.f32 0.0, %v2116
    %v2118 = vpop.f32.mrf.mxu0
    %v2119 = vadd.f32 0.0, %v2118
    %2120 = vmatmul.bf16.gmra.mxu0 %v2058
    %v2121 = vpop.f32.mrf.mxu0
    %v2122 = vadd.f32 0.0, %v2121
    %v2123 = vpop.f32.mrf.mxu0
    %v2124 = vadd.f32 0.0, %v2123
    %2125 = vmatmul.bf16.gmra.mxu0 %v2061
    %v2126 = vpop.f32.mrf.mxu0
    %v2127 = vadd.f32 0.0, %v2126
    %v2128 = vpop.f32.mrf.mxu0
    %v2129 = vadd.f32 0.0, %v2128
    %2130 = vdwg.mxu0
    %v2131 = vmul.f32 %v2082, 0.35355338
    %v2132 = vmul.f32 %v2084, 0.35355338
    %v2133 = vmul.f32 %v2087, 0.35355338
    %v2134 = vmul.f32 %v2089, 0.35355338
    %v2135 = vmul.f32 %v2092, 0.35355338
    %v2136 = vmul.f32 %v2094, 0.35355338
    %v2137 = vmul.f32 %v2097, 0.35355338
    %v2138 = vmul.f32 %v2099, 0.35355338
    %v2139 = vmul.f32 %v2102, 0.35355338
    %v2140 = vmul.f32 %v2104, 0.35355338
    %v2141 = vmul.f32 %v2107, 0.35355338
    %v2142 = vmul.f32 %v2109, 0.35355338
    %v2143 = vmul.f32 %v2112, 0.35355338
    %v2144 = vmul.f32 %v2114, 0.35355338
    %v2145 = vmul.f32 %v2117, 0.35355338
    %v2146 = vmul.f32 %v2119, 0.35355338
    %v2147 = vmul.f32 %v2122, 0.35355338
    %v2148 = vmul.f32 %v2124, 0.35355338
    %v2149 = vmul.f32 %v2127, 0.35355338
    %v2150 = vmul.f32 %v2129, 0.35355338
    %v2151 = vadd.f32 %v2131, %v534
    %v2152 = vadd.f32 %v2132, %v535
    %v2153 = vadd.f32 %v2133, %v536
    %v2154 = vadd.f32 %v2134, %v537
    %v2155 = vadd.f32 %v2135, %v538
    %v2156 = vadd.f32 %v2136, %v539
    %v2157 = vadd.f32 %v2137, %v540
    %v2158 = vadd.f32 %v2138, %v541
    %v2159 = vadd.f32 %v2139, %v542
    %v2160 = vadd.f32 %v2140, %v543
    %v2161 = vadd.f32 %v2141, %v544
    %v2162 = vadd.f32 %v2142, %v545
    %v2163 = vadd.f32 %v2143, %v546
    %v2164 = vadd.f32 %v2144, %v547
    %v2165 = vadd.f32 %v2145, %v548
    %v2166 = vadd.f32 %v2146, %v549
    %v2167 = vadd.f32 %v2147, %v550
    %v2168 = vadd.f32 %v2148, %v551
    %v2169 = vadd.f32 %v2149, %v552
    %v2170 = vadd.f32 %v2150, %v553
    %v2171 = vsel %vm1031, %v2151, -inf
    %2172 = vmax.xlane.f32.xlu0 %v2171
    %v2173 = vpop.xlane.xlu0 %2172
    %v2174 = vsel %vm1031, %v2152, -inf
    %2175 = vmax.xlane.f32.xlu0 %v2174
    %v2176 = vpop.xlane.xlu0 %2175
    %v2177 = vsel %vm1031, %v2153, -inf
    %2178 = vmax.xlane.f32.xlu0 %v2177
    %v2179 = vpop.xlane.xlu0 %2178
    %v2180 = vsel %vm1031, %v2154, -inf
    %2181 = vmax.xlane.f32.xlu0 %v2180
    %v2182 = vpop.xlane.xlu0 %2181
    %v2183 = vsel %vm1031, %v2155, -inf
    %2184 = vmax.xlane.f32.xlu0 %v2183
    %v2185 = vpop.xlane.xlu0 %2184
    %v2186 = vsel %vm1031, %v2156, -inf
    %2187 = vmax.xlane.f32.xlu0 %v2186
    %v2188 = vpop.xlane.xlu0 %2187
    %v2189 = vsel %vm1031, %v2157, -inf
    %2190 = vmax.xlane.f32.xlu0 %v2189
    %v2191 = vpop.xlane.xlu0 %2190
    %v2192 = vsel %vm1031, %v2158, -inf
    %2193 = vmax.xlane.f32.xlu0 %v2192
    %v2194 = vpop.xlane.xlu0 %2193
    %v2195 = vsel %vm1031, %v2159, -inf
    %2196 = vmax.xlane.f32.xlu0 %v2195
    %v2197 = vpop.xlane.xlu0 %2196
    %v2198 = vsel %vm1031, %v2160, -inf
    %2199 = vmax.xlane.f32.xlu0 %v2198
    %v2200 = vpop.xlane.xlu0 %2199
    %v2201 = vsel %vm1031, %v2161, -inf
    %2202 = vmax.xlane.f32.xlu0 %v2201
    %v2203 = vpop.xlane.xlu0 %2202
    %v2204 = vsel %vm1031, %v2162, -inf
    %2205 = vmax.xlane.f32.xlu0 %v2204
    %v2206 = vpop.xlane.xlu0 %2205
    %v2207 = vsel %vm1031, %v2163, -inf
    %2208 = vmax.xlane.f32.xlu0 %v2207
    %v2209 = vpop.xlane.xlu0 %2208
    %v2210 = vsel %vm1031, %v2164, -inf
    %2211 = vmax.xlane.f32.xlu0 %v2210
    %v2212 = vpop.xlane.xlu0 %2211
    %v2213 = vsel %vm1031, %v2165, -inf
    %2214 = vmax.xlane.f32.xlu0 %v2213
    %v2215 = vpop.xlane.xlu0 %2214
    %v2216 = vsel %vm1031, %v2166, -inf
    %2217 = vmax.xlane.f32.xlu0 %v2216
    %v2218 = vpop.xlane.xlu0 %2217
    %v2219 = vsel %vm1031, %v2167, -inf
    %2220 = vmax.xlane.f32.xlu0 %v2219
    %v2221 = vpop.xlane.xlu0 %2220
    %v2222 = vsel %vm1031, %v2168, -inf
    %2223 = vmax.xlane.f32.xlu0 %v2222
    %v2224 = vpop.xlane.xlu0 %2223
    %v2225 = vsel %vm1031, %v2169, -inf
    %2226 = vmax.xlane.f32.xlu0 %v2225
    %v2227 = vpop.xlane.xlu0 %2226
    %v2228 = vsel %vm1031, %v2170, -inf
    %2229 = vmax.xlane.f32.xlu0 %v2228
    %v2230 = vpop.xlane.xlu0 %2229
    %v2231 = vsub.f32 %v2151, %v2173
    %v2232 = vsub.f32 %v2152, %v2176
    %v2233 = vsub.f32 %v2153, %v2179
    %v2234 = vsub.f32 %v2154, %v2182
    %v2235 = vsub.f32 %v2155, %v2185
    %v2236 = vsub.f32 %v2156, %v2188
    %v2237 = vsub.f32 %v2157, %v2191
    %v2238 = vsub.f32 %v2158, %v2194
    %v2239 = vsub.f32 %v2159, %v2197
    %v2240 = vsub.f32 %v2160, %v2200
    %v2241 = vsub.f32 %v2161, %v2203
    %v2242 = vsub.f32 %v2162, %v2206
    %v2243 = vsub.f32 %v2163, %v2209
    %v2244 = vsub.f32 %v2164, %v2212
    %v2245 = vsub.f32 %v2165, %v2215
    %v2246 = vsub.f32 %v2166, %v2218
    %v2247 = vsub.f32 %v2167, %v2221
    %v2248 = vsub.f32 %v2168, %v2224
    %v2249 = vsub.f32 %v2169, %v2227
    %v2250 = vsub.f32 %v2170, %v2230
    %v2251 = vmul.f32 %v2231, 1.442695
    %v2252 = vpow.pop %v2251
    %v2253 = vmul.f32 %v2232, 1.442695
    %v2254 = vpow.pop %v2253
    %v2255 = vmul.f32 %v2233, 1.442695
    %v2256 = vpow.pop %v2255
    %v2257 = vmul.f32 %v2234, 1.442695
    %v2258 = vpow.pop %v2257
    %v2259 = vmul.f32 %v2235, 1.442695
    %v2260 = vpow.pop %v2259
    %v2261 = vmul.f32 %v2236, 1.442695
    %v2262 = vpow.pop %v2261
    %v2263 = vmul.f32 %v2237, 1.442695
    %v2264 = vpow.pop %v2263
    %v2265 = vmul.f32 %v2238, 1.442695
    %v2266 = vpow.pop %v2265
    %v2267 = vmul.f32 %v2239, 1.442695
    %v2268 = vpow.pop %v2267
    %v2269 = vmul.f32 %v2240, 1.442695
    %v2270 = vpow.pop %v2269
    %v2271 = vmul.f32 %v2241, 1.442695
    %v2272 = vpow.pop %v2271
    %v2273 = vmul.f32 %v2242, 1.442695
    %v2274 = vpow.pop %v2273
    %v2275 = vmul.f32 %v2243, 1.442695
    %v2276 = vpow.pop %v2275
    %v2277 = vmul.f32 %v2244, 1.442695
    %v2278 = vpow.pop %v2277
    %v2279 = vmul.f32 %v2245, 1.442695
    %v2280 = vpow.pop %v2279
    %v2281 = vmul.f32 %v2246, 1.442695
    %v2282 = vpow.pop %v2281
    %v2283 = vmul.f32 %v2247, 1.442695
    %v2284 = vpow.pop %v2283
    %v2285 = vmul.f32 %v2248, 1.442695
    %v2286 = vpow.pop %v2285
    %v2287 = vmul.f32 %v2249, 1.442695
    %v2288 = vpow.pop %v2287
    %v2289 = vmul.f32 %v2250, 1.442695
    %v2290 = vpow.pop %v2289
    %v2291 = vsel %vm1031, %v2252, 0.0
    %2292 = vadd.xlane.f32.xlu0 %v2291
    %v2293 = vpop.xlane.xlu0 %2292
    %v2294 = vsel %vm1031, %v2254, 0.0
    %2295 = vadd.xlane.f32.xlu0 %v2294
    %v2296 = vpop.xlane.xlu0 %2295
    %v2297 = vsel %vm1031, %v2256, 0.0
    %2298 = vadd.xlane.f32.xlu0 %v2297
    %v2299 = vpop.xlane.xlu0 %2298
    %v2300 = vsel %vm1031, %v2258, 0.0
    %2301 = vadd.xlane.f32.xlu0 %v2300
    %v2302 = vpop.xlane.xlu0 %2301
    %v2303 = vsel %vm1031, %v2260, 0.0
    %2304 = vadd.xlane.f32.xlu0 %v2303
    %v2305 = vpop.xlane.xlu0 %2304
    %v2306 = vsel %vm1031, %v2262, 0.0
    %2307 = vadd.xlane.f32.xlu0 %v2306
    %v2308 = vpop.xlane.xlu0 %2307
    %v2309 = vsel %vm1031, %v2264, 0.0
    %2310 = vadd.xlane.f32.xlu0 %v2309
    %v2311 = vpop.xlane.xlu0 %2310
    %v2312 = vsel %vm1031, %v2266, 0.0
    %2313 = vadd.xlane.f32.xlu0 %v2312
    %v2314 = vpop.xlane.xlu0 %2313
    %v2315 = vsel %vm1031, %v2268, 0.0
    %2316 = vadd.xlane.f32.xlu0 %v2315
    %v2317 = vpop.xlane.xlu0 %2316
    %v2318 = vsel %vm1031, %v2270, 0.0
    %2319 = vadd.xlane.f32.xlu0 %v2318
    %v2320 = vpop.xlane.xlu0 %2319
    %v2321 = vsel %vm1031, %v2272, 0.0
    %2322 = vadd.xlane.f32.xlu0 %v2321
    %v2323 = vpop.xlane.xlu0 %2322
    %v2324 = vsel %vm1031, %v2274, 0.0
    %2325 = vadd.xlane.f32.xlu0 %v2324
    %v2326 = vpop.xlane.xlu0 %2325
    %v2327 = vsel %vm1031, %v2276, 0.0
    %2328 = vadd.xlane.f32.xlu0 %v2327
    %v2329 = vpop.xlane.xlu0 %2328
    %v2330 = vsel %vm1031, %v2278, 0.0
    %2331 = vadd.xlane.f32.xlu0 %v2330
    %v2332 = vpop.xlane.xlu0 %2331
    %v2333 = vsel %vm1031, %v2280, 0.0
    %2334 = vadd.xlane.f32.xlu0 %v2333
    %v2335 = vpop.xlane.xlu0 %2334
    %v2336 = vsel %vm1031, %v2282, 0.0
    %2337 = vadd.xlane.f32.xlu0 %v2336
    %v2338 = vpop.xlane.xlu0 %2337
    %v2339 = vsel %vm1031, %v2284, 0.0
    %2340 = vadd.xlane.f32.xlu0 %v2339
    %v2341 = vpop.xlane.xlu0 %2340
    %v2342 = vsel %vm1031, %v2286, 0.0
    %2343 = vadd.xlane.f32.xlu0 %v2342
    %v2344 = vpop.xlane.xlu0 %2343
    %v2345 = vsel %vm1031, %v2288, 0.0
    %2346 = vadd.xlane.f32.xlu0 %v2345
    %v2347 = vpop.xlane.xlu0 %2346
    %v2348 = vsel %vm1031, %v2290, 0.0
    %2349 = vadd.xlane.f32.xlu0 %v2348
    %v2350 = vpop.xlane.xlu0 %2349
    %v2351 = vrcp.pop %v2293
    %v2352 = vrcp.pop %v2296
    %v2353 = vrcp.pop %v2299
    %v2354 = vrcp.pop %v2302
    %v2355 = vrcp.pop %v2305
    %v2356 = vrcp.pop %v2308
    %v2357 = vrcp.pop %v2311
    %v2358 = vrcp.pop %v2314
    %v2359 = vrcp.pop %v2317
    %v2360 = vrcp.pop %v2320
    %v2361 = vrcp.pop %v2323
    %v2362 = vrcp.pop %v2326
    %v2363 = vrcp.pop %v2329
    %v2364 = vrcp.pop %v2332
    %v2365 = vrcp.pop %v2335
    %v2366 = vrcp.pop %v2338
    %v2367 = vrcp.pop %v2341
    %v2368 = vrcp.pop %v2344
    %v2369 = vrcp.pop %v2347
    %v2370 = vrcp.pop %v2350
    %v2371 = vmul.f32 %v2252, %v2351
    %v2372 = vmul.f32 %v2254, %v2352
    %v2373 = vmul.f32 %v2256, %v2353
    %v2374 = vmul.f32 %v2258, %v2354
    %v2375 = vmul.f32 %v2260, %v2355
    %v2376 = vmul.f32 %v2262, %v2356
    %v2377 = vmul.f32 %v2264, %v2357
    %v2378 = vmul.f32 %v2266, %v2358
    %v2379 = vmul.f32 %v2268, %v2359
    %v2380 = vmul.f32 %v2270, %v2360
    %v2381 = vmul.f32 %v2272, %v2361
    %v2382 = vmul.f32 %v2274, %v2362
    %v2383 = vmul.f32 %v2276, %v2363
    %v2384 = vmul.f32 %v2278, %v2364
    %v2385 = vmul.f32 %v2280, %v2365
    %v2386 = vmul.f32 %v2282, %v2366
    %v2387 = vmul.f32 %v2284, %v2367
    %v2388 = vmul.f32 %v2286, %v2368
    %v2389 = vmul.f32 %v2288, %v2369
    %v2390 = vmul.f32 %v2290, %v2370
    %v2391 = vpack.c.bf16 %v2372, %v2371
    %v2392 = vpack.c.bf16 %v2374, %v2373
    %v2393 = vpack.c.bf16 %v2376, %v2375
    %v2394 = vpack.c.bf16 %v2378, %v2377
    %v2395 = vpack.c.bf16 %v2380, %v2379
    %v2396 = vpack.c.bf16 %v2382, %v2381
    %v2397 = vpack.c.bf16 %v2384, %v2383
    %v2398 = vpack.c.bf16 %v2386, %v2385
    %v2399 = vpack.c.bf16 %v2388, %v2387
    %v2400 = vpack.c.bf16 %v2390, %v2389
    %v2401 = vpack.c.bf16 %v1989, %v1987
    %v2402 = vpack.c.bf16 %v1994, %v1992
    %v2403 = vpack.c.bf16 %v1997, %v1997
    %v2405 = vsel %vm1031, %v2391, 0
    %v2408 = vsel %vm1031, %v2392, 0
    %v2411 = vsel %vm1031, %v2393, 0
    %v2414 = vsel %vm1031, %v2394, 0
    %v2417 = vsel %vm1031, %v2395, 0
    %v2420 = vsel %vm1031, %v2396, 0
    %v2423 = vsel %vm1031, %v2397, 0
    %v2426 = vsel %vm1031, %v2398, 0
    %v2429 = vsel %vm1031, %v2399, 0
    %v2432 = vsel %vm1031, %v2400, 0
    %v2435 = vsel %vm1295, %v2403, 0
    %2437 = vmatpush.bf16.msra.mxu0 0
    %2438 = vmatpush.bf16.msra.mxu0 0
    %2439 = vmatpush.bf16.msra.mxu0 0
    %2440 = vmatpush.bf16.msra.mxu0 0
    %2441 = vmatpush.bf16.msra.mxu0 0
    %2442 = vmatpush.bf16.msra.mxu0 %v2435
    %2443 = vmatpush.bf16.msra.mxu0 %v2402
    %2444 = vmatpush.bf16.msra.mxu0 %v2401
    %2445 = vmatmul.bf16.gmra.mxu0 %v2405
    %v2446 = vpop.f32.mrf.mxu0
    %v2447 = vadd.f32 0.0, %v2446
    %v2448 = vpop.f32.mrf.mxu0
    %v2449 = vadd.f32 0.0, %v2448
    %2450 = vmatmul.bf16.gmra.mxu0 %v2408
    %v2451 = vpop.f32.mrf.mxu0
    %v2452 = vadd.f32 0.0, %v2451
    %v2453 = vpop.f32.mrf.mxu0
    %v2454 = vadd.f32 0.0, %v2453
    %2455 = vmatmul.bf16.gmra.mxu0 %v2411
    %v2456 = vpop.f32.mrf.mxu0
    %v2457 = vadd.f32 0.0, %v2456
    %v2458 = vpop.f32.mrf.mxu0
    %v2459 = vadd.f32 0.0, %v2458
    %2460 = vmatmul.bf16.gmra.mxu0 %v2414
    %v2461 = vpop.f32.mrf.mxu0
    %v2462 = vadd.f32 0.0, %v2461
    %v2463 = vpop.f32.mrf.mxu0
    %v2464 = vadd.f32 0.0, %v2463
    %2465 = vmatmul.bf16.gmra.mxu0 %v2417
    %v2466 = vpop.f32.mrf.mxu0
    %v2467 = vadd.f32 0.0, %v2466
    %v2468 = vpop.f32.mrf.mxu0
    %v2469 = vadd.f32 0.0, %v2468
    %2470 = vmatmul.bf16.gmra.mxu0 %v2420
    %v2471 = vpop.f32.mrf.mxu0
    %v2472 = vadd.f32 0.0, %v2471
    %v2473 = vpop.f32.mrf.mxu0
    %v2474 = vadd.f32 0.0, %v2473
    %2475 = vmatmul.bf16.gmra.mxu0 %v2423
    %v2476 = vpop.f32.mrf.mxu0
    %v2477 = vadd.f32 0.0, %v2476
    %v2478 = vpop.f32.mrf.mxu0
    %v2479 = vadd.f32 0.0, %v2478
    %2480 = vmatmul.bf16.gmra.mxu0 %v2426
    %v2481 = vpop.f32.mrf.mxu0
    %v2482 = vadd.f32 0.0, %v2481
    %v2483 = vpop.f32.mrf.mxu0
    %v2484 = vadd.f32 0.0, %v2483
    %2485 = vmatmul.bf16.gmra.mxu0 %v2429
    %v2486 = vpop.f32.mrf.mxu0
    %v2487 = vadd.f32 0.0, %v2486
    %v2488 = vpop.f32.mrf.mxu0
    %v2489 = vadd.f32 0.0, %v2488
    %2490 = vmatmul.bf16.gmra.mxu0 %v2432
    %v2491 = vpop.f32.mrf.mxu0
    %v2492 = vadd.f32 0.0, %v2491
    %v2493 = vpop.f32.mrf.mxu0
    %v2494 = vadd.f32 0.0, %v2493
    %2495 = vdwg.mxu0
    %v2496 = vmul.f32 %v2447, %v698
    %v2497 = vmul.f32 %v2449, %v699
    %v2498 = vmul.f32 %v2452, %v700
    %v2499 = vmul.f32 %v2454, %v701
    %v2500 = vmul.f32 %v2457, %v702
    %v2501 = vmul.f32 %v2459, %v703
    %v2502 = vmul.f32 %v2462, %v704
    %v2503 = vmul.f32 %v2464, %v705
    %v2504 = vmul.f32 %v2467, %v706
    %v2505 = vmul.f32 %v2469, %v707
    %v2506 = vmul.f32 %v2472, %v708
    %v2507 = vmul.f32 %v2474, %v709
    %v2508 = vmul.f32 %v2477, %v710
    %v2509 = vmul.f32 %v2479, %v711
    %v2510 = vmul.f32 %v2482, %v712
    %v2511 = vmul.f32 %v2484, %v713
    %v2512 = vmul.f32 %v2487, %v714
    %v2513 = vmul.f32 %v2489, %v715
    %v2514 = vmul.f32 %v2492, %v716
    %v2515 = vmul.f32 %v2494, %v717
    %v2516 = vadd.f32 %v2496, %v2501
    %v2517 = vadd.f32 %v2497, %v2502
    %v2518 = vadd.f32 %v2498, %v2503
    %v2519 = vadd.f32 %v2499, %v2504
    %v2520 = vadd.f32 %v2500, %v2505
    %v2521 = vadd.f32 %v2516, %v2506
    %v2522 = vadd.f32 %v2517, %v2507
    %v2523 = vadd.f32 %v2518, %v2508
    %v2524 = vadd.f32 %v2519, %v2509
    %v2525 = vadd.f32 %v2520, %v2510
    %v2526 = vadd.f32 %v2521, %v2511
    %v2527 = vadd.f32 %v2522, %v2512
    %v2528 = vadd.f32 %v2523, %v2513
    %v2529 = vadd.f32 %v2524, %v2514
    %v2530 = vadd.f32 %v2525, %v2515
    %s2531 = scalar_lea.vmem [#allocation13], 16
    %v2532 = vld [vmem:[%s2531] sm:$0xf]
    %v2533 = vld [vmem:[%s2531 + $0x4] sm:$0xf]
    %v2534 = vld [vmem:[%s2531 + $0x8] sm:$0xf]
    %v2535 = vld [vmem:[%s2531 + $0xc] sm:$0xf]
    %v2536 = vpack.c.bf16 %v2527, %v2526
    %v2537 = vpack.c.bf16 %v2529, %v2528
    %v2538 = vpack.c.bf16 %v2530, %v2530
    %s2539 = scalar_lea.vmem %s33, 1
    %v2540 = vld [vmem:[%s2539] sm:$0x1]
    %v2542 = vperm.slane %v2540, 0
    %v2548 = vunpack.c.l.b16 %v2532
    %v2549 = vunpack.c.l.b16 %v2533
    %v2550 = vunpack.c.l.b16 %v2534
    %v2551 = vunpack.c.l.b16 %v2535
    %v2552 = vpack.c.b16 %v2549, %v2548
    %v2553 = vpack.c.b16 %v2551, %v2550
    %v2557 = vsel %vm741, %v2536, 0
    %v2560 = vsel %vm741, %v2537, 0
    %v2563 = vsel %vm741, %v2538, 0
    %2565 = vmatpush.bf16.msra.mxu0 0
    %2566 = vmatpush.bf16.msra.mxu0 0
    %2567 = vmatpush.bf16.msra.mxu0 0
    %2568 = vmatpush.bf16.msra.mxu0 0
    %2569 = vmatpush.bf16.msra.mxu0 0
    %2570 = vmatpush.bf16.msra.mxu0 0
    %2571 = vmatpush.bf16.msra.mxu0 %v2553
    %2572 = vmatpush.bf16.msra.mxu0 %v2552
    %2573 = vmatmul.bf16.gmra.mxu0 %v2557
    %v2574 = vpop.f32.mrf.mxu0
    %v2575 = vadd.f32 %v2542, %v2574
    %v2576 = vpop.f32.mrf.mxu0
    %v2577 = vadd.f32 %v2542, %v2576
    %2578 = vmatmul.bf16.gmra.mxu0 %v2560
    %v2579 = vpop.f32.mrf.mxu0
    %v2580 = vadd.f32 %v2542, %v2579
    %v2581 = vpop.f32.mrf.mxu0
    %v2582 = vadd.f32 %v2542, %v2581
    %2583 = vmatmul.bf16.gmra.mxu0 %v2563
    %v2584 = vpop.f32.mrf.mxu0
    %v2585 = vadd.f32 %v2542, %v2584
    %v2586 = vpop.f32.mrf.mxu0
    %2587 = vdwg.mxu0
    %v2588 = vadd.f32 %v1848, %v2575
    %v2589 = vadd.f32 %v1849, %v2577
    %v2590 = vadd.f32 %v1850, %v2580
    %v2591 = vadd.f32 %v1851, %v2582
    %v2592 = vadd.f32 %v1852, %v2585
    %s2593 = scalar_lea.vmem %s35, 1
    %v2594 = vld [vmem:[%s2593] sm:$0x1]
    %s2595 = scalar_lea.vmem %s37, 1
    %v2596 = vld [vmem:[%s2595] sm:$0x1]
    %v2597 = vsel %vm741, %v2588, 0.0
    %2598 = vadd.xlane.f32.xlu0 %v2597
    %v2599 = vpop.xlane.xlu0 %2598
    %v2600 = vsel %vm741, %v2589, 0.0
    %2601 = vadd.xlane.f32.xlu0 %v2600
    %v2602 = vpop.xlane.xlu0 %2601
    %v2603 = vsel %vm741, %v2590, 0.0
    %2604 = vadd.xlane.f32.xlu0 %v2603
    %v2605 = vpop.xlane.xlu0 %2604
    %v2606 = vsel %vm741, %v2591, 0.0
    %2607 = vadd.xlane.f32.xlu0 %v2606
    %v2608 = vpop.xlane.xlu0 %2607
    %v2609 = vsel %vm741, %v2592, 0.0
    %2610 = vadd.xlane.f32.xlu0 %v2609
    %v2611 = vpop.xlane.xlu0 %2610
    %v2612 = vmul.f32 %v2599, %v1476
    %v2613 = vmul.f32 %v2602, %v1476
    %v2614 = vmul.f32 %v2605, %v1476
    %v2615 = vmul.f32 %v2608, %v1476
    %v2616 = vmul.f32 %v2611, %v1476
    %v2617 = vsub.f32 %v2588, %v2612
    %v2618 = vsub.f32 %v2589, %v2613
    %v2619 = vsub.f32 %v2590, %v2614
    %v2620 = vsub.f32 %v2591, %v2615
    %v2621 = vsub.f32 %v2592, %v2616
    %v2622 = vmul.f32 %v2617, %v2617
    %v2623 = vmul.f32 %v2618, %v2618
    %v2624 = vmul.f32 %v2619, %v2619
    %v2625 = vmul.f32 %v2620, %v2620
    %v2626 = vmul.f32 %v2621, %v2621
    %v2627 = vsel %vm741, %v2622, 0.0
    %2628 = vadd.xlane.f32.xlu0 %v2627
    %v2629 = vpop.xlane.xlu0 %2628
    %v2630 = vsel %vm741, %v2623, 0.0
    %2631 = vadd.xlane.f32.xlu0 %v2630
    %v2632 = vpop.xlane.xlu0 %2631
    %v2633 = vsel %vm741, %v2624, 0.0
    %2634 = vadd.xlane.f32.xlu0 %v2633
    %v2635 = vpop.xlane.xlu0 %2634
    %v2636 = vsel %vm741, %v2625, 0.0
    %2637 = vadd.xlane.f32.xlu0 %v2636
    %v2638 = vpop.xlane.xlu0 %2637
    %v2639 = vsel %vm741, %v2626, 0.0
    %2640 = vadd.xlane.f32.xlu0 %v2639
    %v2641 = vpop.xlane.xlu0 %2640
    %v2642 = vmul.f32 %v2629, %v1476
    %v2643 = vmul.f32 %v2632, %v1476
    %v2644 = vmul.f32 %v2635, %v1476
    %v2645 = vmul.f32 %v2638, %v1476
    %v2646 = vmul.f32 %v2641, %v1476
    %v2647 = vadd.f32 %v2642, 1e-05
    %v2648 = vadd.f32 %v2643, 1e-05
    %v2649 = vadd.f32 %v2644, 1e-05
    %v2650 = vadd.f32 %v2645, 1e-05
    %v2651 = vadd.f32 %v2646, 1e-05
    %v2652 = vrsqrt.pop %v2647
    %v2653 = vmul.f32 %v2652, %v2647
    %v2654 = vmul.f32 %v2653, %v2652
    %v2655 = vmul.f32 0.5, %v2654
    %v2656 = vsub.f32 1.5, %v2655
    %v2657 = vmul.f32 %v2652, %v2656
    %vm2658 = vweird.f32 %v2647
    %vm2659 = vweird.f32 %v2652
    %vm2660 = vmor %vm2658, %vm2659
    %v2661 = vsel %vm2660, %v2652, %v2657
    %v2662 = vrsqrt.pop %v2648
    %v2663 = vmul.f32 %v2662, %v2648
    %v2664 = vmul.f32 %v2663, %v2662
    %v2665 = vmul.f32 0.5, %v2664
    %v2666 = vsub.f32 1.5, %v2665
    %v2667 = vmul.f32 %v2662, %v2666
    %vm2668 = vweird.f32 %v2648
    %vm2669 = vweird.f32 %v2662
    %vm2670 = vmor %vm2668, %vm2669
    %v2671 = vsel %vm2670, %v2662, %v2667
    %v2672 = vrsqrt.pop %v2649
    %v2673 = vmul.f32 %v2672, %v2649
    %v2674 = vmul.f32 %v2673, %v2672
    %v2675 = vmul.f32 0.5, %v2674
    %v2676 = vsub.f32 1.5, %v2675
    %v2677 = vmul.f32 %v2672, %v2676
    %vm2678 = vweird.f32 %v2649
    %vm2679 = vweird.f32 %v2672
    %vm2680 = vmor %vm2678, %vm2679
    %v2681 = vsel %vm2680, %v2672, %v2677
    %v2682 = vrsqrt.pop %v2650
    %v2683 = vmul.f32 %v2682, %v2650
    %v2684 = vmul.f32 %v2683, %v2682
    %v2685 = vmul.f32 0.5, %v2684
    %v2686 = vsub.f32 1.5, %v2685
    %v2687 = vmul.f32 %v2682, %v2686
    %vm2688 = vweird.f32 %v2650
    %vm2689 = vweird.f32 %v2682
    %vm2690 = vmor %vm2688, %vm2689
    %v2691 = vsel %vm2690, %v2682, %v2687
    %v2692 = vrsqrt.pop %v2651
    %v2693 = vmul.f32 %v2692, %v2651
    %v2694 = vmul.f32 %v2693, %v2692
    %v2695 = vmul.f32 0.5, %v2694
    %v2696 = vsub.f32 1.5, %v2695
    %v2697 = vmul.f32 %v2692, %v2696
    %vm2698 = vweird.f32 %v2651
    %vm2699 = vweird.f32 %v2692
    %vm2700 = vmor %vm2698, %vm2699
    %v2701 = vsel %vm2700, %v2692, %v2697
    %v2702 = vmul.f32 %v2617, %v2661
    %v2703 = vmul.f32 %v2618, %v2671
    %v2704 = vmul.f32 %v2619, %v2681
    %v2705 = vmul.f32 %v2620, %v2691
    %v2706 = vmul.f32 %v2621, %v2701
    %v2708 = vperm.slane %v2594, 0
    %v2710 = vmul.f32 %v2702, %v2708
    %v2711 = vmul.f32 %v2703, %v2708
    %v2712 = vmul.f32 %v2704, %v2708
    %v2713 = vmul.f32 %v2705, %v2708
    %v2714 = vmul.f32 %v2706, %v2708
    %v2716 = vperm.slane %v2596, 0
    %v2718 = vadd.f32 %v2710, %v2716
    %v2719 = vadd.f32 %v2711, %v2716
    %v2720 = vadd.f32 %v2712, %v2716
    %v2721 = vadd.f32 %v2713, %v2716
    %v2722 = vadd.f32 %v2714, %v2716
    %s2723 = scalar_lea.vmem %s39, 16
    %v2724 = vld [vmem:[%s2723] sm:$0xf]
    %v2725 = vld [vmem:[%s2723 + $0x4] sm:$0xf]
    %v2726 = vld [vmem:[%s2723 + $0x8] sm:$0xf]
    %v2727 = vld [vmem:[%s2723 + $0xc] sm:$0xf]
    %v2728 = vpack.c.bf16 %v2719, %v2718
    %v2729 = vpack.c.bf16 %v2721, %v2720
    %v2730 = vpack.c.bf16 %v2722, %v2722
    %s2731 = scalar_lea.vmem %s41, 1
    %v2732 = vld [vmem:[%s2731] sm:$0x1]
    %v2734 = vperm.slane %v2732, 0
    %v2740 = vunpack.c.l.b16 %v2724
    %v2741 = vunpack.c.l.b16 %v2725
    %v2742 = vunpack.c.l.b16 %v2726
    %v2743 = vunpack.c.l.b16 %v2727
    %v2744 = vpack.c.b16 %v2741, %v2740
    %v2745 = vpack.c.b16 %v2743, %v2742
    %v2749 = vsel %vm741, %v2728, 0
    %v2752 = vsel %vm741, %v2729, 0
    %v2755 = vsel %vm741, %v2730, 0
    %2757 = vmatpush.bf16.msra.mxu0 0
    %2758 = vmatpush.bf16.msra.mxu0 0
    %2759 = vmatpush.bf16.msra.mxu0 0
    %2760 = vmatpush.bf16.msra.mxu0 0
    %2761 = vmatpush.bf16.msra.mxu0 0
    %2762 = vmatpush.bf16.msra.mxu0 0
    %2763 = vmatpush.bf16.msra.mxu0 %v2745
    %2764 = vmatpush.bf16.msra.mxu0 %v2744
    %2765 = vmatmul.bf16.gmra.mxu0 %v2749
    %v2766 = vpop.f32.mrf.mxu0
    %v2767 = vadd.f32 %v2734, %v2766
    %v2768 = vpop.f32.mrf.mxu0
    %v2769 = vadd.f32 %v2734, %v2768
    %2770 = vmatmul.bf16.gmra.mxu0 %v2752
    %v2771 = vpop.f32.mrf.mxu0
    %v2772 = vadd.f32 %v2734, %v2771
    %v2773 = vpop.f32.mrf.mxu0
    %v2774 = vadd.f32 %v2734, %v2773
    %2775 = vmatmul.bf16.gmra.mxu0 %v2755
    %v2776 = vpop.f32.mrf.mxu0
    %v2777 = vadd.f32 %v2734, %v2776
    %v2778 = vpop.f32.mrf.mxu0
    %2779 = vdwg.mxu0
    %v2780 = vmax.f32 %v2767, 0.0
    %v2781 = vmax.f32 %v2769, 0.0
    %v2782 = vmax.f32 %v2772, 0.0
    %v2783 = vmax.f32 %v2774, 0.0
    %v2784 = vmax.f32 %v2777, 0.0
    %s2785 = scalar_lea.vmem [#allocation14], 32
    %v2786 = vld [vmem:[%s2785] sm:$0xf]
    %v2787 = vld [vmem:[%s2785 + $0x4] sm:$0xf]
    %v2788 = vld [vmem:[%s2785 + $0x8] sm:$0xf]
    %v2789 = vld [vmem:[%s2785 + $0xc] sm:$0xf]
    %v2790 = vld [vmem:[%s2785 + $0x10] sm:$0xf]
    %v2791 = vld [vmem:[%s2785 + $0x14] sm:$0xf]
    %v2792 = vld [vmem:[%s2785 + $0x18] sm:$0xf]
    %v2793 = vld [vmem:[%s2785 + $0x1c] sm:$0xf]
    %v2794 = vpack.c.bf16 %v2781, %v2780
    %v2795 = vpack.c.bf16 %v2783, %v2782
    %v2796 = vpack.c.bf16 %v2784, %v2784
    %s2797 = scalar_lea.vmem %s45, 1
    %v2798 = vld [vmem:[%s2797] sm:$0x1]
    %v2800 = vperm.slane %v2798, 0
    %v2810 = vunpack.c.l.b16 %v2786
    %v2811 = vunpack.c.l.b16 %v2787
    %v2812 = vunpack.c.l.b16 %v2788
    %v2813 = vunpack.c.l.b16 %v2789
    %v2814 = vunpack.c.l.b16 %v2790
    %v2815 = vunpack.c.l.b16 %v2791
    %v2816 = vunpack.c.l.b16 %v2792
    %v2817 = vunpack.c.l.b16 %v2793
    %v2818 = vpack.c.b16 %v2811, %v2810
    %v2819 = vpack.c.b16 %v2813, %v2812
    %v2820 = vpack.c.b16 %v2815, %v2814
    %v2821 = vpack.c.b16 %v2817, %v2816
    %v2827 = vsel %vm1687, %v2794, 0
    %v2830 = vsel %vm1687, %v2795, 0
    %v2833 = vsel %vm1687, %v2796, 0
    %2835 = vmatpush.bf16.msra.mxu0 0
    %2836 = vmatpush.bf16.msra.mxu0 0
    %2837 = vmatpush.bf16.msra.mxu0 0
    %2838 = vmatpush.bf16.msra.mxu0 0
    %2839 = vmatpush.bf16.msra.mxu0 %v2821
    %2840 = vmatpush.bf16.msra.mxu0 %v2820
    %2841 = vmatpush.bf16.msra.mxu0 %v2819
    %2842 = vmatpush.bf16.msra.mxu0 %v2818
    %2843 = vmatmul.bf16.gmra.mxu0 %v2827
    %v2844 = vpop.f32.mrf.mxu0
    %v2845 = vadd.f32 %v2800, %v2844
    %v2846 = vpop.f32.mrf.mxu0
    %v2847 = vadd.f32 %v2800, %v2846
    %2848 = vmatmul.bf16.gmra.mxu0 %v2830
    %v2849 = vpop.f32.mrf.mxu0
    %v2850 = vadd.f32 %v2800, %v2849
    %v2851 = vpop.f32.mrf.mxu0
    %v2852 = vadd.f32 %v2800, %v2851
    %2853 = vmatmul.bf16.gmra.mxu0 %v2833
    %v2854 = vpop.f32.mrf.mxu0
    %v2855 = vadd.f32 %v2800, %v2854
    %v2856 = vpop.f32.mrf.mxu0
    %2857 = vdwg.mxu0
    %v2858 = vadd.f32 %v2718, %v2845
    %v2859 = vadd.f32 %v2719, %v2847
    %v2860 = vadd.f32 %v2720, %v2850
    %v2861 = vadd.f32 %v2721, %v2852
    %v2862 = vadd.f32 %v2722, %v2855
    %s2863 = scalar_lea.vmem %s47, 1
    %v2864 = vld [vmem:[%s2863] sm:$0x1]
    %s2865 = scalar_lea.vmem %s49, 1
    %v2866 = vld [vmem:[%s2865] sm:$0x1]
    %v2867 = vsel %vm741, %v2858, 0.0
    %2868 = vadd.xlane.f32.xlu0 %v2867
    %v2869 = vpop.xlane.xlu0 %2868
    %v2870 = vsel %vm741, %v2859, 0.0
    %2871 = vadd.xlane.f32.xlu0 %v2870
    %v2872 = vpop.xlane.xlu0 %2871
    %v2873 = vsel %vm741, %v2860, 0.0
    %2874 = vadd.xlane.f32.xlu0 %v2873
    %v2875 = vpop.xlane.xlu0 %2874
    %v2876 = vsel %vm741, %v2861, 0.0
    %2877 = vadd.xlane.f32.xlu0 %v2876
    %v2878 = vpop.xlane.xlu0 %2877
    %v2879 = vsel %vm741, %v2862, 0.0
    %2880 = vadd.xlane.f32.xlu0 %v2879
    %v2881 = vpop.xlane.xlu0 %2880
    %v2882 = vmul.f32 %v2869, %v1476
    %v2883 = vmul.f32 %v2872, %v1476
    %v2884 = vmul.f32 %v2875, %v1476
    %v2885 = vmul.f32 %v2878, %v1476
    %v2886 = vmul.f32 %v2881, %v1476
    %v2887 = vsub.f32 %v2858, %v2882
    %v2888 = vsub.f32 %v2859, %v2883
    %v2889 = vsub.f32 %v2860, %v2884
    %v2890 = vsub.f32 %v2861, %v2885
    %v2891 = vsub.f32 %v2862, %v2886
    %v2892 = vmul.f32 %v2887, %v2887
    %v2893 = vmul.f32 %v2888, %v2888
    %v2894 = vmul.f32 %v2889, %v2889
    %v2895 = vmul.f32 %v2890, %v2890
    %v2896 = vmul.f32 %v2891, %v2891
    %v2897 = vsel %vm741, %v2892, 0.0
    %2898 = vadd.xlane.f32.xlu0 %v2897
    %v2899 = vpop.xlane.xlu0 %2898
    %v2900 = vsel %vm741, %v2893, 0.0
    %2901 = vadd.xlane.f32.xlu0 %v2900
    %v2902 = vpop.xlane.xlu0 %2901
    %v2903 = vsel %vm741, %v2894, 0.0
    %2904 = vadd.xlane.f32.xlu0 %v2903
    %v2905 = vpop.xlane.xlu0 %2904
    %v2906 = vsel %vm741, %v2895, 0.0
    %2907 = vadd.xlane.f32.xlu0 %v2906
    %v2908 = vpop.xlane.xlu0 %2907
    %v2909 = vsel %vm741, %v2896, 0.0
    %2910 = vadd.xlane.f32.xlu0 %v2909
    %v2911 = vpop.xlane.xlu0 %2910
    %v2912 = vmul.f32 %v2899, %v1476
    %v2913 = vmul.f32 %v2902, %v1476
    %v2914 = vmul.f32 %v2905, %v1476
    %v2915 = vmul.f32 %v2908, %v1476
    %v2916 = vmul.f32 %v2911, %v1476
    %v2917 = vadd.f32 %v2912, 1e-05
    %v2918 = vadd.f32 %v2913, 1e-05
    %v2919 = vadd.f32 %v2914, 1e-05
    %v2920 = vadd.f32 %v2915, 1e-05
    %v2921 = vadd.f32 %v2916, 1e-05
    %v2922 = vrsqrt.pop %v2917
    %v2923 = vmul.f32 %v2922, %v2917
    %v2924 = vmul.f32 %v2923, %v2922
    %v2925 = vmul.f32 0.5, %v2924
    %v2926 = vsub.f32 1.5, %v2925
    %v2927 = vmul.f32 %v2922, %v2926
    %vm2928 = vweird.f32 %v2917
    %vm2929 = vweird.f32 %v2922
    %vm2930 = vmor %vm2928, %vm2929
    %v2931 = vsel %vm2930, %v2922, %v2927
    %v2932 = vrsqrt.pop %v2918
    %v2933 = vmul.f32 %v2932, %v2918
    %v2934 = vmul.f32 %v2933, %v2932
    %v2935 = vmul.f32 0.5, %v2934
    %v2936 = vsub.f32 1.5, %v2935
    %v2937 = vmul.f32 %v2932, %v2936
    %vm2938 = vweird.f32 %v2918
    %vm2939 = vweird.f32 %v2932
    %vm2940 = vmor %vm2938, %vm2939
    %v2941 = vsel %vm2940, %v2932, %v2937
    %v2942 = vrsqrt.pop %v2919
    %v2943 = vmul.f32 %v2942, %v2919
    %v2944 = vmul.f32 %v2943, %v2942
    %v2945 = vmul.f32 0.5, %v2944
    %v2946 = vsub.f32 1.5, %v2945
    %v2947 = vmul.f32 %v2942, %v2946
    %vm2948 = vweird.f32 %v2919
    %vm2949 = vweird.f32 %v2942
    %vm2950 = vmor %vm2948, %vm2949
    %v2951 = vsel %vm2950, %v2942, %v2947
    %v2952 = vrsqrt.pop %v2920
    %v2953 = vmul.f32 %v2952, %v2920
    %v2954 = vmul.f32 %v2953, %v2952
    %v2955 = vmul.f32 0.5, %v2954
    %v2956 = vsub.f32 1.5, %v2955
    %v2957 = vmul.f32 %v2952, %v2956
    %vm2958 = vweird.f32 %v2920
    %vm2959 = vweird.f32 %v2952
    %vm2960 = vmor %vm2958, %vm2959
    %v2961 = vsel %vm2960, %v2952, %v2957
    %v2962 = vrsqrt.pop %v2921
    %v2963 = vmul.f32 %v2962, %v2921
    %v2964 = vmul.f32 %v2963, %v2962
    %v2965 = vmul.f32 0.5, %v2964
    %v2966 = vsub.f32 1.5, %v2965
    %v2967 = vmul.f32 %v2962, %v2966
    %vm2968 = vweird.f32 %v2921
    %vm2969 = vweird.f32 %v2962
    %vm2970 = vmor %vm2968, %vm2969
    %v2971 = vsel %vm2970, %v2962, %v2967
    %v2972 = vmul.f32 %v2887, %v2931
    %v2973 = vmul.f32 %v2888, %v2941
    %v2974 = vmul.f32 %v2889, %v2951
    %v2975 = vmul.f32 %v2890, %v2961
    %v2976 = vmul.f32 %v2891, %v2971
    %v2978 = vperm.slane %v2864, 0
    %v2980 = vmul.f32 %v2972, %v2978
    %v2981 = vmul.f32 %v2973, %v2978
    %v2982 = vmul.f32 %v2974, %v2978
    %v2983 = vmul.f32 %v2975, %v2978
    %v2984 = vmul.f32 %v2976, %v2978
    %v2986 = vperm.slane %v2866, 0
    %v2988 = vadd.f32 %v2980, %v2986
    %v2989 = vadd.f32 %v2981, %v2986
    %v2990 = vadd.f32 %v2982, %v2986
    %v2991 = vadd.f32 %v2983, %v2986
    %v2992 = vadd.f32 %v2984, %v2986
    %v2993 = vld [vmem:[%s51] sm:$0x1]
    %v2994 = vld [vmem:[%s53] sm:$0x1]
    %v2995 = vsel %vm741, %v2988, 0.0
    %2996 = vadd.xlane.f32.xlu0 %v2995
    %v2997 = vpop.xlane.xlu0 %2996
    %v2998 = vsel %vm741, %v2989, 0.0
    %2999 = vadd.xlane.f32.xlu0 %v2998
    %v3000 = vpop.xlane.xlu0 %2999
    %v3001 = vsel %vm741, %v2990, 0.0
    %3002 = vadd.xlane.f32.xlu0 %v3001
    %v3003 = vpop.xlane.xlu0 %3002
    %v3004 = vsel %vm741, %v2991, 0.0
    %3005 = vadd.xlane.f32.xlu0 %v3004
    %v3006 = vpop.xlane.xlu0 %3005
    %v3007 = vsel %vm741, %v2992, 0.0
    %3008 = vadd.xlane.f32.xlu0 %v3007
    %v3009 = vpop.xlane.xlu0 %3008
    %v3010 = vmul.f32 %v2997, %v1476
    %v3011 = vmul.f32 %v3000, %v1476
    %v3012 = vmul.f32 %v3003, %v1476
    %v3013 = vmul.f32 %v3006, %v1476
    %v3014 = vmul.f32 %v3009, %v1476
    %v3015 = vsub.f32 %v2988, %v3010
    %v3016 = vsub.f32 %v2989, %v3011
    %v3017 = vsub.f32 %v2990, %v3012
    %v3018 = vsub.f32 %v2991, %v3013
    %v3019 = vsub.f32 %v2992, %v3014
    %v3020 = vmul.f32 %v3015, %v3015
    %v3021 = vmul.f32 %v3016, %v3016
    %v3022 = vmul.f32 %v3017, %v3017
    %v3023 = vmul.f32 %v3018, %v3018
    %v3024 = vmul.f32 %v3019, %v3019
    %v3025 = vsel %vm741, %v3020, 0.0
    %3026 = vadd.xlane.f32.xlu0 %v3025
    %v3027 = vpop.xlane.xlu0 %3026
    %v3028 = vsel %vm741, %v3021, 0.0
    %3029 = vadd.xlane.f32.xlu0 %v3028
    %v3030 = vpop.xlane.xlu0 %3029
    %v3031 = vsel %vm741, %v3022, 0.0
    %3032 = vadd.xlane.f32.xlu0 %v3031
    %v3033 = vpop.xlane.xlu0 %3032
    %v3034 = vsel %vm741, %v3023, 0.0
    %3035 = vadd.xlane.f32.xlu0 %v3034
    %v3036 = vpop.xlane.xlu0 %3035
    %v3037 = vsel %vm741, %v3024, 0.0
    %3038 = vadd.xlane.f32.xlu0 %v3037
    %v3039 = vpop.xlane.xlu0 %3038
    %v3040 = vmul.f32 %v3027, %v1476
    %v3041 = vmul.f32 %v3030, %v1476
    %v3042 = vmul.f32 %v3033, %v1476
    %v3043 = vmul.f32 %v3036, %v1476
    %v3044 = vmul.f32 %v3039, %v1476
    %v3045 = vadd.f32 %v3040, 1e-05
    %v3046 = vadd.f32 %v3041, 1e-05
    %v3047 = vadd.f32 %v3042, 1e-05
    %v3048 = vadd.f32 %v3043, 1e-05
    %v3049 = vadd.f32 %v3044, 1e-05
    %v3050 = vrsqrt.pop %v3045
    %v3051 = vmul.f32 %v3050, %v3045
    %v3052 = vmul.f32 %v3051, %v3050
    %v3053 = vmul.f32 0.5, %v3052
    %v3054 = vsub.f32 1.5, %v3053
    %v3055 = vmul.f32 %v3050, %v3054
    %vm3056 = vweird.f32 %v3045
    %vm3057 = vweird.f32 %v3050
    %vm3058 = vmor %vm3056, %vm3057
    %v3059 = vsel %vm3058, %v3050, %v3055
    %v3060 = vrsqrt.pop %v3046
    %v3061 = vmul.f32 %v3060, %v3046
    %v3062 = vmul.f32 %v3061, %v3060
    %v3063 = vmul.f32 0.5, %v3062
    %v3064 = vsub.f32 1.5, %v3063
    %v3065 = vmul.f32 %v3060, %v3064
    %vm3066 = vweird.f32 %v3046
    %vm3067 = vweird.f32 %v3060
    %vm3068 = vmor %vm3066, %vm3067
    %v3069 = vsel %vm3068, %v3060, %v3065
    %v3070 = vrsqrt.pop %v3047
    %v3071 = vmul.f32 %v3070, %v3047
    %v3072 = vmul.f32 %v3071, %v3070
    %v3073 = vmul.f32 0.5, %v3072
    %v3074 = vsub.f32 1.5, %v3073
    %v3075 = vmul.f32 %v3070, %v3074
    %vm3076 = vweird.f32 %v3047
    %vm3077 = vweird.f32 %v3070
    %vm3078 = vmor %vm3076, %vm3077
    %v3079 = vsel %vm3078, %v3070, %v3075
    %v3080 = vrsqrt.pop %v3048
    %v3081 = vmul.f32 %v3080, %v3048
    %v3082 = vmul.f32 %v3081, %v3080
    %v3083 = vmul.f32 0.5, %v3082
    %v3084 = vsub.f32 1.5, %v3083
    %v3085 = vmul.f32 %v3080, %v3084
    %vm3086 = vweird.f32 %v3048
    %vm3087 = vweird.f32 %v3080
    %vm3088 = vmor %vm3086, %vm3087
    %v3089 = vsel %vm3088, %v3080, %v3085
    %v3090 = vrsqrt.pop %v3049
    %v3091 = vmul.f32 %v3090, %v3049
    %v3092 = vmul.f32 %v3091, %v3090
    %v3093 = vmul.f32 0.5, %v3092
    %v3094 = vsub.f32 1.5, %v3093
    %v3095 = vmul.f32 %v3090, %v3094
    %vm3096 = vweird.f32 %v3049
    %vm3097 = vweird.f32 %v3090
    %vm3098 = vmor %vm3096, %vm3097
    %v3099 = vsel %vm3098, %v3090, %v3095
    %v3100 = vmul.f32 %v3015, %v3059
    %v3101 = vmul.f32 %v3016, %v3069
    %v3102 = vmul.f32 %v3017, %v3079
    %v3103 = vmul.f32 %v3018, %v3089
    %v3104 = vmul.f32 %v3019, %v3099
    %v3106 = vperm.slane %v2993, 0
    %v3108 = vmul.f32 %v3100, %v3106
    %v3109 = vmul.f32 %v3101, %v3106
    %v3110 = vmul.f32 %v3102, %v3106
    %v3111 = vmul.f32 %v3103, %v3106
    %v3112 = vmul.f32 %v3104, %v3106
    %v3114 = vperm.slane %v2994, 0
    %v3116 = vadd.f32 %v3108, %v3114
    %v3117 = vadd.f32 %v3109, %v3114
    %v3118 = vadd.f32 %v3110, %v3114
    %v3119 = vadd.f32 %v3111, %v3114
    %v3120 = vadd.f32 %v3112, %v3114
    %3122 = vrot.lane.b32.xlu0 %v3117, 32
    %v3123 = vpop.permute.xlu0 %3122
    %3126 = vrot.lane.b32.xlu0 %v3118, 64
    %v3127 = vpop.permute.xlu0 %3126
    %3130 = vrot.lane.b32.xlu0 %v3119, 96
    %v3131 = vpop.permute.xlu0 %3130
    %v3133 = vsel %vm741, %v3116, %v3123
    %v3134 = vsel %vm1687, %v3133, %v3127
    %vm3135 = vcmask 785408
    %v3136 = vsel %vm3135, %v3134, %v3131
    %v3137 = vld [vmem:[#allocation16] sm:$0xf]
    %v3138 = vld [vmem:[#allocation16 + $0x4] sm:$0xf]
    %v3139 = vld [vmem:[#allocation16 + $0x8] sm:$0xf]
    %v3140 = vld [vmem:[#allocation16 + $0xc] sm:$0xf]
    %v3141 = vld [vmem:[#allocation16 + $0x10] sm:$0xf]
    %v3142 = vld [vmem:[#allocation16 + $0x14] sm:$0xf]
    %v3143 = vld [vmem:[#allocation16 + $0x18] sm:$0xf]
    %v3144 = vld [vmem:[#allocation16 + $0x1c] sm:$0xf]
    %v3145 = vld [vmem:[#allocation16 + $0x20] sm:$0xf]
    %v3146 = vld [vmem:[#allocation16 + $0x24] sm:$0xf]
    %v3147 = vld [vmem:[#allocation16 + $0x28] sm:$0xf]
    %v3148 = vld [vmem:[#allocation16 + $0x2c] sm:$0xf]
    %v3149 = vld [vmem:[#allocation16 + $0x30] sm:$0xf]
    %v3150 = vld [vmem:[#allocation16 + $0x34] sm:$0xf]
    %v3151 = vld [vmem:[#allocation16 + $0x38] sm:$0xf]
    %v3152 = vld [vmem:[#allocation16 + $0x3c] sm:$0xf]
    %v3153 = vld [vmem:[#allocation16 + $0x40] sm:$0xf]
    %v3154 = vld [vmem:[#allocation16 + $0x44] sm:$0xf]
    %v3155 = vld [vmem:[#allocation16 + $0x48] sm:$0xf]
    %v3156 = vld [vmem:[#allocation16 + $0x4c] sm:$0xf]
    %v3157 = vpack.c.bf16 %v3136, %v3136
    %v3158 = vpack.c.bf16 %v3120, %v3120
    %v3159 = vld [vmem:[%s57] sm:$0x1]
    %v3161 = vperm.slane %v3159, 0
    %v3183 = vunpack.c.l.b16 %v3137
    %v3184 = vunpack.c.l.b16 %v3138
    %v3185 = vunpack.c.l.b16 %v3139
    %v3186 = vunpack.c.l.b16 %v3140
    %v3187 = vunpack.c.l.b16 %v3141
    %v3188 = vunpack.c.l.b16 %v3142
    %v3189 = vunpack.c.l.b16 %v3143
    %v3190 = vunpack.c.l.b16 %v3144
    %v3191 = vunpack.c.l.b16 %v3145
    %v3192 = vunpack.c.l.b16 %v3146
    %v3193 = vunpack.c.l.b16 %v3147
    %v3194 = vunpack.c.l.b16 %v3148
    %v3195 = vunpack.c.l.b16 %v3149
    %v3196 = vunpack.c.l.b16 %v3150
    %v3197 = vunpack.c.l.b16 %v3151
    %v3198 = vunpack.c.l.b16 %v3152
    %v3199 = vunpack.c.l.b16 %v3153
    %v3200 = vunpack.c.l.b16 %v3154
    %v3201 = vunpack.c.l.b16 %v3155
    %v3202 = vunpack.c.l.b16 %v3156
    %v3203 = vpack.c.b16 %v3184, %v3183
    %v3204 = vpack.c.b16 %v3186, %v3185
    %v3205 = vpack.c.b16 %v3188, %v3187
    %v3206 = vpack.c.b16 %v3190, %v3189
    %v3207 = vpack.c.b16 %v3192, %v3191
    %v3208 = vpack.c.b16 %v3194, %v3193
    %v3209 = vpack.c.b16 %v3196, %v3195
    %v3210 = vpack.c.b16 %v3198, %v3197
    %v3211 = vpack.c.b16 %v3200, %v3199
    %v3212 = vpack.c.b16 %v3202, %v3201
    %v3224 = vsel %vm741, %v3158, 0
    %3226 = vmatpush.bf16.msra.mxu0 %v3210
    %3227 = vmatpush.bf16.msra.mxu0 %v3209
    %3228 = vmatpush.bf16.msra.mxu0 %v3208
    %3229 = vmatpush.bf16.msra.mxu0 %v3207
    %3230 = vmatpush.bf16.msra.mxu0 %v3206
    %3231 = vmatpush.bf16.msra.mxu0 %v3205
    %3232 = vmatpush.bf16.msra.mxu0 %v3204
    %3233 = vmatpush.bf16.msra.mxu0 %v3203
    %3234 = vmatmul.bf16.gmra.mxu0 %v3157
    %v3235 = vpop.f32.mrf.mxu0
    %v3236 = vadd.f32 %v3161, %v3235
    %v3237 = vpop.f32.mrf.mxu0
    %3238 = vdwg.mxu0
    %3239 = vmatpush.bf16.msra.mxu0 0
    %3240 = vmatpush.bf16.msra.mxu0 0
    %3241 = vmatpush.bf16.msra.mxu0 0
    %3242 = vmatpush.bf16.msra.mxu0 0
    %3243 = vmatpush.bf16.msra.mxu0 0
    %3244 = vmatpush.bf16.msra.mxu0 0
    %3245 = vmatpush.bf16.msra.mxu0 %v3212
    %3246 = vmatpush.bf16.msra.mxu0 %v3211
    %3247 = vmatmul.bf16.gmra.mxu0 %v3224
    %v3248 = vpop.f32.mrf.mxu0
    %v3249 = vadd.f32 %v3236, %v3248
    %v3250 = vpop.f32.mrf.mxu0
    %3251 = vdwg.mxu0
    %v3252 = vsub.f32 %v3249, %v322
    %v3253 = vadd.f32 %v311, 1e-10
    %3255 = vset.pattern.permute.xlu0 0
    %3256 = vperm.xlu0 %3255, %v3253
    %v3257 = vpop.permute.xlu0 %3256
    %v3259 = vrcp.pop %v3257
    %v3260 = vmul.f32 %v3257, %v3259
    %v3261 = vsub.f32 1.0, %v3260
    %v3262 = vmul.f32 %v3259, %v3261
    %v3263 = vadd.f32 %v3259, %v3262
    %vm3264 = vweird.f32 %v3257
    %vm3265 = vweird.f32 %v3259
    %vm3266 = vmor %vm3264, %vm3265
    %v3267 = vsel %vm3266, %v3259, %v3263
    %v3268 = vand.u32 2147483647, %v3257
    %vm3269 = vcmp.eq.f32.partialorder %v3268, 8.507059e+37
    %v3270 = vand.u32 %v3257, 2147483648
    %v3271 = vor.u32 1.1754944e-38, %v3270
    %v3272 = vsel %vm3269, %v3271, %v3267
    %v3273 = vmul.f32 %v3252, %v3272
    %v3274 = vmul.f32 %v3273, %v295
    %v3275 = vadd.f32 %v3274, %v276
    %vm3276 = vcmask 64512
    %3277 = vst.msk [vmem:[#allocation17] sm:$0xff] %vm3276, %v3275
    // Predicated region
    $region154: #{forward.1} parent=1 // pred_check
      _
    $region155: #{forward.1} parent=1 // pred_check_branch
      %3279 = sbr.rel (0) target = $region157
    $region156: #{forward.1} parent=1 // pred_region
      %3281 = vsyncadd [#allocation4], 0
      %s3283 = sshll.u32 [#allocation17], 4
      %s3284 = int_to_ptr.vmem [resolvable:$true] %s3283
      %s3285 = sshll.u32 %s59, 4
      %s3286 = int_to_ptr.hbm [resolvable:$true] %s3285
      %3288 = dma.vmem_to_hbm [thread:$0]  %s3284, 128, %s3286, [#allocation4]
    $region157: #{forward.1} parent=1 // pred_fallthru
      _
    // Predicated region
    $region158: #{forward.1} parent=1 // pred_check
      _
    $region159: #{forward.1} parent=1 // pred_check_branch
      %3290 = sbr.rel (0) target = $region161
    $region160: #{forward.1} parent=1 // pred_region
      %3292 = dma.done [#allocation4], 128
    $region161: #{forward.1} parent=1 // pred_fallthru
      _
    %3293 = vsyncpa [#allocation3], 1
    %3294 = vsyncpa [#allocation6], 1
    %3295 = vsyncpa [#allocation9], 1
    %3296 = vsyncpa [#allocation12], 1
    %3297 = vsyncpa [#allocation15], 1
    %3298 = vsyncpa [#allocation4], 1

</llo_original>
